<compile_context>
chip_gen: v6e
topology: v6e:2x2x1
jax: 0.10.0
libtpu: 0.0.40
codegen_flags: <defaults>
</compile_context>

<pallas_src>
import jax
import jax.numpy as jnp
from jax.experimental import pallas as pl
from jax.experimental.pallas import tpu as pltpu

# ---- small synthetic config ----
VOCAB = 50
EMBED = 32
NUM_CLASSES = 3
SEQ = 16
BATCH = 2

C1, C2, C3 = 512, 256, 256           # conv output channels
FC1, FC2 = 512, 256                  # fc hidden sizes
LANE_PAD = 128                       # lane-dense padded logits width
BN_EPS = 1e-5                        # nn.BatchNorm1d default eps


# ---------------- in-kernel helpers (traced inside the Pallas kernel) ----------------
def _relu(v):
    return jnp.maximum(v, 0.0)


def _conv1d_k3_bn_relu(x, w, scale, shift):
    """Conv1d(k=3, padding=1) + folded eval BatchNorm + ReLU, channels-last.

    x: (B, L, Cin)   w: (3*Cin, Cout)   scale/shift: (1, Cout)
    """
    B, L, Cin = x.shape
    zpad = jnp.zeros((B, 1, Cin), x.dtype)
    xp = jnp.concatenate([zpad, x, zpad], axis=1)            # (B, L+2, Cin)
    win0 = xp[:, 0:L, :]
    win1 = xp[:, 1:L + 1, :]
    win2 = xp[:, 2:L + 2, :]
    if Cin % 128 == 0:
        # lane-aligned: fuse the 3 taps into one im2col matmul
        cat = jnp.concatenate([win0, win1, win2], axis=-1)    # (B, L, 3*Cin)
        y = jnp.einsum('blc,cd->bld', cat, w,
                       preferred_element_type=jnp.float32)
    else:
        # unaligned channels (e.g. embed_size=32): sum the 3 tap matmuls
        y = (jnp.einsum('blc,cd->bld', win0, w[0 * Cin:1 * Cin, :],
                        preferred_element_type=jnp.float32)
             + jnp.einsum('blc,cd->bld', win1, w[1 * Cin:2 * Cin, :],
                          preferred_element_type=jnp.float32)
             + jnp.einsum('blc,cd->bld', win2, w[2 * Cin:3 * Cin, :],
                          preferred_element_type=jnp.float32))
    return _relu(y * scale + shift)


def _maxpool2(x):
    """MaxPool1d(kernel=2, stride=2) along the sequence (sublane) axis."""
    B, L, C = x.shape
    parts = [jnp.max(x[:, 2 * i:2 * i + 2, :], axis=1, keepdims=True)
             for i in range(L // 2)]
    return jnp.concatenate(parts, axis=1)                     # (B, L//2, C)


# ---------------- fused forward kernel ----------------
def cnn_v2_kernel(x_ref, tw_ref,
                  w1_ref, s1_ref, t1_ref,
                  w2_ref, s2_ref, t2_ref,
                  w3_ref, s3_ref, t3_ref,
                  wf1_ref, bf1_ref, wf2_ref, bf2_ref, wf3_ref, bf3_ref,
                  out_ref):
    # token weighting (token_weights * attention_mask already combined in wrapper)
    x = x_ref[...] * tw_ref[...]                               # (B, S, E)

    h = _conv1d_k3_bn_relu(x, w1_ref[...], s1_ref[...], t1_ref[...])   # (B, S,   512)
    h = _maxpool2(h)                                                    # (B, S/2, 512)
    h = _conv1d_k3_bn_relu(h, w2_ref[...], s2_ref[...], t2_ref[...])   # (B, S/2, 256)
    h = _maxpool2(h)                                                    # (B, S/4, 256)
    h = _conv1d_k3_bn_relu(h, w3_ref[...], s3_ref[...], t3_ref[...])   # (B, S/4, 256)

    pooled = jnp.max(h, axis=1)                                # AdaptiveMaxPool1d(1) -> (B, 256)
    # Dropout layers are identity in eval mode.

    z = _relu(jnp.dot(pooled, wf1_ref[...],
                      preferred_element_type=jnp.float32) + bf1_ref[...])
    z = _relu(jnp.dot(z, wf2_ref[...],
                      preferred_element_type=jnp.float32) + bf2_ref[...])
    out_ref[...] = jnp.dot(z, wf3_ref[...],
                           preferred_element_type=jnp.float32) + bf3_ref[...]


# ---------------- parameters ----------------
def init_params(key):
    keys = iter(jax.random.split(key, 32))

    def nrm(shape, scale=0.05):
        return scale * jax.random.normal(next(keys), shape, dtype=jnp.float32)

    def bn(c):
        return {
            "gamma": 1.0 + 0.1 * jax.random.normal(next(keys), (c,), dtype=jnp.float32),
            "beta": 0.1 * jax.random.normal(next(keys), (c,), dtype=jnp.float32),
            "mean": 0.1 * jax.random.normal(next(keys), (c,), dtype=jnp.float32),
            "var": jnp.abs(1.0 + 0.1 * jax.random.normal(next(keys), (c,), dtype=jnp.float32)),
        }

    params = {
        "embedding": nrm((VOCAB, EMBED), 0.1),
        "conv1_w": nrm((3 * EMBED, C1)), "conv1_b": nrm((C1,)), "bn1": bn(C1),
        "conv2_w": nrm((3 * C1, C2)),    "conv2_b": nrm((C2,)), "bn2": bn(C2),
        "conv3_w": nrm((3 * C2, C3)),    "conv3_b": nrm((C3,)), "bn3": bn(C3),
        "fc1_w": nrm((C3, FC1)),  "fc1_b": nrm((1, FC1)),
        "fc2_w": nrm((FC1, FC2)), "fc2_b": nrm((1, FC2)),
        "fc3_w": nrm((FC2, NUM_CLASSES)), "fc3_b": nrm((1, NUM_CLASSES)),
    }
    return params


# ---------------- forward wrapper ----------------
def cnn_model_v2_forward(params, input_ids, attention_mask=None, token_weights=None):
    B, S = input_ids.shape
    assert S % 4 == 0, "sequence length must survive two MaxPool1d(2,2) stages"

    # Embedding gather is glue in plain JAX.
    # TODO(synk): embedding table lookup (gather) stays outside the Pallas kernel.
    x = params["embedding"][input_ids]                          # (B, S, E) f32

    # token_weights / attention_mask handling mirrors the PyTorch forward.
    if token_weights is not None and attention_mask is not None:
        token_weights = token_weights.astype(jnp.float32) * attention_mask.astype(jnp.float32)
    if token_weights is not None:
        tw = token_weights.astype(jnp.float32)[:, :, None]      # (B, S, 1)
    else:
        tw = jnp.ones((B, S, 1), jnp.float32)

    # Fold eval-mode BatchNorm1d (+ conv bias) into per-channel scale/shift.
    # TODO(synk): training-mode BatchNorm (batch statistics) not implemented; eval running stats used.
    def bn_fold(conv_b, bn_p):
        scale = bn_p["gamma"] * jax.lax.rsqrt(bn_p["var"] + BN_EPS)
        shift = (conv_b - bn_p["mean"]) * scale + bn_p["beta"]
        return scale[None, :], shift[None, :]

    s1, t1 = bn_fold(params["conv1_b"], params["bn1"])
    s2, t2 = bn_fold(params["conv2_b"], params["bn2"])
    s3, t3 = bn_fold(params["conv3_b"], params["bn3"])

    # Lane-pad the classifier to 128 output columns (lane-dense final store);
    # slice back to NUM_CLASSES after the kernel.
    wf3 = jnp.zeros((FC2, LANE_PAD), jnp.float32).at[:, :NUM_CLASSES].set(params["fc3_w"])
    bf3 = jnp.zeros((1, LANE_PAD), jnp.float32).at[:, :NUM_CLASSES].set(params["fc3_b"])

    args = (x, tw,
            params["conv1_w"], s1, t1,
            params["conv2_w"], s2, t2,
            params["conv3_w"], s3, t3,
            params["fc1_w"], params["fc1_b"],
            params["fc2_w"], params["fc2_b"],
            wf3, bf3)

    out_padded = pl.pallas_call(
        cnn_v2_kernel,
        out_shape=jax.ShapeDtypeStruct((B, LANE_PAD), jnp.float32),
        in_specs=[pl.BlockSpec(memory_space=pltpu.MemorySpace.VMEM)] * len(args),
        out_specs=pl.BlockSpec(memory_space=pltpu.MemorySpace.VMEM),
        compiler_params=pltpu.CompilerParams(vmem_limit_bytes=32 * 1024 * 1024),
    )(*args)

    return out_padded[:, :NUM_CLASSES]


if __name__ == "__main__":
    key = jax.random.PRNGKey(0)
    pkey, ikey, wkey = jax.random.split(key, 3)
    params = init_params(pkey)

    input_ids = jax.random.randint(ikey, (BATCH, SEQ), 0, VOCAB, dtype=jnp.int32)
    attention_mask = jnp.ones((BATCH, SEQ), jnp.float32).at[1, SEQ // 2:].set(0.0)
    token_weights = jax.random.uniform(wkey, (BATCH, SEQ), jnp.float32, 0.5, 1.0)

    logits = cnn_model_v2_forward(params, input_ids, attention_mask, token_weights)
    jax.block_until_ready(logits)
    assert logits.shape == (BATCH, NUM_CLASSES)
    print("KERNEL_OK")
</pallas_src>

<mosaic_0001>
module attributes {stable_mosaic.version = 11 : i64} {
  func.func @cnn_v2_kernel(%arg0: memref<2x16x32xf32, #tpu.memory_space<vmem>>, %arg1: memref<2x16x1xf32, #tpu.memory_space<vmem>>, %arg2: memref<96x512xf32, #tpu.memory_space<vmem>>, %arg3: memref<1x512xf32, #tpu.memory_space<vmem>>, %arg4: memref<1x512xf32, #tpu.memory_space<vmem>>, %arg5: memref<1536x256xf32, #tpu.memory_space<vmem>>, %arg6: memref<1x256xf32, #tpu.memory_space<vmem>>, %arg7: memref<1x256xf32, #tpu.memory_space<vmem>>, %arg8: memref<768x256xf32, #tpu.memory_space<vmem>>, %arg9: memref<1x256xf32, #tpu.memory_space<vmem>>, %arg10: memref<1x256xf32, #tpu.memory_space<vmem>>, %arg11: memref<256x512xf32, #tpu.memory_space<vmem>>, %arg12: memref<1x512xf32, #tpu.memory_space<vmem>>, %arg13: memref<512x256xf32, #tpu.memory_space<vmem>>, %arg14: memref<1x256xf32, #tpu.memory_space<vmem>>, %arg15: memref<256x128xf32, #tpu.memory_space<vmem>>, %arg16: memref<1x128xf32, #tpu.memory_space<vmem>>, %arg17: memref<2x128xf32, #tpu.memory_space<vmem>>) attributes {dimension_semantics = [], scalar_prefetch = 0 : i64, scratch_operands = 0 : i64, tpu.core_type = #tpu.core_type<tc>} {
    %c0 = arith.constant 0 : index
    %c0_0 = arith.constant 0 : index
    %c0_1 = arith.constant 0 : index
    %0 = vector.load %arg0[%c0, %c0_0, %c0_1] : memref<2x16x32xf32, #tpu.memory_space<vmem>>, vector<2x16x32xf32>
    %c0_2 = arith.constant 0 : index
    %c0_3 = arith.constant 0 : index
    %c0_4 = arith.constant 0 : index
    %1 = vector.load %arg1[%c0_2, %c0_3, %c0_4] : memref<2x16x1xf32, #tpu.memory_space<vmem>>, vector<2x16x1xf32>
    %2 = vector.broadcast %1 : vector<2x16x1xf32> to vector<2x16x32xf32>
    %3 = arith.mulf %0, %2 : vector<2x16x32xf32>
    %c0_5 = arith.constant 0 : index
    %c0_6 = arith.constant 0 : index
    %4 = vector.load %arg2[%c0_5, %c0_6] : memref<96x512xf32, #tpu.memory_space<vmem>>, vector<96x512xf32>
    %c0_7 = arith.constant 0 : index
    %c0_8 = arith.constant 0 : index
    %5 = vector.load %arg3[%c0_7, %c0_8] : memref<1x512xf32, #tpu.memory_space<vmem>>, vector<1x512xf32>
    %c0_9 = arith.constant 0 : index
    %c0_10 = arith.constant 0 : index
    %6 = vector.load %arg4[%c0_9, %c0_10] : memref<1x512xf32, #tpu.memory_space<vmem>>, vector<1x512xf32>
    %cst = arith.constant 0.000000e+00 : f32
    %7 = vector.broadcast %cst : f32 to vector<2x1x32xf32>
    %8 = tpu.concatenate %7, %3, %7 in 1 : vector<2x1x32xf32>, vector<2x16x32xf32>, vector<2x1x32xf32> -> vector<2x18x32xf32>
    %9 = vector.extract_strided_slice %8 {offsets = [0, 0, 0], sizes = [2, 16, 32], strides = [1, 1, 1]} : vector<2x18x32xf32> to vector<2x16x32xf32>
    %10 = vector.extract_strided_slice %8 {offsets = [0, 1, 0], sizes = [2, 16, 32], strides = [1, 1, 1]} : vector<2x18x32xf32> to vector<2x16x32xf32>
    %11 = vector.extract_strided_slice %8 {offsets = [0, 2, 0], sizes = [2, 16, 32], strides = [1, 1, 1]} : vector<2x18x32xf32> to vector<2x16x32xf32>
    %12 = vector.extract_strided_slice %4 {offsets = [0, 0], sizes = [32, 512], strides = [1, 1]} : vector<96x512xf32> to vector<32x512xf32>
    "tpu.trace_start"() <{level = 10 : i32, message = "blc,cd->bld"}> : () -> ()
    %cst_11 = arith.constant dense<0.000000e+00> : vector<2x16x512xf32>
    %13 = tpu.matmul %9, %12, %cst_11 {dimension_numbers = #tpu.dot_dimension_numbers<[2], [0], [0, 1], [1], [0, 0, 0, 1, 1, 1], [], []>} : vector<2x16x32xf32>, vector<32x512xf32>, vector<2x16x512xf32> -> vector<2x16x512xf32>
    "tpu.trace_stop"() : () -> ()
    %14 = vector.extract_strided_slice %4 {offsets = [32, 0], sizes = [32, 512], strides = [1, 1]} : vector<96x512xf32> to vector<32x512xf32>
    "tpu.trace_start"() <{level = 10 : i32, message = "blc,cd->bld"}> : () -> ()
    %cst_12 = arith.constant dense<0.000000e+00> : vector<2x16x512xf32>
    %15 = tpu.matmul %10, %14, %cst_12 {dimension_numbers = #tpu.dot_dimension_numbers<[2], [0], [0, 1], [1], [0, 0, 0, 1, 1, 1], [], []>} : vector<2x16x32xf32>, vector<32x512xf32>, vector<2x16x512xf32> -> vector<2x16x512xf32>
    "tpu.trace_stop"() : () -> ()
    %16 = arith.addf %13, %15 : vector<2x16x512xf32>
    %17 = vector.extract_strided_slice %4 {offsets = [64, 0], sizes = [32, 512], strides = [1, 1]} : vector<96x512xf32> to vector<32x512xf32>
    "tpu.trace_start"() <{level = 10 : i32, message = "blc,cd->bld"}> : () -> ()
    %cst_13 = arith.constant dense<0.000000e+00> : vector<2x16x512xf32>
    %18 = tpu.matmul %11, %17, %cst_13 {dimension_numbers = #tpu.dot_dimension_numbers<[2], [0], [0, 1], [1], [0, 0, 0, 1, 1, 1], [], []>} : vector<2x16x32xf32>, vector<32x512xf32>, vector<2x16x512xf32> -> vector<2x16x512xf32>
    "tpu.trace_stop"() : () -> ()
    %19 = arith.addf %16, %18 : vector<2x16x512xf32>
    %20 = vector.shape_cast %5 : vector<1x512xf32> to vector<1x1x512xf32>
    %21 = vector.broadcast %20 : vector<1x1x512xf32> to vector<2x16x512xf32>
    %22 = arith.mulf %19, %21 : vector<2x16x512xf32>
    %23 = vector.shape_cast %6 : vector<1x512xf32> to vector<1x1x512xf32>
    %24 = vector.broadcast %23 : vector<1x1x512xf32> to vector<2x16x512xf32>
    %25 = arith.addf %22, %24 : vector<2x16x512xf32>
    %cst_14 = arith.constant 0.000000e+00 : f32
    %26 = vector.broadcast %cst_14 : f32 to vector<2x16x512xf32>
    %27 = arith.maximumf %25, %26 : vector<2x16x512xf32>
    %28 = vector.extract_strided_slice %27 {offsets = [0, 0, 0], sizes = [2, 2, 512], strides = [1, 1, 1]} : vector<2x16x512xf32> to vector<2x2x512xf32>
    %cst_15 = arith.constant dense<0xFF800000> : vector<2x512xf32>
    %29 = vector.multi_reduction <maximumf>, %28, %cst_15 [1] : vector<2x2x512xf32> to vector<2x512xf32>
    %30 = vector.shape_cast %29 : vector<2x512xf32> to vector<2x1x512xf32>
    %31 = vector.extract_strided_slice %27 {offsets = [0, 2, 0], sizes = [2, 2, 512], strides = [1, 1, 1]} : vector<2x16x512xf32> to vector<2x2x512xf32>
    %cst_16 = arith.constant dense<0xFF800000> : vector<2x512xf32>
    %32 = vector.multi_reduction <maximumf>, %31, %cst_16 [1] : vector<2x2x512xf32> to vector<2x512xf32>
    %33 = vector.shape_cast %32 : vector<2x512xf32> to vector<2x1x512xf32>
    %34 = vector.extract_strided_slice %27 {offsets = [0, 4, 0], sizes = [2, 2, 512], strides = [1, 1, 1]} : vector<2x16x512xf32> to vector<2x2x512xf32>
    %cst_17 = arith.constant dense<0xFF800000> : vector<2x512xf32>
    %35 = vector.multi_reduction <maximumf>, %34, %cst_17 [1] : vector<2x2x512xf32> to vector<2x512xf32>
    %36 = vector.shape_cast %35 : vector<2x512xf32> to vector<2x1x512xf32>
    %37 = vector.extract_strided_slice %27 {offsets = [0, 6, 0], sizes = [2, 2, 512], strides = [1, 1, 1]} : vector<2x16x512xf32> to vector<2x2x512xf32>
    %cst_18 = arith.constant dense<0xFF800000> : vector<2x512xf32>
    %38 = vector.multi_reduction <maximumf>, %37, %cst_18 [1] : vector<2x2x512xf32> to vector<2x512xf32>
    %39 = vector.shape_cast %38 : vector<2x512xf32> to vector<2x1x512xf32>
    %40 = vector.extract_strided_slice %27 {offsets = [0, 8, 0], sizes = [2, 2, 512], strides = [1, 1, 1]} : vector<2x16x512xf32> to vector<2x2x512xf32>
    %cst_19 = arith.constant dense<0xFF800000> : vector<2x512xf32>
    %41 = vector.multi_reduction <maximumf>, %40, %cst_19 [1] : vector<2x2x512xf32> to vector<2x512xf32>
    %42 = vector.shape_cast %41 : vector<2x512xf32> to vector<2x1x512xf32>
    %43 = vector.extract_strided_slice %27 {offsets = [0, 10, 0], sizes = [2, 2, 512], strides = [1, 1, 1]} : vector<2x16x512xf32> to vector<2x2x512xf32>
    %cst_20 = arith.constant dense<0xFF800000> : vector<2x512xf32>
    %44 = vector.multi_reduction <maximumf>, %43, %cst_20 [1] : vector<2x2x512xf32> to vector<2x512xf32>
    %45 = vector.shape_cast %44 : vector<2x512xf32> to vector<2x1x512xf32>
    %46 = vector.extract_strided_slice %27 {offsets = [0, 12, 0], sizes = [2, 2, 512], strides = [1, 1, 1]} : vector<2x16x512xf32> to vector<2x2x512xf32>
    %cst_21 = arith.constant dense<0xFF800000> : vector<2x512xf32>
    %47 = vector.multi_reduction <maximumf>, %46, %cst_21 [1] : vector<2x2x512xf32> to vector<2x512xf32>
    %48 = vector.shape_cast %47 : vector<2x512xf32> to vector<2x1x512xf32>
    %49 = vector.extract_strided_slice %27 {offsets = [0, 14, 0], sizes = [2, 2, 512], strides = [1, 1, 1]} : vector<2x16x512xf32> to vector<2x2x512xf32>
    %cst_22 = arith.constant dense<0xFF800000> : vector<2x512xf32>
    %50 = vector.multi_reduction <maximumf>, %49, %cst_22 [1] : vector<2x2x512xf32> to vector<2x512xf32>
    %51 = vector.shape_cast %50 : vector<2x512xf32> to vector<2x1x512xf32>
    %52 = tpu.concatenate %30, %33, %36, %39, %42, %45, %48, %51 in 1 : vector<2x1x512xf32>, vector<2x1x512xf32>, vector<2x1x512xf32>, vector<2x1x512xf32>, vector<2x1x512xf32>, vector<2x1x512xf32>, vector<2x1x512xf32>, vector<2x1x512xf32> -> vector<2x8x512xf32>
    %c0_23 = arith.constant 0 : index
    %c0_24 = arith.constant 0 : index
    %53 = vector.load %arg5[%c0_23, %c0_24] : memref<1536x256xf32, #tpu.memory_space<vmem>>, vector<1536x256xf32>
    %c0_25 = arith.constant 0 : index
    %c0_26 = arith.constant 0 : index
    %54 = vector.load %arg6[%c0_25, %c0_26] : memref<1x256xf32, #tpu.memory_space<vmem>>, vector<1x256xf32>
    %c0_27 = arith.constant 0 : index
    %c0_28 = arith.constant 0 : index
    %55 = vector.load %arg7[%c0_27, %c0_28] : memref<1x256xf32, #tpu.memory_space<vmem>>, vector<1x256xf32>
    %cst_29 = arith.constant 0.000000e+00 : f32
    %56 = vector.broadcast %cst_29 : f32 to vector<2x1x512xf32>
    %57 = tpu.concatenate %56, %52, %56 in 1 : vector<2x1x512xf32>, vector<2x8x512xf32>, vector<2x1x512xf32> -> vector<2x10x512xf32>
    %58 = vector.extract_strided_slice %57 {offsets = [0, 0, 0], sizes = [2, 8, 512], strides = [1, 1, 1]} : vector<2x10x512xf32> to vector<2x8x512xf32>
    %59 = vector.extract_strided_slice %57 {offsets = [0, 1, 0], sizes = [2, 8, 512], strides = [1, 1, 1]} : vector<2x10x512xf32> to vector<2x8x512xf32>
    %60 = vector.extract_strided_slice %57 {offsets = [0, 2, 0], sizes = [2, 8, 512], strides = [1, 1, 1]} : vector<2x10x512xf32> to vector<2x8x512xf32>
    %61 = tpu.concatenate %58, %59, %60 in 2 : vector<2x8x512xf32>, vector<2x8x512xf32>, vector<2x8x512xf32> -> vector<2x8x1536xf32>
    "tpu.trace_start"() <{level = 10 : i32, message = "blc,cd->bld"}> : () -> ()
    %cst_30 = arith.constant dense<0.000000e+00> : vector<2x8x256xf32>
    %62 = tpu.matmul %61, %53, %cst_30 {dimension_numbers = #tpu.dot_dimension_numbers<[2], [0], [0, 1], [1], [0, 0, 0, 1, 1, 1], [], []>} : vector<2x8x1536xf32>, vector<1536x256xf32>, vector<2x8x256xf32> -> vector<2x8x256xf32>
    "tpu.trace_stop"() : () -> ()
    %63 = vector.shape_cast %54 : vector<1x256xf32> to vector<1x1x256xf32>
    %64 = vector.broadcast %63 : vector<1x1x256xf32> to vector<2x8x256xf32>
    %65 = arith.mulf %62, %64 : vector<2x8x256xf32>
    %66 = vector.shape_cast %55 : vector<1x256xf32> to vector<1x1x256xf32>
    %67 = vector.broadcast %66 : vector<1x1x256xf32> to vector<2x8x256xf32>
    %68 = arith.addf %65, %67 : vector<2x8x256xf32>
    %cst_31 = arith.constant 0.000000e+00 : f32
    %69 = vector.broadcast %cst_31 : f32 to vector<2x8x256xf32>
    %70 = arith.maximumf %68, %69 : vector<2x8x256xf32>
    %71 = vector.extract_strided_slice %70 {offsets = [0, 0, 0], sizes = [2, 2, 256], strides = [1, 1, 1]} : vector<2x8x256xf32> to vector<2x2x256xf32>
    %cst_32 = arith.constant dense<0xFF800000> : vector<2x256xf32>
    %72 = vector.multi_reduction <maximumf>, %71, %cst_32 [1] : vector<2x2x256xf32> to vector<2x256xf32>
    %73 = vector.shape_cast %72 : vector<2x256xf32> to vector<2x1x256xf32>
    %74 = vector.extract_strided_slice %70 {offsets = [0, 2, 0], sizes = [2, 2, 256], strides = [1, 1, 1]} : vector<2x8x256xf32> to vector<2x2x256xf32>
    %cst_33 = arith.constant dense<0xFF800000> : vector<2x256xf32>
    %75 = vector.multi_reduction <maximumf>, %74, %cst_33 [1] : vector<2x2x256xf32> to vector<2x256xf32>
    %76 = vector.shape_cast %75 : vector<2x256xf32> to vector<2x1x256xf32>
    %77 = vector.extract_strided_slice %70 {offsets = [0, 4, 0], sizes = [2, 2, 256], strides = [1, 1, 1]} : vector<2x8x256xf32> to vector<2x2x256xf32>
    %cst_34 = arith.constant dense<0xFF800000> : vector<2x256xf32>
    %78 = vector.multi_reduction <maximumf>, %77, %cst_34 [1] : vector<2x2x256xf32> to vector<2x256xf32>
    %79 = vector.shape_cast %78 : vector<2x256xf32> to vector<2x1x256xf32>
    %80 = vector.extract_strided_slice %70 {offsets = [0, 6, 0], sizes = [2, 2, 256], strides = [1, 1, 1]} : vector<2x8x256xf32> to vector<2x2x256xf32>
    %cst_35 = arith.constant dense<0xFF800000> : vector<2x256xf32>
    %81 = vector.multi_reduction <maximumf>, %80, %cst_35 [1] : vector<2x2x256xf32> to vector<2x256xf32>
    %82 = vector.shape_cast %81 : vector<2x256xf32> to vector<2x1x256xf32>
    %83 = tpu.concatenate %73, %76, %79, %82 in 1 : vector<2x1x256xf32>, vector<2x1x256xf32>, vector<2x1x256xf32>, vector<2x1x256xf32> -> vector<2x4x256xf32>
    %c0_36 = arith.constant 0 : index
    %c0_37 = arith.constant 0 : index
    %84 = vector.load %arg8[%c0_36, %c0_37] : memref<768x256xf32, #tpu.memory_space<vmem>>, vector<768x256xf32>
    %c0_38 = arith.constant 0 : index
    %c0_39 = arith.constant 0 : index
    %85 = vector.load %arg9[%c0_38, %c0_39] : memref<1x256xf32, #tpu.memory_space<vmem>>, vector<1x256xf32>
    %c0_40 = arith.constant 0 : index
    %c0_41 = arith.constant 0 : index
    %86 = vector.load %arg10[%c0_40, %c0_41] : memref<1x256xf32, #tpu.memory_space<vmem>>, vector<1x256xf32>
    %cst_42 = arith.constant 0.000000e+00 : f32
    %87 = vector.broadcast %cst_42 : f32 to vector<2x1x256xf32>
    %88 = tpu.concatenate %87, %83, %87 in 1 : vector<2x1x256xf32>, vector<2x4x256xf32>, vector<2x1x256xf32> -> vector<2x6x256xf32>
    %89 = vector.extract_strided_slice %88 {offsets = [0, 0, 0], sizes = [2, 4, 256], strides = [1, 1, 1]} : vector<2x6x256xf32> to vector<2x4x256xf32>
    %90 = vector.extract_strided_slice %88 {offsets = [0, 1, 0], sizes = [2, 4, 256], strides = [1, 1, 1]} : vector<2x6x256xf32> to vector<2x4x256xf32>
    %91 = vector.extract_strided_slice %88 {offsets = [0, 2, 0], sizes = [2, 4, 256], strides = [1, 1, 1]} : vector<2x6x256xf32> to vector<2x4x256xf32>
    %92 = tpu.concatenate %89, %90, %91 in 2 : vector<2x4x256xf32>, vector<2x4x256xf32>, vector<2x4x256xf32> -> vector<2x4x768xf32>
    "tpu.trace_start"() <{level = 10 : i32, message = "blc,cd->bld"}> : () -> ()
    %cst_43 = arith.constant dense<0.000000e+00> : vector<2x4x256xf32>
    %93 = tpu.matmul %92, %84, %cst_43 {dimension_numbers = #tpu.dot_dimension_numbers<[2], [0], [0, 1], [1], [0, 0, 0, 1, 1, 1], [], []>} : vector<2x4x768xf32>, vector<768x256xf32>, vector<2x4x256xf32> -> vector<2x4x256xf32>
    "tpu.trace_stop"() : () -> ()
    %94 = vector.shape_cast %85 : vector<1x256xf32> to vector<1x1x256xf32>
    %95 = vector.broadcast %94 : vector<1x1x256xf32> to vector<2x4x256xf32>
    %96 = arith.mulf %93, %95 : vector<2x4x256xf32>
    %97 = vector.shape_cast %86 : vector<1x256xf32> to vector<1x1x256xf32>
    %98 = vector.broadcast %97 : vector<1x1x256xf32> to vector<2x4x256xf32>
    %99 = arith.addf %96, %98 : vector<2x4x256xf32>
    %cst_44 = arith.constant 0.000000e+00 : f32
    %100 = vector.broadcast %cst_44 : f32 to vector<2x4x256xf32>
    %101 = arith.maximumf %99, %100 : vector<2x4x256xf32>
    %cst_45 = arith.constant dense<0xFF800000> : vector<2x256xf32>
    %102 = vector.multi_reduction <maximumf>, %101, %cst_45 [1] : vector<2x4x256xf32> to vector<2x256xf32>
    %c0_46 = arith.constant 0 : index
    %c0_47 = arith.constant 0 : index
    %103 = vector.load %arg11[%c0_46, %c0_47] : memref<256x512xf32, #tpu.memory_space<vmem>>, vector<256x512xf32>
    %cst_48 = arith.constant dense<0.000000e+00> : vector<2x512xf32>
    %104 = tpu.matmul %102, %103, %cst_48 {dimension_numbers = #tpu.dot_dimension_numbers<[1], [0], [0], [1], [0, 0, 1, 1], [], []>} : vector<2x256xf32>, vector<256x512xf32>, vector<2x512xf32> -> vector<2x512xf32>
    %c0_49 = arith.constant 0 : index
    %c0_50 = arith.constant 0 : index
    %105 = vector.load %arg12[%c0_49, %c0_50] : memref<1x512xf32, #tpu.memory_space<vmem>>, vector<1x512xf32>
    %106 = vector.broadcast %105 : vector<1x512xf32> to vector<2x512xf32>
    %107 = arith.addf %104, %106 : vector<2x512xf32>
    %cst_51 = arith.constant 0.000000e+00 : f32
    %108 = vector.broadcast %cst_51 : f32 to vector<2x512xf32>
    %109 = arith.maximumf %107, %108 : vector<2x512xf32>
    %c0_52 = arith.constant 0 : index
    %c0_53 = arith.constant 0 : index
    %110 = vector.load %arg13[%c0_52, %c0_53] : memref<512x256xf32, #tpu.memory_space<vmem>>, vector<512x256xf32>
    %cst_54 = arith.constant dense<0.000000e+00> : vector<2x256xf32>
    %111 = tpu.matmul %109, %110, %cst_54 {dimension_numbers = #tpu.dot_dimension_numbers<[1], [0], [0], [1], [0, 0, 1, 1], [], []>} : vector<2x512xf32>, vector<512x256xf32>, vector<2x256xf32> -> vector<2x256xf32>
    %c0_55 = arith.constant 0 : index
    %c0_56 = arith.constant 0 : index
    %112 = vector.load %arg14[%c0_55, %c0_56] : memref<1x256xf32, #tpu.memory_space<vmem>>, vector<1x256xf32>
    %113 = vector.broadcast %112 : vector<1x256xf32> to vector<2x256xf32>
    %114 = arith.addf %111, %113 : vector<2x256xf32>
    %cst_57 = arith.constant 0.000000e+00 : f32
    %115 = vector.broadcast %cst_57 : f32 to vector<2x256xf32>
    %116 = arith.maximumf %114, %115 : vector<2x256xf32>
    %c0_58 = arith.constant 0 : index
    %c0_59 = arith.constant 0 : index
    %117 = vector.load %arg15[%c0_58, %c0_59] : memref<256x128xf32, #tpu.memory_space<vmem>>, vector<256x128xf32>
    %cst_60 = arith.constant dense<0.000000e+00> : vector<2x128xf32>
    %118 = tpu.matmul %116, %117, %cst_60 {dimension_numbers = #tpu.dot_dimension_numbers<[1], [0], [0], [1], [0, 0, 1, 1], [], []>} : vector<2x256xf32>, vector<256x128xf32>, vector<2x128xf32> -> vector<2x128xf32>
    %c0_61 = arith.constant 0 : index
    %c0_62 = arith.constant 0 : index
    %119 = vector.load %arg16[%c0_61, %c0_62] : memref<1x128xf32, #tpu.memory_space<vmem>>, vector<1x128xf32>
    %120 = vector.broadcast %119 : vector<1x128xf32> to vector<2x128xf32>
    %121 = arith.addf %118, %120 : vector<2x128xf32>
    %c0_63 = arith.constant 0 : index
    %c0_64 = arith.constant 0 : index
    %122 = vector.load %arg17[%c0_63, %c0_64] : memref<2x128xf32, #tpu.memory_space<vmem>>, vector<2x128xf32>
    tpu.vector_store %arg17[%c0_63, %c0_64], %121 {strides = array<i32>} : memref<2x128xf32, #tpu.memory_space<vmem>>, vector<2x128xf32>,
    return
  }
}

</mosaic_0001>

<llo_original>
// kernel: tpu_custom_call.1
$region0: #{tpu_custom_call.1}
  #allocation0 [shape = 'u32[]', space=smem, size = 0x4, offset = 0x4, fixed_abs, tag = 'smem constant byte address 0x4 - core index']
  #allocation1 [shape = 'u32[144,128]{1,0:T(1,128)}', space=vmem, size = 0x12000, scoped, tag = 'internal scratch']
  %s0 = inlined_call_operand.hbm [shape: f32[2,16,32], index: 0, kind: input, shape index: {}]
  %s1 = inlined_call_operand.vmem [shape: f32[2,16,1], index: 1, kind: input, shape index: {}]
  %s2 = inlined_call_operand.hbm [shape: f32[96,512], index: 2, kind: input, shape index: {}]
  %s3 = inlined_call_operand.hbm [shape: f32[1,512], index: 3, kind: input, shape index: {}]
  %s4 = inlined_call_operand.hbm [shape: f32[1,512], index: 4, kind: input, shape index: {}]
  %s5 = inlined_call_operand.hbm [shape: f32[1536,256], index: 5, kind: input, shape index: {}]
  %s6 = inlined_call_operand.hbm [shape: f32[1,256], index: 6, kind: input, shape index: {}]
  %s7 = inlined_call_operand.hbm [shape: f32[1,256], index: 7, kind: input, shape index: {}]
  %s8 = inlined_call_operand.hbm [shape: f32[768,256], index: 8, kind: input, shape index: {}]
  %s9 = inlined_call_operand.hbm [shape: f32[1,256], index: 9, kind: input, shape index: {}]
  %s10 = inlined_call_operand.hbm [shape: f32[1,256], index: 10, kind: input, shape index: {}]
  %s11 = inlined_call_operand.hbm [shape: f32[256,512], index: 11, kind: input, shape index: {}]
  %s12 = inlined_call_operand.hbm [shape: f32[1,512], index: 12, kind: input, shape index: {}]
  %s13 = inlined_call_operand.hbm [shape: f32[512,256], index: 13, kind: input, shape index: {}]
  %s14 = inlined_call_operand.hbm [shape: f32[1,256], index: 14, kind: input, shape index: {}]
  %s15 = inlined_call_operand.hbm [shape: f32[256,128], index: 15, kind: input, shape index: {}]
  %s16 = inlined_call_operand.hbm [shape: f32[1,128], index: 16, kind: input, shape index: {}]
  %s17 = inlined_call_operand.hbm [shape: f32[2,128], index: 17, kind: output, shape index: {}]
  %s18 = sld [smem:[#allocation0]]
  $region142: #{tpu_custom_call.1} parent=0
    _
  %s20 = ssub.s32 1, %s18
  %s21 = scalar_select 0, %s20, %s18
  $region1: #{tpu_custom_call.1} parent=0
    #allocation2 [shape = 'u8[16384]{0}', space=vmem, size = 0x4000, scoped, tag = 'input window, operand 0, single buffered']
    #allocation3 [shape = 's32[1]{0}', space=sflag, size = 0x4, scoped, tag = 'scoped memory for tpu_custom_call.1']
    #allocation4 [shape = 's32[1]{0}', space=sflag, size = 0x4, scoped, tag = 'scoped memory for tpu_custom_call.1']
    #allocation5 [shape = 'u8[196608]{0}', space=vmem, size = 0x30000, scoped, tag = 'input window, operand 2, single buffered']
    #allocation6 [shape = 's32[1]{0}', space=sflag, size = 0x4, scoped, tag = 'scoped memory for tpu_custom_call.1']
    #allocation7 [shape = 'u8[2048]{0}', space=vmem, size = 0x800, scoped, tag = 'input window, operand 3, single buffered']
    #allocation8 [shape = 'u8[2048]{0}', space=vmem, size = 0x800, scoped, tag = 'input window, operand 4, single buffered']
    #allocation9 [shape = 's32[1]{0}', space=sflag, size = 0x4, scoped, tag = 'scoped memory for tpu_custom_call.1']
    #allocation10 [shape = 'u8[1572864]{0}', space=vmem, size = 0x180000, scoped, tag = 'input window, operand 5, single buffered']
    #allocation11 [shape = 'u8[1024]{0}', space=vmem, size = 0x400, scoped, tag = 'input window, operand 6, single buffered']
    #allocation12 [shape = 's32[1]{0}', space=sflag, size = 0x4, scoped, tag = 'scoped memory for tpu_custom_call.1']
    #allocation13 [shape = 'u8[1024]{0}', space=vmem, size = 0x400, scoped, tag = 'input window, operand 7, single buffered']
    #allocation14 [shape = 'u8[786432]{0}', space=vmem, size = 0xc0000, scoped, tag = 'input window, operand 8, single buffered']
    #allocation15 [shape = 's32[1]{0}', space=sflag, size = 0x4, scoped, tag = 'scoped memory for tpu_custom_call.1']
    #allocation16 [shape = 'u8[1024]{0}', space=vmem, size = 0x400, scoped, tag = 'input window, operand 9, single buffered']
    #allocation17 [shape = 'u8[1024]{0}', space=vmem, size = 0x400, scoped, tag = 'input window, operand 10, single buffered']
    #allocation18 [shape = 's32[1]{0}', space=sflag, size = 0x4, scoped, tag = 'scoped memory for tpu_custom_call.1']
    #allocation19 [shape = 'u8[524288]{0}', space=vmem, size = 0x80000, scoped, tag = 'input window, operand 11, single buffered']
    #allocation20 [shape = 'u8[2048]{0}', space=vmem, size = 0x800, scoped, tag = 'input window, operand 12, single buffered']
    #allocation21 [shape = 's32[1]{0}', space=sflag, size = 0x4, scoped, tag = 'scoped memory for tpu_custom_call.1']
    #allocation22 [shape = 'u8[524288]{0}', space=vmem, size = 0x80000, scoped, tag = 'input window, operand 13, single buffered']
    #allocation23 [shape = 'u8[1024]{0}', space=vmem, size = 0x400, scoped, tag = 'input window, operand 14, single buffered']
    #allocation24 [shape = 's32[1]{0}', space=sflag, size = 0x4, scoped, tag = 'scoped memory for tpu_custom_call.1']
    #allocation25 [shape = 'u8[131072]{0}', space=vmem, size = 0x20000, scoped, tag = 'input window, operand 15, single buffered']
    #allocation26 [shape = 'u8[512]{0}', space=vmem, size = 0x400, scoped, tag = 'input window, operand 16, single buffered']
    #allocation27 [shape = 's32[1]{0}', space=sflag, size = 0x4, scoped, tag = 'scoped memory for tpu_custom_call.1']
    #allocation28 [shape = 'u8[1024]{0}', space=vmem, size = 0x400, scoped, tag = 'output window, operand 0, single buffered']
    %22 = vsyncpa [#allocation3], 0
    %23 = vsyncpa [#allocation6], 0
    %24 = vsyncpa [#allocation9], 0
    %25 = vsyncpa [#allocation12], 0
    %26 = vsyncpa [#allocation15], 0
    %27 = vsyncpa [#allocation18], 0
    %28 = vsyncpa [#allocation21], 0
    %29 = vsyncpa [#allocation24], 0
    %30 = vsyncpa [#allocation27], 0
    %31 = vsyncpa [#allocation4], 0
    // Predicated region
    $region2: #{tpu_custom_call.1} parent=1 // pred_check
      _
    $region3: #{tpu_custom_call.1} parent=1 // pred_check_branch
      %33 = sbr.rel (0) target = $region5
    $region4: #{tpu_custom_call.1} parent=1 // pred_region
      %s35 = ssub.s32 512, 512
      %36 = vsyncadd [#allocation3], %s35
      %s37 = sshll.u32 [#allocation2], 4
      %s38 = int_to_ptr.vmem [resolvable:$true] %s37
      %43 = dma.hbm_to_vmem [thread:$0]  %s0, 512, %s38, [#allocation3], 128, 128, 8
    $region5: #{tpu_custom_call.1} parent=1 // pred_fallthru
      _
    // Predicated region
    $region6: #{tpu_custom_call.1} parent=1 // pred_check
      _
    $region7: #{tpu_custom_call.1} parent=1 // pred_check_branch
      %45 = sbr.rel (0) target = $region9
    $region8: #{tpu_custom_call.1} parent=1 // pred_region
      _
    $region9: #{tpu_custom_call.1} parent=1 // pred_fallthru
      _
    // Predicated region
    $region10: #{tpu_custom_call.1} parent=1 // pred_check
      _
    $region11: #{tpu_custom_call.1} parent=1 // pred_check_branch
      %47 = sbr.rel (0) target = $region13
    $region12: #{tpu_custom_call.1} parent=1 // pred_region
      %s49 = ssub.s32 6144, 6144
      %50 = vsyncadd [#allocation6], %s49
      %s51 = sshll.u32 [#allocation5], 4
      %s52 = int_to_ptr.vmem [resolvable:$true] %s51
      %57 = dma.hbm_to_vmem [thread:$0]  %s2, 6144, %s52, [#allocation6], 512, 512, 32
    $region13: #{tpu_custom_call.1} parent=1 // pred_fallthru
      _
    // Predicated region
    $region14: #{tpu_custom_call.1} parent=1 // pred_check
      _
    $region15: #{tpu_custom_call.1} parent=1 // pred_check_branch
      %59 = sbr.rel (0) target = $region17
    $region16: #{tpu_custom_call.1} parent=1 // pred_region
      %s61 = ssub.s32 64, 64
      %62 = vsyncadd [#allocation6], %s61
      %s64 = sshll.u32 [#allocation7], 4
      %s65 = int_to_ptr.vmem [resolvable:$true] %s64
      %67 = dma.hbm_to_vmem [thread:$0]  %s3, 64, %s65, [#allocation6]
    $region17: #{tpu_custom_call.1} parent=1 // pred_fallthru
      _
    // Predicated region
    $region18: #{tpu_custom_call.1} parent=1 // pred_check
      _
    $region19: #{tpu_custom_call.1} parent=1 // pred_check_branch
      %69 = sbr.rel (0) target = $region21
    $region20: #{tpu_custom_call.1} parent=1 // pred_region
      %s71 = ssub.s32 64, 64
      %72 = vsyncadd [#allocation9], %s71
      %s74 = sshll.u32 [#allocation8], 4
      %s75 = int_to_ptr.vmem [resolvable:$true] %s74
      %77 = dma.hbm_to_vmem [thread:$0]  %s4, 64, %s75, [#allocation9]
    $region21: #{tpu_custom_call.1} parent=1 // pred_fallthru
      _
    // Predicated region
    $region22: #{tpu_custom_call.1} parent=1 // pred_check
      _
    $region23: #{tpu_custom_call.1} parent=1 // pred_check_branch
      %79 = sbr.rel (0) target = $region25
    $region24: #{tpu_custom_call.1} parent=1 // pred_region
      %s81 = ssub.s32 49152, 49152
      %82 = vsyncadd [#allocation9], %s81
      %s83 = sshll.u32 [#allocation10], 4
      %s84 = int_to_ptr.vmem [resolvable:$true] %s83
      %89 = dma.hbm_to_vmem [thread:$0]  %s5, 49152, %s84, [#allocation9], 256, 256, 16
    $region25: #{tpu_custom_call.1} parent=1 // pred_fallthru
      _
    // Predicated region
    $region26: #{tpu_custom_call.1} parent=1 // pred_check
      _
    $region27: #{tpu_custom_call.1} parent=1 // pred_check_branch
      %91 = sbr.rel (0) target = $region29
    $region28: #{tpu_custom_call.1} parent=1 // pred_region
      %s93 = ssub.s32 32, 32
      %94 = vsyncadd [#allocation12], %s93
      %s96 = sshll.u32 [#allocation11], 4
      %s97 = int_to_ptr.vmem [resolvable:$true] %s96
      %99 = dma.hbm_to_vmem [thread:$0]  %s6, 32, %s97, [#allocation12]
    $region29: #{tpu_custom_call.1} parent=1 // pred_fallthru
      _
    // Predicated region
    $region30: #{tpu_custom_call.1} parent=1 // pred_check
      _
    $region31: #{tpu_custom_call.1} parent=1 // pred_check_branch
      %101 = sbr.rel (0) target = $region33
    $region32: #{tpu_custom_call.1} parent=1 // pred_region
      %s103 = ssub.s32 32, 32
      %104 = vsyncadd [#allocation12], %s103
      %s106 = sshll.u32 [#allocation13], 4
      %s107 = int_to_ptr.vmem [resolvable:$true] %s106
      %109 = dma.hbm_to_vmem [thread:$0]  %s7, 32, %s107, [#allocation12]
    $region33: #{tpu_custom_call.1} parent=1 // pred_fallthru
      _
    // Predicated region
    $region34: #{tpu_custom_call.1} parent=1 // pred_check
      _
    $region35: #{tpu_custom_call.1} parent=1 // pred_check_branch
      %111 = sbr.rel (0) target = $region37
    $region36: #{tpu_custom_call.1} parent=1 // pred_region
      %s113 = ssub.s32 24576, 24576
      %114 = vsyncadd [#allocation15], %s113
      %s115 = sshll.u32 [#allocation14], 4
      %s116 = int_to_ptr.vmem [resolvable:$true] %s115
      %121 = dma.hbm_to_vmem [thread:$0]  %s8, 24576, %s116, [#allocation15], 256, 256, 16
    $region37: #{tpu_custom_call.1} parent=1 // pred_fallthru
      _
    // Predicated region
    $region38: #{tpu_custom_call.1} parent=1 // pred_check
      _
    $region39: #{tpu_custom_call.1} parent=1 // pred_check_branch
      %123 = sbr.rel (0) target = $region41
    $region40: #{tpu_custom_call.1} parent=1 // pred_region
      %s125 = ssub.s32 32, 32
      %126 = vsyncadd [#allocation15], %s125
      %s128 = sshll.u32 [#allocation16], 4
      %s129 = int_to_ptr.vmem [resolvable:$true] %s128
      %131 = dma.hbm_to_vmem [thread:$0]  %s9, 32, %s129, [#allocation15]
    $region41: #{tpu_custom_call.1} parent=1 // pred_fallthru
      _
    // Predicated region
    $region42: #{tpu_custom_call.1} parent=1 // pred_check
      _
    $region43: #{tpu_custom_call.1} parent=1 // pred_check_branch
      %133 = sbr.rel (0) target = $region45
    $region44: #{tpu_custom_call.1} parent=1 // pred_region
      %s135 = ssub.s32 32, 32
      %136 = vsyncadd [#allocation18], %s135
      %s138 = sshll.u32 [#allocation17], 4
      %s139 = int_to_ptr.vmem [resolvable:$true] %s138
      %141 = dma.hbm_to_vmem [thread:$0]  %s10, 32, %s139, [#allocation18]
    $region45: #{tpu_custom_call.1} parent=1 // pred_fallthru
      _
    // Predicated region
    $region46: #{tpu_custom_call.1} parent=1 // pred_check
      _
    $region47: #{tpu_custom_call.1} parent=1 // pred_check_branch
      %143 = sbr.rel (0) target = $region49
    $region48: #{tpu_custom_call.1} parent=1 // pred_region
      %s145 = ssub.s32 16384, 16384
      %146 = vsyncadd [#allocation18], %s145
      %s147 = sshll.u32 [#allocation19], 4
      %s148 = int_to_ptr.vmem [resolvable:$true] %s147
      %153 = dma.hbm_to_vmem [thread:$0]  %s11, 16384, %s148, [#allocation18], 512, 512, 32
    $region49: #{tpu_custom_call.1} parent=1 // pred_fallthru
      _
    // Predicated region
    $region50: #{tpu_custom_call.1} parent=1 // pred_check
      _
    $region51: #{tpu_custom_call.1} parent=1 // pred_check_branch
      %155 = sbr.rel (0) target = $region53
    $region52: #{tpu_custom_call.1} parent=1 // pred_region
      %s157 = ssub.s32 64, 64
      %158 = vsyncadd [#allocation21], %s157
      %s160 = sshll.u32 [#allocation20], 4
      %s161 = int_to_ptr.vmem [resolvable:$true] %s160
      %163 = dma.hbm_to_vmem [thread:$0]  %s12, 64, %s161, [#allocation21]
    $region53: #{tpu_custom_call.1} parent=1 // pred_fallthru
      _
    // Predicated region
    $region54: #{tpu_custom_call.1} parent=1 // pred_check
      _
    $region55: #{tpu_custom_call.1} parent=1 // pred_check_branch
      %165 = sbr.rel (0) target = $region57
    $region56: #{tpu_custom_call.1} parent=1 // pred_region
      %s167 = ssub.s32 16384, 16384
      %168 = vsyncadd [#allocation21], %s167
      %s169 = sshll.u32 [#allocation22], 4
      %s170 = int_to_ptr.vmem [resolvable:$true] %s169
      %175 = dma.hbm_to_vmem [thread:$0]  %s13, 16384, %s170, [#allocation21], 256, 256, 16
    $region57: #{tpu_custom_call.1} parent=1 // pred_fallthru
      _
    // Predicated region
    $region58: #{tpu_custom_call.1} parent=1 // pred_check
      _
    $region59: #{tpu_custom_call.1} parent=1 // pred_check_branch
      %177 = sbr.rel (0) target = $region61
    $region60: #{tpu_custom_call.1} parent=1 // pred_region
      %s179 = ssub.s32 32, 32
      %180 = vsyncadd [#allocation24], %s179
      %s182 = sshll.u32 [#allocation23], 4
      %s183 = int_to_ptr.vmem [resolvable:$true] %s182
      %185 = dma.hbm_to_vmem [thread:$0]  %s14, 32, %s183, [#allocation24]
    $region61: #{tpu_custom_call.1} parent=1 // pred_fallthru
      _
    // Predicated region
    $region62: #{tpu_custom_call.1} parent=1 // pred_check
      _
    $region63: #{tpu_custom_call.1} parent=1 // pred_check_branch
      %187 = sbr.rel (0) target = $region65
    $region64: #{tpu_custom_call.1} parent=1 // pred_region
      %s189 = ssub.s32 4096, 4096
      %190 = vsyncadd [#allocation24], %s189
      %s191 = sshll.u32 [#allocation25], 4
      %s192 = int_to_ptr.vmem [resolvable:$true] %s191
      %197 = dma.hbm_to_vmem [thread:$0]  %s15, 4096, %s192, [#allocation24], 128, 128, 8
    $region65: #{tpu_custom_call.1} parent=1 // pred_fallthru
      _
    // Predicated region
    $region66: #{tpu_custom_call.1} parent=1 // pred_check
      _
    $region67: #{tpu_custom_call.1} parent=1 // pred_check_branch
      %199 = sbr.rel (0) target = $region69
    $region68: #{tpu_custom_call.1} parent=1 // pred_region
      %s201 = ssub.s32 16, 16
      %202 = vsyncadd [#allocation27], %s201
      %s204 = sshll.u32 [#allocation26], 4
      %s205 = int_to_ptr.vmem [resolvable:$true] %s204
      %207 = dma.hbm_to_vmem [thread:$0]  %s16, 16, %s205, [#allocation27]
    $region69: #{tpu_custom_call.1} parent=1 // pred_fallthru
      _
    // Predicated region
    $region70: #{tpu_custom_call.1} parent=1 // pred_check
      _
    $region71: #{tpu_custom_call.1} parent=1 // pred_check_branch
      %209 = sbr.rel (0) target = $region73
    $region72: #{tpu_custom_call.1} parent=1 // pred_region
      %210 = dma.done [#allocation3], 512
    $region73: #{tpu_custom_call.1} parent=1 // pred_fallthru
      _
    // Predicated region
    $region74: #{tpu_custom_call.1} parent=1 // pred_check
      _
    $region75: #{tpu_custom_call.1} parent=1 // pred_check_branch
      %212 = sbr.rel (0) target = $region77
    $region76: #{tpu_custom_call.1} parent=1 // pred_region
      %213 = dma.done [#allocation6], 6144
    $region77: #{tpu_custom_call.1} parent=1 // pred_fallthru
      _
    // Predicated region
    $region78: #{tpu_custom_call.1} parent=1 // pred_check
      _
    $region79: #{tpu_custom_call.1} parent=1 // pred_check_branch
      %215 = sbr.rel (0) target = $region81
    $region80: #{tpu_custom_call.1} parent=1 // pred_region
      %216 = dma.done [#allocation6], 64
    $region81: #{tpu_custom_call.1} parent=1 // pred_fallthru
      _
    // Predicated region
    $region82: #{tpu_custom_call.1} parent=1 // pred_check
      _
    $region83: #{tpu_custom_call.1} parent=1 // pred_check_branch
      %218 = sbr.rel (0) target = $region85
    $region84: #{tpu_custom_call.1} parent=1 // pred_region
      %219 = dma.done [#allocation9], 64
    $region85: #{tpu_custom_call.1} parent=1 // pred_fallthru
      _
    // Predicated region
    $region86: #{tpu_custom_call.1} parent=1 // pred_check
      _
    $region87: #{tpu_custom_call.1} parent=1 // pred_check_branch
      %221 = sbr.rel (0) target = $region89
    $region88: #{tpu_custom_call.1} parent=1 // pred_region
      %222 = dma.done [#allocation9], 49152
    $region89: #{tpu_custom_call.1} parent=1 // pred_fallthru
      _
    // Predicated region
    $region90: #{tpu_custom_call.1} parent=1 // pred_check
      _
    $region91: #{tpu_custom_call.1} parent=1 // pred_check_branch
      %224 = sbr.rel (0) target = $region93
    $region92: #{tpu_custom_call.1} parent=1 // pred_region
      %225 = dma.done [#allocation12], 32
    $region93: #{tpu_custom_call.1} parent=1 // pred_fallthru
      _
    // Predicated region
    $region94: #{tpu_custom_call.1} parent=1 // pred_check
      _
    $region95: #{tpu_custom_call.1} parent=1 // pred_check_branch
      %227 = sbr.rel (0) target = $region97
    $region96: #{tpu_custom_call.1} parent=1 // pred_region
      %228 = dma.done [#allocation12], 32
    $region97: #{tpu_custom_call.1} parent=1 // pred_fallthru
      _
    // Predicated region
    $region98: #{tpu_custom_call.1} parent=1 // pred_check
      _
    $region99: #{tpu_custom_call.1} parent=1 // pred_check_branch
      %230 = sbr.rel (0) target = $region101
    $region100: #{tpu_custom_call.1} parent=1 // pred_region
      %231 = dma.done [#allocation15], 24576
    $region101: #{tpu_custom_call.1} parent=1 // pred_fallthru
      _
    // Predicated region
    $region102: #{tpu_custom_call.1} parent=1 // pred_check
      _
    $region103: #{tpu_custom_call.1} parent=1 // pred_check_branch
      %233 = sbr.rel (0) target = $region105
    $region104: #{tpu_custom_call.1} parent=1 // pred_region
      %234 = dma.done [#allocation15], 32
    $region105: #{tpu_custom_call.1} parent=1 // pred_fallthru
      _
    // Predicated region
    $region106: #{tpu_custom_call.1} parent=1 // pred_check
      _
    $region107: #{tpu_custom_call.1} parent=1 // pred_check_branch
      %236 = sbr.rel (0) target = $region109
    $region108: #{tpu_custom_call.1} parent=1 // pred_region
      %237 = dma.done [#allocation18], 32
    $region109: #{tpu_custom_call.1} parent=1 // pred_fallthru
      _
    // Predicated region
    $region110: #{tpu_custom_call.1} parent=1 // pred_check
      _
    $region111: #{tpu_custom_call.1} parent=1 // pred_check_branch
      %239 = sbr.rel (0) target = $region113
    $region112: #{tpu_custom_call.1} parent=1 // pred_region
      %240 = dma.done [#allocation18], 16384
    $region113: #{tpu_custom_call.1} parent=1 // pred_fallthru
      _
    // Predicated region
    $region114: #{tpu_custom_call.1} parent=1 // pred_check
      _
    $region115: #{tpu_custom_call.1} parent=1 // pred_check_branch
      %242 = sbr.rel (0) target = $region117
    $region116: #{tpu_custom_call.1} parent=1 // pred_region
      %243 = dma.done [#allocation21], 64
    $region117: #{tpu_custom_call.1} parent=1 // pred_fallthru
      _
    // Predicated region
    $region118: #{tpu_custom_call.1} parent=1 // pred_check
      _
    $region119: #{tpu_custom_call.1} parent=1 // pred_check_branch
      %245 = sbr.rel (0) target = $region121
    $region120: #{tpu_custom_call.1} parent=1 // pred_region
      %246 = dma.done [#allocation21], 16384
    $region121: #{tpu_custom_call.1} parent=1 // pred_fallthru
      _
    // Predicated region
    $region122: #{tpu_custom_call.1} parent=1 // pred_check
      _
    $region123: #{tpu_custom_call.1} parent=1 // pred_check_branch
      %248 = sbr.rel (0) target = $region125
    $region124: #{tpu_custom_call.1} parent=1 // pred_region
      %249 = dma.done [#allocation24], 32
    $region125: #{tpu_custom_call.1} parent=1 // pred_fallthru
      _
    // Predicated region
    $region126: #{tpu_custom_call.1} parent=1 // pred_check
      _
    $region127: #{tpu_custom_call.1} parent=1 // pred_check_branch
      %251 = sbr.rel (0) target = $region129
    $region128: #{tpu_custom_call.1} parent=1 // pred_region
      %252 = dma.done [#allocation24], 4096
    $region129: #{tpu_custom_call.1} parent=1 // pred_fallthru
      _
    // Predicated region
    $region130: #{tpu_custom_call.1} parent=1 // pred_check
      _
    $region131: #{tpu_custom_call.1} parent=1 // pred_check_branch
      %254 = sbr.rel (0) target = $region133
    $region132: #{tpu_custom_call.1} parent=1 // pred_region
      %255 = dma.done [#allocation27], 16
    $region133: #{tpu_custom_call.1} parent=1 // pred_fallthru
      _
    %v256 = vld [vmem:[#allocation2] sm:$0xff]
    %v257 = vld [vmem:[#allocation2 + $0x8] sm:$0xff]
    %v258 = vld [vmem:[#allocation2 + $0x10] sm:$0xff]
    %v259 = vld [vmem:[#allocation2 + $0x18] sm:$0xff]
    %v260 = vld [vmem:[%s1] sm:$0xff]
    %v261 = vld [vmem:[%s1 + $0x8] sm:$0xff]
    %v262 = vld [vmem:[%s1 + $0x10] sm:$0xff]
    %v263 = vld [vmem:[%s1 + $0x18] sm:$0xff]
    %265 = vset.pattern.permute.xlu0 0
    %266 = vperm.xlu0 %265, %v260
    %v267 = vpop.permute.xlu0 %266
    %270 = vset.pattern.permute.xlu0 0
    %271 = vperm.xlu0 %270, %v261
    %v272 = vpop.permute.xlu0 %271
    %275 = vset.pattern.permute.xlu0 0
    %276 = vperm.xlu0 %275, %v262
    %v277 = vpop.permute.xlu0 %276
    %280 = vset.pattern.permute.xlu0 0
    %281 = vperm.xlu0 %280, %v263
    %v282 = vpop.permute.xlu0 %281
    %v284 = vmul.f32 %v256, %v267
    %v285 = vmul.f32 %v257, %v272
    %v286 = vmul.f32 %v258, %v277
    %v287 = vmul.f32 %v259, %v282
    %v288 = vld [vmem:[#allocation5] sm:$0xff]
    %v289 = vld [vmem:[#allocation5 + $0x8] sm:$0xff]
    %v290 = vld [vmem:[#allocation5 + $0x10] sm:$0xff]
    %v291 = vld [vmem:[#allocation5 + $0x18] sm:$0xff]
    %v292 = vld [vmem:[#allocation5 + $0x20] sm:$0xff]
    %v293 = vld [vmem:[#allocation5 + $0x28] sm:$0xff]
    %v294 = vld [vmem:[#allocation5 + $0x30] sm:$0xff]
    %v295 = vld [vmem:[#allocation5 + $0x38] sm:$0xff]
    %v296 = vld [vmem:[#allocation5 + $0x40] sm:$0xff]
    %v297 = vld [vmem:[#allocation5 + $0x48] sm:$0xff]
    %v298 = vld [vmem:[#allocation5 + $0x50] sm:$0xff]
    %v299 = vld [vmem:[#allocation5 + $0x58] sm:$0xff]
    %v300 = vld [vmem:[#allocation5 + $0x60] sm:$0xff]
    %v301 = vld [vmem:[#allocation5 + $0x68] sm:$0xff]
    %v302 = vld [vmem:[#allocation5 + $0x70] sm:$0xff]
    %v303 = vld [vmem:[#allocation5 + $0x78] sm:$0xff]
    %v304 = vld [vmem:[#allocation5 + $0x80] sm:$0xff]
    %v305 = vld [vmem:[#allocation5 + $0x88] sm:$0xff]
    %v306 = vld [vmem:[#allocation5 + $0x90] sm:$0xff]
    %v307 = vld [vmem:[#allocation5 + $0x98] sm:$0xff]
    %v308 = vld [vmem:[#allocation5 + $0xa0] sm:$0xff]
    %v309 = vld [vmem:[#allocation5 + $0xa8] sm:$0xff]
    %v310 = vld [vmem:[#allocation5 + $0xb0] sm:$0xff]
    %v311 = vld [vmem:[#allocation5 + $0xb8] sm:$0xff]
    %v312 = vld [vmem:[#allocation5 + $0xc0] sm:$0xff]
    %v313 = vld [vmem:[#allocation5 + $0xc8] sm:$0xff]
    %v314 = vld [vmem:[#allocation5 + $0xd0] sm:$0xff]
    %v315 = vld [vmem:[#allocation5 + $0xd8] sm:$0xff]
    %v316 = vld [vmem:[#allocation5 + $0xe0] sm:$0xff]
    %v317 = vld [vmem:[#allocation5 + $0xe8] sm:$0xff]
    %v318 = vld [vmem:[#allocation5 + $0xf0] sm:$0xff]
    %v319 = vld [vmem:[#allocation5 + $0xf8] sm:$0xff]
    %v320 = vld [vmem:[#allocation5 + $0x100] sm:$0xff]
    %v321 = vld [vmem:[#allocation5 + $0x108] sm:$0xff]
    %v322 = vld [vmem:[#allocation5 + $0x110] sm:$0xff]
    %v323 = vld [vmem:[#allocation5 + $0x118] sm:$0xff]
    %v324 = vld [vmem:[#allocation5 + $0x120] sm:$0xff]
    %v325 = vld [vmem:[#allocation5 + $0x128] sm:$0xff]
    %v326 = vld [vmem:[#allocation5 + $0x130] sm:$0xff]
    %v327 = vld [vmem:[#allocation5 + $0x138] sm:$0xff]
    %v328 = vld [vmem:[#allocation5 + $0x140] sm:$0xff]
    %v329 = vld [vmem:[#allocation5 + $0x148] sm:$0xff]
    %v330 = vld [vmem:[#allocation5 + $0x150] sm:$0xff]
    %v331 = vld [vmem:[#allocation5 + $0x158] sm:$0xff]
    %v332 = vld [vmem:[#allocation5 + $0x160] sm:$0xff]
    %v333 = vld [vmem:[#allocation5 + $0x168] sm:$0xff]
    %v334 = vld [vmem:[#allocation5 + $0x170] sm:$0xff]
    %v335 = vld [vmem:[#allocation5 + $0x178] sm:$0xff]
    %v336 = vld [vmem:[#allocation7] sm:$0xf]
    %v337 = vld [vmem:[#allocation8] sm:$0xf]
    %vm342 = vcmask 1040384
    %v343 = vrot.slane %v284, 7
    %v344 = vrot.slane %v285, 7
    %v345 = vsel %vm342, %v343, %v344
    %v346 = vrot.slane %v286, 7
    %v347 = vrot.slane %v287, 7
    %v348 = vsel %vm342, %v346, %v347
    %v353 = vsel %vm342, 0.0, %v343
    %v354 = vsel %vm342, 0.0, %v346
    %v355 = vsel %vm342, %v344, 0.0
    %v356 = vsel %vm342, %v347, 0.0
    %vm361 = vcmask 1046528
    %v362 = vrot.slane %v353, 1
    %v363 = vrot.slane %v345, 1
    %v364 = vsel %vm361, %v362, %v363
    %v365 = vrot.slane %v355, 1
    %v366 = vsel %vm361, %v363, %v365
    %v367 = vrot.slane %v354, 1
    %v368 = vrot.slane %v348, 1
    %v369 = vsel %vm361, %v367, %v368
    %v370 = vrot.slane %v356, 1
    %v371 = vsel %vm361, %v368, %v370
    %vm372 = vcmask 261120
    %v373 = vsel %vm372, %v364, 0
    %v375 = vsel %vm372, %v366, 0
    %v377 = vsel %vm372, %v369, 0
    %v379 = vsel %vm372, %v371, 0
    %381 = vmatprep.subr.mxu0 0.0
    %382 = vmatpush1.msra.mxu0 0.0
    %383 = vmatprep.subr.mxu0 0.0
    %384 = vmatpush1.msra.mxu0 0.0
    %385 = vmatprep.subr.mxu0 0.0
    %386 = vmatpush1.msra.mxu0 0.0
    %387 = vmatprep.subr.mxu0 0.0
    %388 = vmatpush1.msra.mxu0 0.0
    %389 = vmatprep.subr.mxu0 0.0
    %390 = vmatpush1.msra.mxu0 0.0
    %391 = vmatprep.subr.mxu0 0.0
    %392 = vmatpush1.msra.mxu0 0.0
    %393 = vmatprep.subr.mxu0 0.0
    %394 = vmatpush1.msra.mxu0 0.0
    %395 = vmatprep.subr.mxu0 0.0
    %396 = vmatpush1.msra.mxu0 0.0
    %397 = vmatprep.subr.mxu0 0.0
    %398 = vmatpush1.msra.mxu0 0.0
    %399 = vmatprep.subr.mxu0 0.0
    %400 = vmatpush1.msra.mxu0 0.0
    %401 = vmatprep.subr.mxu0 0.0
    %402 = vmatpush1.msra.mxu0 0.0
    %403 = vmatprep.subr.mxu0 0.0
    %404 = vmatpush1.msra.mxu0 0.0
    %405 = vmatprep.subr.mxu0 %v317
    %406 = vmatpush1.msra.mxu0 %v316
    %407 = vmatprep.subr.mxu0 %v313
    %408 = vmatpush1.msra.mxu0 %v312
    %409 = vmatprep.subr.mxu0 %v309
    %410 = vmatpush1.msra.mxu0 %v308
    %411 = vmatprep.subr.mxu0 %v305
    %412 = vmatpush1.msra.mxu0 %v304
    %413 = vmatprep.subr.mxu0 0.0
    %414 = vmatpush2.msra.mxu0 0.0
    %415 = vmatprep.subr.mxu0 0.0
    %416 = vmatpush2.msra.mxu0 0.0
    %417 = vmatprep.subr.mxu0 0.0
    %418 = vmatpush2.msra.mxu0 0.0
    %419 = vmatprep.subr.mxu0 0.0
    %420 = vmatpush2.msra.mxu0 0.0
    %421 = vmatprep.subr.mxu0 0.0
    %422 = vmatpush2.msra.mxu0 0.0
    %423 = vmatprep.subr.mxu0 0.0
    %424 = vmatpush2.msra.mxu0 0.0
    %425 = vmatprep.subr.mxu0 0.0
    %426 = vmatpush2.msra.mxu0 0.0
    %427 = vmatprep.subr.mxu0 0.0
    %428 = vmatpush2.msra.mxu0 0.0
    %429 = vmatprep.subr.mxu0 0.0
    %430 = vmatpush2.msra.mxu0 0.0
    %431 = vmatprep.subr.mxu0 0.0
    %432 = vmatpush2.msra.mxu0 0.0
    %433 = vmatprep.subr.mxu0 0.0
    %434 = vmatpush2.msra.mxu0 0.0
    %435 = vmatprep.subr.mxu0 0.0
    %436 = vmatpush2.msra.mxu0 0.0
    %437 = vmatprep.subr.mxu0 0.0
    %438 = vmatpush2.msra.mxu0 0.0
    %439 = vmatprep.subr.mxu0 0.0
    %440 = vmatpush2.msra.mxu0 0.0
    %441 = vmatprep.subr.mxu0 0.0
    %442 = vmatpush2.msra.mxu0 0.0
    %443 = vmatprep.subr.mxu0 0.0
    %444 = vmatpush2.msra.mxu0 0.0
    %445 = vmatprep.mubr.f32.mxu0 0.0
    %446 = vmatmul.mubr.f32.gmra.mxu0 %v373
    %v447 = vpop.f32.mrf.mxu0
    %v448 = vadd.f32 0.0, %v447
    %v449 = vpop.f32.mrf.mxu0
    %v450 = vadd.f32 0.0, %v449
    %451 = vmatprep.mubr.f32.mxu0 0.0
    %452 = vmatmul.mubr.f32.gmra.mxu0 %v375
    %v453 = vpop.f32.mrf.mxu0
    %v454 = vadd.f32 0.0, %v453
    %v455 = vpop.f32.mrf.mxu0
    %v456 = vadd.f32 0.0, %v455
    %457 = vmatprep.mubr.f32.mxu0 0.0
    %458 = vmatmul.mubr.f32.gmra.mxu0 %v377
    %v459 = vpop.f32.mrf.mxu0
    %v460 = vadd.f32 0.0, %v459
    %v461 = vpop.f32.mrf.mxu0
    %v462 = vadd.f32 0.0, %v461
    %463 = vmatprep.mubr.f32.mxu0 0.0
    %464 = vmatmul.mubr.f32.gmra.mxu0 %v379
    %v465 = vpop.f32.mrf.mxu0
    %v466 = vadd.f32 0.0, %v465
    %v467 = vpop.f32.mrf.mxu0
    %v468 = vadd.f32 0.0, %v467
    %469 = vdwg.mxu0
    %470 = vmatprep.subr.mxu0 0.0
    %471 = vmatpush1.msra.mxu0 0.0
    %472 = vmatprep.subr.mxu0 0.0
    %473 = vmatpush1.msra.mxu0 0.0
    %474 = vmatprep.subr.mxu0 0.0
    %475 = vmatpush1.msra.mxu0 0.0
    %476 = vmatprep.subr.mxu0 0.0
    %477 = vmatpush1.msra.mxu0 0.0
    %478 = vmatprep.subr.mxu0 0.0
    %479 = vmatpush1.msra.mxu0 0.0
    %480 = vmatprep.subr.mxu0 0.0
    %481 = vmatpush1.msra.mxu0 0.0
    %482 = vmatprep.subr.mxu0 0.0
    %483 = vmatpush1.msra.mxu0 0.0
    %484 = vmatprep.subr.mxu0 0.0
    %485 = vmatpush1.msra.mxu0 0.0
    %486 = vmatprep.subr.mxu0 0.0
    %487 = vmatpush1.msra.mxu0 0.0
    %488 = vmatprep.subr.mxu0 0.0
    %489 = vmatpush1.msra.mxu0 0.0
    %490 = vmatprep.subr.mxu0 0.0
    %491 = vmatpush1.msra.mxu0 0.0
    %492 = vmatprep.subr.mxu0 0.0
    %493 = vmatpush1.msra.mxu0 0.0
    %494 = vmatprep.subr.mxu0 %v319
    %495 = vmatpush1.msra.mxu0 %v318
    %496 = vmatprep.subr.mxu0 %v315
    %497 = vmatpush1.msra.mxu0 %v314
    %498 = vmatprep.subr.mxu0 %v311
    %499 = vmatpush1.msra.mxu0 %v310
    %500 = vmatprep.subr.mxu0 %v307
    %501 = vmatpush1.msra.mxu0 %v306
    %502 = vmatprep.subr.mxu0 0.0
    %503 = vmatpush2.msra.mxu0 0.0
    %504 = vmatprep.subr.mxu0 0.0
    %505 = vmatpush2.msra.mxu0 0.0
    %506 = vmatprep.subr.mxu0 0.0
    %507 = vmatpush2.msra.mxu0 0.0
    %508 = vmatprep.subr.mxu0 0.0
    %509 = vmatpush2.msra.mxu0 0.0
    %510 = vmatprep.subr.mxu0 0.0
    %511 = vmatpush2.msra.mxu0 0.0
    %512 = vmatprep.subr.mxu0 0.0
    %513 = vmatpush2.msra.mxu0 0.0
    %514 = vmatprep.subr.mxu0 0.0
    %515 = vmatpush2.msra.mxu0 0.0
    %516 = vmatprep.subr.mxu0 0.0
    %517 = vmatpush2.msra.mxu0 0.0
    %518 = vmatprep.subr.mxu0 0.0
    %519 = vmatpush2.msra.mxu0 0.0
    %520 = vmatprep.subr.mxu0 0.0
    %521 = vmatpush2.msra.mxu0 0.0
    %522 = vmatprep.subr.mxu0 0.0
    %523 = vmatpush2.msra.mxu0 0.0
    %524 = vmatprep.subr.mxu0 0.0
    %525 = vmatpush2.msra.mxu0 0.0
    %526 = vmatprep.subr.mxu0 0.0
    %527 = vmatpush2.msra.mxu0 0.0
    %528 = vmatprep.subr.mxu0 0.0
    %529 = vmatpush2.msra.mxu0 0.0
    %530 = vmatprep.subr.mxu0 0.0
    %531 = vmatpush2.msra.mxu0 0.0
    %532 = vmatprep.subr.mxu0 0.0
    %533 = vmatpush2.msra.mxu0 0.0
    %534 = vmatprep.mubr.f32.mxu0 0.0
    %535 = vmatmul.mubr.f32.gmra.mxu0 %v373
    %v536 = vpop.f32.mrf.mxu0
    %v537 = vadd.f32 0.0, %v536
    %v538 = vpop.f32.mrf.mxu0
    %v539 = vadd.f32 0.0, %v538
    %540 = vmatprep.mubr.f32.mxu0 0.0
    %541 = vmatmul.mubr.f32.gmra.mxu0 %v375
    %v542 = vpop.f32.mrf.mxu0
    %v543 = vadd.f32 0.0, %v542
    %v544 = vpop.f32.mrf.mxu0
    %v545 = vadd.f32 0.0, %v544
    %546 = vmatprep.mubr.f32.mxu0 0.0
    %547 = vmatmul.mubr.f32.gmra.mxu0 %v377
    %v548 = vpop.f32.mrf.mxu0
    %v549 = vadd.f32 0.0, %v548
    %v550 = vpop.f32.mrf.mxu0
    %v551 = vadd.f32 0.0, %v550
    %552 = vmatprep.mubr.f32.mxu0 0.0
    %553 = vmatmul.mubr.f32.gmra.mxu0 %v379
    %v554 = vpop.f32.mrf.mxu0
    %v555 = vadd.f32 0.0, %v554
    %v556 = vpop.f32.mrf.mxu0
    %v557 = vadd.f32 0.0, %v556
    %558 = vdwg.mxu0
    %v559 = vsel %vm372, %v353, 0
    %v561 = vsel %vm372, %v345, 0
    %v563 = vsel %vm372, %v354, 0
    %v565 = vsel %vm372, %v348, 0
    %567 = vmatprep.subr.mxu0 0.0
    %568 = vmatpush1.msra.mxu0 0.0
    %569 = vmatprep.subr.mxu0 0.0
    %570 = vmatpush1.msra.mxu0 0.0
    %571 = vmatprep.subr.mxu0 0.0
    %572 = vmatpush1.msra.mxu0 0.0
    %573 = vmatprep.subr.mxu0 0.0
    %574 = vmatpush1.msra.mxu0 0.0
    %575 = vmatprep.subr.mxu0 0.0
    %576 = vmatpush1.msra.mxu0 0.0
    %577 = vmatprep.subr.mxu0 0.0
    %578 = vmatpush1.msra.mxu0 0.0
    %579 = vmatprep.subr.mxu0 0.0
    %580 = vmatpush1.msra.mxu0 0.0
    %581 = vmatprep.subr.mxu0 0.0
    %582 = vmatpush1.msra.mxu0 0.0
    %583 = vmatprep.subr.mxu0 0.0
    %584 = vmatpush1.msra.mxu0 0.0
    %585 = vmatprep.subr.mxu0 0.0
    %586 = vmatpush1.msra.mxu0 0.0
    %587 = vmatprep.subr.mxu0 0.0
    %588 = vmatpush1.msra.mxu0 0.0
    %589 = vmatprep.subr.mxu0 0.0
    %590 = vmatpush1.msra.mxu0 0.0
    %591 = vmatprep.subr.mxu0 %v301
    %592 = vmatpush1.msra.mxu0 %v300
    %593 = vmatprep.subr.mxu0 %v297
    %594 = vmatpush1.msra.mxu0 %v296
    %595 = vmatprep.subr.mxu0 %v293
    %596 = vmatpush1.msra.mxu0 %v292
    %597 = vmatprep.subr.mxu0 %v289
    %598 = vmatpush1.msra.mxu0 %v288
    %599 = vmatprep.subr.mxu0 0.0
    %600 = vmatpush2.msra.mxu0 0.0
    %601 = vmatprep.subr.mxu0 0.0
    %602 = vmatpush2.msra.mxu0 0.0
    %603 = vmatprep.subr.mxu0 0.0
    %604 = vmatpush2.msra.mxu0 0.0
    %605 = vmatprep.subr.mxu0 0.0
    %606 = vmatpush2.msra.mxu0 0.0
    %607 = vmatprep.subr.mxu0 0.0
    %608 = vmatpush2.msra.mxu0 0.0
    %609 = vmatprep.subr.mxu0 0.0
    %610 = vmatpush2.msra.mxu0 0.0
    %611 = vmatprep.subr.mxu0 0.0
    %612 = vmatpush2.msra.mxu0 0.0
    %613 = vmatprep.subr.mxu0 0.0
    %614 = vmatpush2.msra.mxu0 0.0
    %615 = vmatprep.subr.mxu0 0.0
    %616 = vmatpush2.msra.mxu0 0.0
    %617 = vmatprep.subr.mxu0 0.0
    %618 = vmatpush2.msra.mxu0 0.0
    %619 = vmatprep.subr.mxu0 0.0
    %620 = vmatpush2.msra.mxu0 0.0
    %621 = vmatprep.subr.mxu0 0.0
    %622 = vmatpush2.msra.mxu0 0.0
    %623 = vmatprep.subr.mxu0 0.0
    %624 = vmatpush2.msra.mxu0 0.0
    %625 = vmatprep.subr.mxu0 0.0
    %626 = vmatpush2.msra.mxu0 0.0
    %627 = vmatprep.subr.mxu0 0.0
    %628 = vmatpush2.msra.mxu0 0.0
    %629 = vmatprep.subr.mxu0 0.0
    %630 = vmatpush2.msra.mxu0 0.0
    %631 = vmatprep.mubr.f32.mxu0 0.0
    %632 = vmatmul.mubr.f32.gmra.mxu0 %v559
    %v633 = vpop.f32.mrf.mxu0
    %v634 = vadd.f32 %v448, %v633
    %v635 = vpop.f32.mrf.mxu0
    %v636 = vadd.f32 %v450, %v635
    %637 = vmatprep.mubr.f32.mxu0 0.0
    %638 = vmatmul.mubr.f32.gmra.mxu0 %v561
    %v639 = vpop.f32.mrf.mxu0
    %v640 = vadd.f32 %v454, %v639
    %v641 = vpop.f32.mrf.mxu0
    %v642 = vadd.f32 %v456, %v641
    %643 = vmatprep.mubr.f32.mxu0 0.0
    %644 = vmatmul.mubr.f32.gmra.mxu0 %v563
    %v645 = vpop.f32.mrf.mxu0
    %v646 = vadd.f32 %v460, %v645
    %v647 = vpop.f32.mrf.mxu0
    %v648 = vadd.f32 %v462, %v647
    %649 = vmatprep.mubr.f32.mxu0 0.0
    %650 = vmatmul.mubr.f32.gmra.mxu0 %v565
    %v651 = vpop.f32.mrf.mxu0
    %v652 = vadd.f32 %v466, %v651
    %v653 = vpop.f32.mrf.mxu0
    %v654 = vadd.f32 %v468, %v653
    %655 = vdwg.mxu0
    %656 = vmatprep.subr.mxu0 0.0
    %657 = vmatpush1.msra.mxu0 0.0
    %658 = vmatprep.subr.mxu0 0.0
    %659 = vmatpush1.msra.mxu0 0.0
    %660 = vmatprep.subr.mxu0 0.0
    %661 = vmatpush1.msra.mxu0 0.0
    %662 = vmatprep.subr.mxu0 0.0
    %663 = vmatpush1.msra.mxu0 0.0
    %664 = vmatprep.subr.mxu0 0.0
    %665 = vmatpush1.msra.mxu0 0.0
    %666 = vmatprep.subr.mxu0 0.0
    %667 = vmatpush1.msra.mxu0 0.0
    %668 = vmatprep.subr.mxu0 0.0
    %669 = vmatpush1.msra.mxu0 0.0
    %670 = vmatprep.subr.mxu0 0.0
    %671 = vmatpush1.msra.mxu0 0.0
    %672 = vmatprep.subr.mxu0 0.0
    %673 = vmatpush1.msra.mxu0 0.0
    %674 = vmatprep.subr.mxu0 0.0
    %675 = vmatpush1.msra.mxu0 0.0
    %676 = vmatprep.subr.mxu0 0.0
    %677 = vmatpush1.msra.mxu0 0.0
    %678 = vmatprep.subr.mxu0 0.0
    %679 = vmatpush1.msra.mxu0 0.0
    %680 = vmatprep.subr.mxu0 %v303
    %681 = vmatpush1.msra.mxu0 %v302
    %682 = vmatprep.subr.mxu0 %v299
    %683 = vmatpush1.msra.mxu0 %v298
    %684 = vmatprep.subr.mxu0 %v295
    %685 = vmatpush1.msra.mxu0 %v294
    %686 = vmatprep.subr.mxu0 %v291
    %687 = vmatpush1.msra.mxu0 %v290
    %688 = vmatprep.subr.mxu0 0.0
    %689 = vmatpush2.msra.mxu0 0.0
    %690 = vmatprep.subr.mxu0 0.0
    %691 = vmatpush2.msra.mxu0 0.0
    %692 = vmatprep.subr.mxu0 0.0
    %693 = vmatpush2.msra.mxu0 0.0
    %694 = vmatprep.subr.mxu0 0.0
    %695 = vmatpush2.msra.mxu0 0.0
    %696 = vmatprep.subr.mxu0 0.0
    %697 = vmatpush2.msra.mxu0 0.0
    %698 = vmatprep.subr.mxu0 0.0
    %699 = vmatpush2.msra.mxu0 0.0
    %700 = vmatprep.subr.mxu0 0.0
    %701 = vmatpush2.msra.mxu0 0.0
    %702 = vmatprep.subr.mxu0 0.0
    %703 = vmatpush2.msra.mxu0 0.0
    %704 = vmatprep.subr.mxu0 0.0
    %705 = vmatpush2.msra.mxu0 0.0
    %706 = vmatprep.subr.mxu0 0.0
    %707 = vmatpush2.msra.mxu0 0.0
    %708 = vmatprep.subr.mxu0 0.0
    %709 = vmatpush2.msra.mxu0 0.0
    %710 = vmatprep.subr.mxu0 0.0
    %711 = vmatpush2.msra.mxu0 0.0
    %712 = vmatprep.subr.mxu0 0.0
    %713 = vmatpush2.msra.mxu0 0.0
    %714 = vmatprep.subr.mxu0 0.0
    %715 = vmatpush2.msra.mxu0 0.0
    %716 = vmatprep.subr.mxu0 0.0
    %717 = vmatpush2.msra.mxu0 0.0
    %718 = vmatprep.subr.mxu0 0.0
    %719 = vmatpush2.msra.mxu0 0.0
    %720 = vmatprep.mubr.f32.mxu0 0.0
    %721 = vmatmul.mubr.f32.gmra.mxu0 %v559
    %v722 = vpop.f32.mrf.mxu0
    %v723 = vadd.f32 %v537, %v722
    %v724 = vpop.f32.mrf.mxu0
    %v725 = vadd.f32 %v539, %v724
    %726 = vmatprep.mubr.f32.mxu0 0.0
    %727 = vmatmul.mubr.f32.gmra.mxu0 %v561
    %v728 = vpop.f32.mrf.mxu0
    %v729 = vadd.f32 %v543, %v728
    %v730 = vpop.f32.mrf.mxu0
    %v731 = vadd.f32 %v545, %v730
    %732 = vmatprep.mubr.f32.mxu0 0.0
    %733 = vmatmul.mubr.f32.gmra.mxu0 %v563
    %v734 = vpop.f32.mrf.mxu0
    %v735 = vadd.f32 %v549, %v734
    %v736 = vpop.f32.mrf.mxu0
    %v737 = vadd.f32 %v551, %v736
    %738 = vmatprep.mubr.f32.mxu0 0.0
    %739 = vmatmul.mubr.f32.gmra.mxu0 %v565
    %v740 = vpop.f32.mrf.mxu0
    %v741 = vadd.f32 %v555, %v740
    %v742 = vpop.f32.mrf.mxu0
    %v743 = vadd.f32 %v557, %v742
    %744 = vdwg.mxu0
    %vm745 = vcmask 1045504
    %v746 = vrot.slane %v353, 2
    %v747 = vrot.slane %v345, 2
    %v748 = vsel %vm745, %v746, %v747
    %v749 = vrot.slane %v355, 2
    %v750 = vsel %vm745, %v747, %v749
    %v751 = vrot.slane %v354, 2
    %v752 = vrot.slane %v348, 2
    %v753 = vsel %vm745, %v751, %v752
    %v754 = vrot.slane %v356, 2
    %v755 = vsel %vm745, %v752, %v754
    %v756 = vsel %vm372, %v748, 0
    %v758 = vsel %vm372, %v750, 0
    %v760 = vsel %vm372, %v753, 0
    %v762 = vsel %vm372, %v755, 0
    %764 = vmatprep.subr.mxu0 0.0
    %765 = vmatpush1.msra.mxu0 0.0
    %766 = vmatprep.subr.mxu0 0.0
    %767 = vmatpush1.msra.mxu0 0.0
    %768 = vmatprep.subr.mxu0 0.0
    %769 = vmatpush1.msra.mxu0 0.0
    %770 = vmatprep.subr.mxu0 0.0
    %771 = vmatpush1.msra.mxu0 0.0
    %772 = vmatprep.subr.mxu0 0.0
    %773 = vmatpush1.msra.mxu0 0.0
    %774 = vmatprep.subr.mxu0 0.0
    %775 = vmatpush1.msra.mxu0 0.0
    %776 = vmatprep.subr.mxu0 0.0
    %777 = vmatpush1.msra.mxu0 0.0
    %778 = vmatprep.subr.mxu0 0.0
    %779 = vmatpush1.msra.mxu0 0.0
    %780 = vmatprep.subr.mxu0 0.0
    %781 = vmatpush1.msra.mxu0 0.0
    %782 = vmatprep.subr.mxu0 0.0
    %783 = vmatpush1.msra.mxu0 0.0
    %784 = vmatprep.subr.mxu0 0.0
    %785 = vmatpush1.msra.mxu0 0.0
    %786 = vmatprep.subr.mxu0 0.0
    %787 = vmatpush1.msra.mxu0 0.0
    %788 = vmatprep.subr.mxu0 %v333
    %789 = vmatpush1.msra.mxu0 %v332
    %790 = vmatprep.subr.mxu0 %v329
    %791 = vmatpush1.msra.mxu0 %v328
    %792 = vmatprep.subr.mxu0 %v325
    %793 = vmatpush1.msra.mxu0 %v324
    %794 = vmatprep.subr.mxu0 %v321
    %795 = vmatpush1.msra.mxu0 %v320
    %796 = vmatprep.subr.mxu0 0.0
    %797 = vmatpush2.msra.mxu0 0.0
    %798 = vmatprep.subr.mxu0 0.0
    %799 = vmatpush2.msra.mxu0 0.0
    %800 = vmatprep.subr.mxu0 0.0
    %801 = vmatpush2.msra.mxu0 0.0
    %802 = vmatprep.subr.mxu0 0.0
    %803 = vmatpush2.msra.mxu0 0.0
    %804 = vmatprep.subr.mxu0 0.0
    %805 = vmatpush2.msra.mxu0 0.0
    %806 = vmatprep.subr.mxu0 0.0
    %807 = vmatpush2.msra.mxu0 0.0
    %808 = vmatprep.subr.mxu0 0.0
    %809 = vmatpush2.msra.mxu0 0.0
    %810 = vmatprep.subr.mxu0 0.0
    %811 = vmatpush2.msra.mxu0 0.0
    %812 = vmatprep.subr.mxu0 0.0
    %813 = vmatpush2.msra.mxu0 0.0
    %814 = vmatprep.subr.mxu0 0.0
    %815 = vmatpush2.msra.mxu0 0.0
    %816 = vmatprep.subr.mxu0 0.0
    %817 = vmatpush2.msra.mxu0 0.0
    %818 = vmatprep.subr.mxu0 0.0
    %819 = vmatpush2.msra.mxu0 0.0
    %820 = vmatprep.subr.mxu0 0.0
    %821 = vmatpush2.msra.mxu0 0.0
    %822 = vmatprep.subr.mxu0 0.0
    %823 = vmatpush2.msra.mxu0 0.0
    %824 = vmatprep.subr.mxu0 0.0
    %825 = vmatpush2.msra.mxu0 0.0
    %826 = vmatprep.subr.mxu0 0.0
    %827 = vmatpush2.msra.mxu0 0.0
    %828 = vmatprep.mubr.f32.mxu0 0.0
    %829 = vmatmul.mubr.f32.gmra.mxu0 %v756
    %v830 = vpop.f32.mrf.mxu0
    %v831 = vadd.f32 0.0, %v830
    %v832 = vpop.f32.mrf.mxu0
    %v833 = vadd.f32 0.0, %v832
    %834 = vmatprep.mubr.f32.mxu0 0.0
    %835 = vmatmul.mubr.f32.gmra.mxu0 %v758
    %v836 = vpop.f32.mrf.mxu0
    %v837 = vadd.f32 0.0, %v836
    %v838 = vpop.f32.mrf.mxu0
    %v839 = vadd.f32 0.0, %v838
    %840 = vmatprep.mubr.f32.mxu0 0.0
    %841 = vmatmul.mubr.f32.gmra.mxu0 %v760
    %v842 = vpop.f32.mrf.mxu0
    %v843 = vadd.f32 0.0, %v842
    %v844 = vpop.f32.mrf.mxu0
    %v845 = vadd.f32 0.0, %v844
    %846 = vmatprep.mubr.f32.mxu0 0.0
    %847 = vmatmul.mubr.f32.gmra.mxu0 %v762
    %v848 = vpop.f32.mrf.mxu0
    %v849 = vadd.f32 0.0, %v848
    %v850 = vpop.f32.mrf.mxu0
    %v851 = vadd.f32 0.0, %v850
    %852 = vdwg.mxu0
    %853 = vmatprep.subr.mxu0 0.0
    %854 = vmatpush1.msra.mxu0 0.0
    %855 = vmatprep.subr.mxu0 0.0
    %856 = vmatpush1.msra.mxu0 0.0
    %857 = vmatprep.subr.mxu0 0.0
    %858 = vmatpush1.msra.mxu0 0.0
    %859 = vmatprep.subr.mxu0 0.0
    %860 = vmatpush1.msra.mxu0 0.0
    %861 = vmatprep.subr.mxu0 0.0
    %862 = vmatpush1.msra.mxu0 0.0
    %863 = vmatprep.subr.mxu0 0.0
    %864 = vmatpush1.msra.mxu0 0.0
    %865 = vmatprep.subr.mxu0 0.0
    %866 = vmatpush1.msra.mxu0 0.0
    %867 = vmatprep.subr.mxu0 0.0
    %868 = vmatpush1.msra.mxu0 0.0
    %869 = vmatprep.subr.mxu0 0.0
    %870 = vmatpush1.msra.mxu0 0.0
    %871 = vmatprep.subr.mxu0 0.0
    %872 = vmatpush1.msra.mxu0 0.0
    %873 = vmatprep.subr.mxu0 0.0
    %874 = vmatpush1.msra.mxu0 0.0
    %875 = vmatprep.subr.mxu0 0.0
    %876 = vmatpush1.msra.mxu0 0.0
    %877 = vmatprep.subr.mxu0 %v335
    %878 = vmatpush1.msra.mxu0 %v334
    %879 = vmatprep.subr.mxu0 %v331
    %880 = vmatpush1.msra.mxu0 %v330
    %881 = vmatprep.subr.mxu0 %v327
    %882 = vmatpush1.msra.mxu0 %v326
    %883 = vmatprep.subr.mxu0 %v323
    %884 = vmatpush1.msra.mxu0 %v322
    %885 = vmatprep.subr.mxu0 0.0
    %886 = vmatpush2.msra.mxu0 0.0
    %887 = vmatprep.subr.mxu0 0.0
    %888 = vmatpush2.msra.mxu0 0.0
    %889 = vmatprep.subr.mxu0 0.0
    %890 = vmatpush2.msra.mxu0 0.0
    %891 = vmatprep.subr.mxu0 0.0
    %892 = vmatpush2.msra.mxu0 0.0
    %893 = vmatprep.subr.mxu0 0.0
    %894 = vmatpush2.msra.mxu0 0.0
    %895 = vmatprep.subr.mxu0 0.0
    %896 = vmatpush2.msra.mxu0 0.0
    %897 = vmatprep.subr.mxu0 0.0
    %898 = vmatpush2.msra.mxu0 0.0
    %899 = vmatprep.subr.mxu0 0.0
    %900 = vmatpush2.msra.mxu0 0.0
    %901 = vmatprep.subr.mxu0 0.0
    %902 = vmatpush2.msra.mxu0 0.0
    %903 = vmatprep.subr.mxu0 0.0
    %904 = vmatpush2.msra.mxu0 0.0
    %905 = vmatprep.subr.mxu0 0.0
    %906 = vmatpush2.msra.mxu0 0.0
    %907 = vmatprep.subr.mxu0 0.0
    %908 = vmatpush2.msra.mxu0 0.0
    %909 = vmatprep.subr.mxu0 0.0
    %910 = vmatpush2.msra.mxu0 0.0
    %911 = vmatprep.subr.mxu0 0.0
    %912 = vmatpush2.msra.mxu0 0.0
    %913 = vmatprep.subr.mxu0 0.0
    %914 = vmatpush2.msra.mxu0 0.0
    %915 = vmatprep.subr.mxu0 0.0
    %916 = vmatpush2.msra.mxu0 0.0
    %917 = vmatprep.mubr.f32.mxu0 0.0
    %918 = vmatmul.mubr.f32.gmra.mxu0 %v756
    %v919 = vpop.f32.mrf.mxu0
    %v920 = vadd.f32 0.0, %v919
    %v921 = vpop.f32.mrf.mxu0
    %v922 = vadd.f32 0.0, %v921
    %923 = vmatprep.mubr.f32.mxu0 0.0
    %924 = vmatmul.mubr.f32.gmra.mxu0 %v758
    %v925 = vpop.f32.mrf.mxu0
    %v926 = vadd.f32 0.0, %v925
    %v927 = vpop.f32.mrf.mxu0
    %v928 = vadd.f32 0.0, %v927
    %929 = vmatprep.mubr.f32.mxu0 0.0
    %930 = vmatmul.mubr.f32.gmra.mxu0 %v760
    %v931 = vpop.f32.mrf.mxu0
    %v932 = vadd.f32 0.0, %v931
    %v933 = vpop.f32.mrf.mxu0
    %v934 = vadd.f32 0.0, %v933
    %935 = vmatprep.mubr.f32.mxu0 0.0
    %936 = vmatmul.mubr.f32.gmra.mxu0 %v762
    %v937 = vpop.f32.mrf.mxu0
    %v938 = vadd.f32 0.0, %v937
    %v939 = vpop.f32.mrf.mxu0
    %v940 = vadd.f32 0.0, %v939
    %941 = vdwg.mxu0
    %v942 = vadd.f32 %v634, %v831
    %v943 = vadd.f32 %v636, %v833
    %v944 = vadd.f32 %v723, %v920
    %v945 = vadd.f32 %v725, %v922
    %v946 = vadd.f32 %v640, %v837
    %v947 = vadd.f32 %v642, %v839
    %v948 = vadd.f32 %v729, %v926
    %v949 = vadd.f32 %v731, %v928
    %v950 = vadd.f32 %v646, %v843
    %v951 = vadd.f32 %v648, %v845
    %v952 = vadd.f32 %v735, %v932
    %v953 = vadd.f32 %v737, %v934
    %v954 = vadd.f32 %v652, %v849
    %v955 = vadd.f32 %v654, %v851
    %v956 = vadd.f32 %v741, %v938
    %v957 = vadd.f32 %v743, %v940
    %v959 = vlaneseq
    %v960 = vshrl.u32 %v959, 7
    %v961 = vsub.s32 0, %v960
    %v962 = vrot.slane %v336, %v961
    %v963 = vlaneseq
    %v964 = vshrl.u32 %v963, 7
    %v965 = vsub.s32 1, %v964
    %v966 = vrot.slane %v336, %v965
    %v967 = vlaneseq
    %v968 = vshrl.u32 %v967, 7
    %v969 = vsub.s32 2, %v968
    %v970 = vrot.slane %v336, %v969
    %v971 = vlaneseq
    %v972 = vshrl.u32 %v971, 7
    %v973 = vsub.s32 3, %v972
    %v974 = vrot.slane %v336, %v973
    %v979 = vmul.f32 %v942, %v962
    %v980 = vmul.f32 %v943, %v966
    %v981 = vmul.f32 %v944, %v970
    %v982 = vmul.f32 %v945, %v974
    %v983 = vmul.f32 %v946, %v962
    %v984 = vmul.f32 %v947, %v966
    %v985 = vmul.f32 %v948, %v970
    %v986 = vmul.f32 %v949, %v974
    %v987 = vmul.f32 %v950, %v962
    %v988 = vmul.f32 %v951, %v966
    %v989 = vmul.f32 %v952, %v970
    %v990 = vmul.f32 %v953, %v974
    %v991 = vmul.f32 %v954, %v962
    %v992 = vmul.f32 %v955, %v966
    %v993 = vmul.f32 %v956, %v970
    %v994 = vmul.f32 %v957, %v974
    %v996 = vlaneseq
    %v997 = vshrl.u32 %v996, 7
    %v998 = vsub.s32 0, %v997
    %v999 = vrot.slane %v337, %v998
    %v1000 = vlaneseq
    %v1001 = vshrl.u32 %v1000, 7
    %v1002 = vsub.s32 1, %v1001
    %v1003 = vrot.slane %v337, %v1002
    %v1004 = vlaneseq
    %v1005 = vshrl.u32 %v1004, 7
    %v1006 = vsub.s32 2, %v1005
    %v1007 = vrot.slane %v337, %v1006
    %v1008 = vlaneseq
    %v1009 = vshrl.u32 %v1008, 7
    %v1010 = vsub.s32 3, %v1009
    %v1011 = vrot.slane %v337, %v1010
    %v1016 = vadd.f32 %v979, %v999
    %v1017 = vadd.f32 %v980, %v1003
    %v1018 = vadd.f32 %v981, %v1007
    %v1019 = vadd.f32 %v982, %v1011
    %v1020 = vadd.f32 %v983, %v999
    %v1021 = vadd.f32 %v984, %v1003
    %v1022 = vadd.f32 %v985, %v1007
    %v1023 = vadd.f32 %v986, %v1011
    %v1024 = vadd.f32 %v987, %v999
    %v1025 = vadd.f32 %v988, %v1003
    %v1026 = vadd.f32 %v989, %v1007
    %v1027 = vadd.f32 %v990, %v1011
    %v1028 = vadd.f32 %v991, %v999
    %v1029 = vadd.f32 %v992, %v1003
    %v1030 = vadd.f32 %v993, %v1007
    %v1031 = vadd.f32 %v994, %v1011
    %v1032 = vmax.f32 %v1016, 0.0
    %v1033 = vmax.f32 %v1017, 0.0
    %v1034 = vmax.f32 %v1018, 0.0
    %v1035 = vmax.f32 %v1019, 0.0
    %v1036 = vmax.f32 %v1020, 0.0
    %v1037 = vmax.f32 %v1021, 0.0
    %v1038 = vmax.f32 %v1022, 0.0
    %v1039 = vmax.f32 %v1023, 0.0
    %v1040 = vmax.f32 %v1024, 0.0
    %v1041 = vmax.f32 %v1025, 0.0
    %v1042 = vmax.f32 %v1026, 0.0
    %v1043 = vmax.f32 %v1027, 0.0
    %v1044 = vmax.f32 %v1028, 0.0
    %v1045 = vmax.f32 %v1029, 0.0
    %v1046 = vmax.f32 %v1030, 0.0
    %v1047 = vmax.f32 %v1031, 0.0
    %vm1048 = vcmask 1041408
    %v1049 = vsel %vm1048, %v1032, -inf
    %v1050 = vrot.slane %v1049, 4
    %v1051 = vmax.f32 %v1049, %v1050
    %v1052 = vrot.slane %v1051, 2
    %v1053 = vmax.f32 %v1051, %v1052
    %v1054 = vrot.slane %v1053, 1
    %v1055 = vmax.f32 %v1053, %v1054
    %v1056 = vsel %vm1048, %v1033, -inf
    %v1057 = vrot.slane %v1056, 4
    %v1058 = vmax.f32 %v1056, %v1057
    %v1059 = vrot.slane %v1058, 2
    %v1060 = vmax.f32 %v1058, %v1059
    %v1061 = vrot.slane %v1060, 1
    %v1062 = vmax.f32 %v1060, %v1061
    %v1063 = vsel %vm1048, %v1034, -inf
    %v1064 = vrot.slane %v1063, 4
    %v1065 = vmax.f32 %v1063, %v1064
    %v1066 = vrot.slane %v1065, 2
    %v1067 = vmax.f32 %v1065, %v1066
    %v1068 = vrot.slane %v1067, 1
    %v1069 = vmax.f32 %v1067, %v1068
    %v1070 = vsel %vm1048, %v1035, -inf
    %v1071 = vrot.slane %v1070, 4
    %v1072 = vmax.f32 %v1070, %v1071
    %v1073 = vrot.slane %v1072, 2
    %v1074 = vmax.f32 %v1072, %v1073
    %v1075 = vrot.slane %v1074, 1
    %v1076 = vmax.f32 %v1074, %v1075
    %v1077 = vsel %vm1048, %v1040, -inf
    %v1078 = vrot.slane %v1077, 4
    %v1079 = vmax.f32 %v1077, %v1078
    %v1080 = vrot.slane %v1079, 2
    %v1081 = vmax.f32 %v1079, %v1080
    %v1082 = vrot.slane %v1081, 1
    %v1083 = vmax.f32 %v1081, %v1082
    %v1084 = vsel %vm1048, %v1041, -inf
    %v1085 = vrot.slane %v1084, 4
    %v1086 = vmax.f32 %v1084, %v1085
    %v1087 = vrot.slane %v1086, 2
    %v1088 = vmax.f32 %v1086, %v1087
    %v1089 = vrot.slane %v1088, 1
    %v1090 = vmax.f32 %v1088, %v1089
    %v1091 = vsel %vm1048, %v1042, -inf
    %v1092 = vrot.slane %v1091, 4
    %v1093 = vmax.f32 %v1091, %v1092
    %v1094 = vrot.slane %v1093, 2
    %v1095 = vmax.f32 %v1093, %v1094
    %v1096 = vrot.slane %v1095, 1
    %v1097 = vmax.f32 %v1095, %v1096
    %v1098 = vsel %vm1048, %v1043, -inf
    %v1099 = vrot.slane %v1098, 4
    %v1100 = vmax.f32 %v1098, %v1099
    %v1101 = vrot.slane %v1100, 2
    %v1102 = vmax.f32 %v1100, %v1101
    %v1103 = vrot.slane %v1102, 1
    %v1104 = vmax.f32 %v1102, %v1103
    %vm1105 = vcmask 1043458
    %v1106 = vsel %vm1105, %v1032, -inf
    %v1107 = vrot.slane %v1106, 4
    %v1108 = vmax.f32 %v1106, %v1107
    %v1109 = vrot.slane %v1108, 2
    %v1110 = vmax.f32 %v1108, %v1109
    %v1111 = vrot.slane %v1110, 1
    %v1112 = vmax.f32 %v1110, %v1111
    %v1113 = vsel %vm1105, %v1033, -inf
    %v1114 = vrot.slane %v1113, 4
    %v1115 = vmax.f32 %v1113, %v1114
    %v1116 = vrot.slane %v1115, 2
    %v1117 = vmax.f32 %v1115, %v1116
    %v1118 = vrot.slane %v1117, 1
    %v1119 = vmax.f32 %v1117, %v1118
    %v1120 = vsel %vm1105, %v1034, -inf
    %v1121 = vrot.slane %v1120, 4
    %v1122 = vmax.f32 %v1120, %v1121
    %v1123 = vrot.slane %v1122, 2
    %v1124 = vmax.f32 %v1122, %v1123
    %v1125 = vrot.slane %v1124, 1
    %v1126 = vmax.f32 %v1124, %v1125
    %v1127 = vsel %vm1105, %v1035, -inf
    %v1128 = vrot.slane %v1127, 4
    %v1129 = vmax.f32 %v1127, %v1128
    %v1130 = vrot.slane %v1129, 2
    %v1131 = vmax.f32 %v1129, %v1130
    %v1132 = vrot.slane %v1131, 1
    %v1133 = vmax.f32 %v1131, %v1132
    %v1134 = vsel %vm1105, %v1040, -inf
    %v1135 = vrot.slane %v1134, 4
    %v1136 = vmax.f32 %v1134, %v1135
    %v1137 = vrot.slane %v1136, 2
    %v1138 = vmax.f32 %v1136, %v1137
    %v1139 = vrot.slane %v1138, 1
    %v1140 = vmax.f32 %v1138, %v1139
    %v1141 = vsel %vm1105, %v1041, -inf
    %v1142 = vrot.slane %v1141, 4
    %v1143 = vmax.f32 %v1141, %v1142
    %v1144 = vrot.slane %v1143, 2
    %v1145 = vmax.f32 %v1143, %v1144
    %v1146 = vrot.slane %v1145, 1
    %v1147 = vmax.f32 %v1145, %v1146
    %v1148 = vsel %vm1105, %v1042, -inf
    %v1149 = vrot.slane %v1148, 4
    %v1150 = vmax.f32 %v1148, %v1149
    %v1151 = vrot.slane %v1150, 2
    %v1152 = vmax.f32 %v1150, %v1151
    %v1153 = vrot.slane %v1152, 1
    %v1154 = vmax.f32 %v1152, %v1153
    %v1155 = vsel %vm1105, %v1043, -inf
    %v1156 = vrot.slane %v1155, 4
    %v1157 = vmax.f32 %v1155, %v1156
    %v1158 = vrot.slane %v1157, 2
    %v1159 = vmax.f32 %v1157, %v1158
    %v1160 = vrot.slane %v1159, 1
    %v1161 = vmax.f32 %v1159, %v1160
    %vm1162 = vcmask 1045508
    %v1163 = vsel %vm1162, %v1032, -inf
    %v1164 = vrot.slane %v1163, 4
    %v1165 = vmax.f32 %v1163, %v1164
    %v1166 = vrot.slane %v1165, 2
    %v1167 = vmax.f32 %v1165, %v1166
    %v1168 = vrot.slane %v1167, 1
    %v1169 = vmax.f32 %v1167, %v1168
    %v1170 = vsel %vm1162, %v1033, -inf
    %v1171 = vrot.slane %v1170, 4
    %v1172 = vmax.f32 %v1170, %v1171
    %v1173 = vrot.slane %v1172, 2
    %v1174 = vmax.f32 %v1172, %v1173
    %v1175 = vrot.slane %v1174, 1
    %v1176 = vmax.f32 %v1174, %v1175
    %v1177 = vsel %vm1162, %v1034, -inf
    %v1178 = vrot.slane %v1177, 4
    %v1179 = vmax.f32 %v1177, %v1178
    %v1180 = vrot.slane %v1179, 2
    %v1181 = vmax.f32 %v1179, %v1180
    %v1182 = vrot.slane %v1181, 1
    %v1183 = vmax.f32 %v1181, %v1182
    %v1184 = vsel %vm1162, %v1035, -inf
    %v1185 = vrot.slane %v1184, 4
    %v1186 = vmax.f32 %v1184, %v1185
    %v1187 = vrot.slane %v1186, 2
    %v1188 = vmax.f32 %v1186, %v1187
    %v1189 = vrot.slane %v1188, 1
    %v1190 = vmax.f32 %v1188, %v1189
    %v1191 = vsel %vm1162, %v1040, -inf
    %v1192 = vrot.slane %v1191, 4
    %v1193 = vmax.f32 %v1191, %v1192
    %v1194 = vrot.slane %v1193, 2
    %v1195 = vmax.f32 %v1193, %v1194
    %v1196 = vrot.slane %v1195, 1
    %v1197 = vmax.f32 %v1195, %v1196
    %v1198 = vsel %vm1162, %v1041, -inf
    %v1199 = vrot.slane %v1198, 4
    %v1200 = vmax.f32 %v1198, %v1199
    %v1201 = vrot.slane %v1200, 2
    %v1202 = vmax.f32 %v1200, %v1201
    %v1203 = vrot.slane %v1202, 1
    %v1204 = vmax.f32 %v1202, %v1203
    %v1205 = vsel %vm1162, %v1042, -inf
    %v1206 = vrot.slane %v1205, 4
    %v1207 = vmax.f32 %v1205, %v1206
    %v1208 = vrot.slane %v1207, 2
    %v1209 = vmax.f32 %v1207, %v1208
    %v1210 = vrot.slane %v1209, 1
    %v1211 = vmax.f32 %v1209, %v1210
    %v1212 = vsel %vm1162, %v1043, -inf
    %v1213 = vrot.slane %v1212, 4
    %v1214 = vmax.f32 %v1212, %v1213
    %v1215 = vrot.slane %v1214, 2
    %v1216 = vmax.f32 %v1214, %v1215
    %v1217 = vrot.slane %v1216, 1
    %v1218 = vmax.f32 %v1216, %v1217
    %vm1219 = vcmask 1047558
    %v1220 = vsel %vm1219, %v1032, -inf
    %v1221 = vrot.slane %v1220, 4
    %v1222 = vmax.f32 %v1220, %v1221
    %v1223 = vrot.slane %v1222, 2
    %v1224 = vmax.f32 %v1222, %v1223
    %v1225 = vrot.slane %v1224, 1
    %v1226 = vmax.f32 %v1224, %v1225
    %v1227 = vsel %vm1219, %v1033, -inf
    %v1228 = vrot.slane %v1227, 4
    %v1229 = vmax.f32 %v1227, %v1228
    %v1230 = vrot.slane %v1229, 2
    %v1231 = vmax.f32 %v1229, %v1230
    %v1232 = vrot.slane %v1231, 1
    %v1233 = vmax.f32 %v1231, %v1232
    %v1234 = vsel %vm1219, %v1034, -inf
    %v1235 = vrot.slane %v1234, 4
    %v1236 = vmax.f32 %v1234, %v1235
    %v1237 = vrot.slane %v1236, 2
    %v1238 = vmax.f32 %v1236, %v1237
    %v1239 = vrot.slane %v1238, 1
    %v1240 = vmax.f32 %v1238, %v1239
    %v1241 = vsel %vm1219, %v1035, -inf
    %v1242 = vrot.slane %v1241, 4
    %v1243 = vmax.f32 %v1241, %v1242
    %v1244 = vrot.slane %v1243, 2
    %v1245 = vmax.f32 %v1243, %v1244
    %v1246 = vrot.slane %v1245, 1
    %v1247 = vmax.f32 %v1245, %v1246
    %v1248 = vsel %vm1219, %v1040, -inf
    %v1249 = vrot.slane %v1248, 4
    %v1250 = vmax.f32 %v1248, %v1249
    %v1251 = vrot.slane %v1250, 2
    %v1252 = vmax.f32 %v1250, %v1251
    %v1253 = vrot.slane %v1252, 1
    %v1254 = vmax.f32 %v1252, %v1253
    %v1255 = vsel %vm1219, %v1041, -inf
    %v1256 = vrot.slane %v1255, 4
    %v1257 = vmax.f32 %v1255, %v1256
    %v1258 = vrot.slane %v1257, 2
    %v1259 = vmax.f32 %v1257, %v1258
    %v1260 = vrot.slane %v1259, 1
    %v1261 = vmax.f32 %v1259, %v1260
    %v1262 = vsel %vm1219, %v1042, -inf
    %v1263 = vrot.slane %v1262, 4
    %v1264 = vmax.f32 %v1262, %v1263
    %v1265 = vrot.slane %v1264, 2
    %v1266 = vmax.f32 %v1264, %v1265
    %v1267 = vrot.slane %v1266, 1
    %v1268 = vmax.f32 %v1266, %v1267
    %v1269 = vsel %vm1219, %v1043, -inf
    %v1270 = vrot.slane %v1269, 4
    %v1271 = vmax.f32 %v1269, %v1270
    %v1272 = vrot.slane %v1271, 2
    %v1273 = vmax.f32 %v1271, %v1272
    %v1274 = vrot.slane %v1273, 1
    %v1275 = vmax.f32 %v1273, %v1274
    %v1276 = vsel %vm1048, %v1036, -inf
    %v1277 = vrot.slane %v1276, 4
    %v1278 = vmax.f32 %v1276, %v1277
    %v1279 = vrot.slane %v1278, 2
    %v1280 = vmax.f32 %v1278, %v1279
    %v1281 = vrot.slane %v1280, 1
    %v1282 = vmax.f32 %v1280, %v1281
    %v1283 = vsel %vm1048, %v1037, -inf
    %v1284 = vrot.slane %v1283, 4
    %v1285 = vmax.f32 %v1283, %v1284
    %v1286 = vrot.slane %v1285, 2
    %v1287 = vmax.f32 %v1285, %v1286
    %v1288 = vrot.slane %v1287, 1
    %v1289 = vmax.f32 %v1287, %v1288
    %v1290 = vsel %vm1048, %v1038, -inf
    %v1291 = vrot.slane %v1290, 4
    %v1292 = vmax.f32 %v1290, %v1291
    %v1293 = vrot.slane %v1292, 2
    %v1294 = vmax.f32 %v1292, %v1293
    %v1295 = vrot.slane %v1294, 1
    %v1296 = vmax.f32 %v1294, %v1295
    %v1297 = vsel %vm1048, %v1039, -inf
    %v1298 = vrot.slane %v1297, 4
    %v1299 = vmax.f32 %v1297, %v1298
    %v1300 = vrot.slane %v1299, 2
    %v1301 = vmax.f32 %v1299, %v1300
    %v1302 = vrot.slane %v1301, 1
    %v1303 = vmax.f32 %v1301, %v1302
    %v1304 = vsel %vm1048, %v1044, -inf
    %v1305 = vrot.slane %v1304, 4
    %v1306 = vmax.f32 %v1304, %v1305
    %v1307 = vrot.slane %v1306, 2
    %v1308 = vmax.f32 %v1306, %v1307
    %v1309 = vrot.slane %v1308, 1
    %v1310 = vmax.f32 %v1308, %v1309
    %v1311 = vsel %vm1048, %v1045, -inf
    %v1312 = vrot.slane %v1311, 4
    %v1313 = vmax.f32 %v1311, %v1312
    %v1314 = vrot.slane %v1313, 2
    %v1315 = vmax.f32 %v1313, %v1314
    %v1316 = vrot.slane %v1315, 1
    %v1317 = vmax.f32 %v1315, %v1316
    %v1318 = vsel %vm1048, %v1046, -inf
    %v1319 = vrot.slane %v1318, 4
    %v1320 = vmax.f32 %v1318, %v1319
    %v1321 = vrot.slane %v1320, 2
    %v1322 = vmax.f32 %v1320, %v1321
    %v1323 = vrot.slane %v1322, 1
    %v1324 = vmax.f32 %v1322, %v1323
    %v1325 = vsel %vm1048, %v1047, -inf
    %v1326 = vrot.slane %v1325, 4
    %v1327 = vmax.f32 %v1325, %v1326
    %v1328 = vrot.slane %v1327, 2
    %v1329 = vmax.f32 %v1327, %v1328
    %v1330 = vrot.slane %v1329, 1
    %v1331 = vmax.f32 %v1329, %v1330
    %v1332 = vsel %vm1105, %v1036, -inf
    %v1333 = vrot.slane %v1332, 4
    %v1334 = vmax.f32 %v1332, %v1333
    %v1335 = vrot.slane %v1334, 2
    %v1336 = vmax.f32 %v1334, %v1335
    %v1337 = vrot.slane %v1336, 1
    %v1338 = vmax.f32 %v1336, %v1337
    %v1339 = vsel %vm1105, %v1037, -inf
    %v1340 = vrot.slane %v1339, 4
    %v1341 = vmax.f32 %v1339, %v1340
    %v1342 = vrot.slane %v1341, 2
    %v1343 = vmax.f32 %v1341, %v1342
    %v1344 = vrot.slane %v1343, 1
    %v1345 = vmax.f32 %v1343, %v1344
    %v1346 = vsel %vm1105, %v1038, -inf
    %v1347 = vrot.slane %v1346, 4
    %v1348 = vmax.f32 %v1346, %v1347
    %v1349 = vrot.slane %v1348, 2
    %v1350 = vmax.f32 %v1348, %v1349
    %v1351 = vrot.slane %v1350, 1
    %v1352 = vmax.f32 %v1350, %v1351
    %v1353 = vsel %vm1105, %v1039, -inf
    %v1354 = vrot.slane %v1353, 4
    %v1355 = vmax.f32 %v1353, %v1354
    %v1356 = vrot.slane %v1355, 2
    %v1357 = vmax.f32 %v1355, %v1356
    %v1358 = vrot.slane %v1357, 1
    %v1359 = vmax.f32 %v1357, %v1358
    %v1360 = vsel %vm1105, %v1044, -inf
    %v1361 = vrot.slane %v1360, 4
    %v1362 = vmax.f32 %v1360, %v1361
    %v1363 = vrot.slane %v1362, 2
    %v1364 = vmax.f32 %v1362, %v1363
    %v1365 = vrot.slane %v1364, 1
    %v1366 = vmax.f32 %v1364, %v1365
    %v1367 = vsel %vm1105, %v1045, -inf
    %v1368 = vrot.slane %v1367, 4
    %v1369 = vmax.f32 %v1367, %v1368
    %v1370 = vrot.slane %v1369, 2
    %v1371 = vmax.f32 %v1369, %v1370
    %v1372 = vrot.slane %v1371, 1
    %v1373 = vmax.f32 %v1371, %v1372
    %v1374 = vsel %vm1105, %v1046, -inf
    %v1375 = vrot.slane %v1374, 4
    %v1376 = vmax.f32 %v1374, %v1375
    %v1377 = vrot.slane %v1376, 2
    %v1378 = vmax.f32 %v1376, %v1377
    %v1379 = vrot.slane %v1378, 1
    %v1380 = vmax.f32 %v1378, %v1379
    %v1381 = vsel %vm1105, %v1047, -inf
    %v1382 = vrot.slane %v1381, 4
    %v1383 = vmax.f32 %v1381, %v1382
    %v1384 = vrot.slane %v1383, 2
    %v1385 = vmax.f32 %v1383, %v1384
    %v1386 = vrot.slane %v1385, 1
    %v1387 = vmax.f32 %v1385, %v1386
    %v1388 = vsel %vm1162, %v1036, -inf
    %v1389 = vrot.slane %v1388, 4
    %v1390 = vmax.f32 %v1388, %v1389
    %v1391 = vrot.slane %v1390, 2
    %v1392 = vmax.f32 %v1390, %v1391
    %v1393 = vrot.slane %v1392, 1
    %v1394 = vmax.f32 %v1392, %v1393
    %v1395 = vsel %vm1162, %v1037, -inf
    %v1396 = vrot.slane %v1395, 4
    %v1397 = vmax.f32 %v1395, %v1396
    %v1398 = vrot.slane %v1397, 2
    %v1399 = vmax.f32 %v1397, %v1398
    %v1400 = vrot.slane %v1399, 1
    %v1401 = vmax.f32 %v1399, %v1400
    %v1402 = vsel %vm1162, %v1038, -inf
    %v1403 = vrot.slane %v1402, 4
    %v1404 = vmax.f32 %v1402, %v1403
    %v1405 = vrot.slane %v1404, 2
    %v1406 = vmax.f32 %v1404, %v1405
    %v1407 = vrot.slane %v1406, 1
    %v1408 = vmax.f32 %v1406, %v1407
    %v1409 = vsel %vm1162, %v1039, -inf
    %v1410 = vrot.slane %v1409, 4
    %v1411 = vmax.f32 %v1409, %v1410
    %v1412 = vrot.slane %v1411, 2
    %v1413 = vmax.f32 %v1411, %v1412
    %v1414 = vrot.slane %v1413, 1
    %v1415 = vmax.f32 %v1413, %v1414
    %v1416 = vsel %vm1162, %v1044, -inf
    %v1417 = vrot.slane %v1416, 4
    %v1418 = vmax.f32 %v1416, %v1417
    %v1419 = vrot.slane %v1418, 2
    %v1420 = vmax.f32 %v1418, %v1419
    %v1421 = vrot.slane %v1420, 1
    %v1422 = vmax.f32 %v1420, %v1421
    %v1423 = vsel %vm1162, %v1045, -inf
    %v1424 = vrot.slane %v1423, 4
    %v1425 = vmax.f32 %v1423, %v1424
    %v1426 = vrot.slane %v1425, 2
    %v1427 = vmax.f32 %v1425, %v1426
    %v1428 = vrot.slane %v1427, 1
    %v1429 = vmax.f32 %v1427, %v1428
    %v1430 = vsel %vm1162, %v1046, -inf
    %v1431 = vrot.slane %v1430, 4
    %v1432 = vmax.f32 %v1430, %v1431
    %v1433 = vrot.slane %v1432, 2
    %v1434 = vmax.f32 %v1432, %v1433
    %v1435 = vrot.slane %v1434, 1
    %v1436 = vmax.f32 %v1434, %v1435
    %v1437 = vsel %vm1162, %v1047, -inf
    %v1438 = vrot.slane %v1437, 4
    %v1439 = vmax.f32 %v1437, %v1438
    %v1440 = vrot.slane %v1439, 2
    %v1441 = vmax.f32 %v1439, %v1440
    %v1442 = vrot.slane %v1441, 1
    %v1443 = vmax.f32 %v1441, %v1442
    %v1444 = vsel %vm1219, %v1036, -inf
    %v1445 = vrot.slane %v1444, 4
    %v1446 = vmax.f32 %v1444, %v1445
    %v1447 = vrot.slane %v1446, 2
    %v1448 = vmax.f32 %v1446, %v1447
    %v1449 = vrot.slane %v1448, 1
    %v1450 = vmax.f32 %v1448, %v1449
    %v1451 = vsel %vm1219, %v1037, -inf
    %v1452 = vrot.slane %v1451, 4
    %v1453 = vmax.f32 %v1451, %v1452
    %v1454 = vrot.slane %v1453, 2
    %v1455 = vmax.f32 %v1453, %v1454
    %v1456 = vrot.slane %v1455, 1
    %v1457 = vmax.f32 %v1455, %v1456
    %v1458 = vsel %vm1219, %v1038, -inf
    %v1459 = vrot.slane %v1458, 4
    %v1460 = vmax.f32 %v1458, %v1459
    %v1461 = vrot.slane %v1460, 2
    %v1462 = vmax.f32 %v1460, %v1461
    %v1463 = vrot.slane %v1462, 1
    %v1464 = vmax.f32 %v1462, %v1463
    %v1465 = vsel %vm1219, %v1039, -inf
    %v1466 = vrot.slane %v1465, 4
    %v1467 = vmax.f32 %v1465, %v1466
    %v1468 = vrot.slane %v1467, 2
    %v1469 = vmax.f32 %v1467, %v1468
    %v1470 = vrot.slane %v1469, 1
    %v1471 = vmax.f32 %v1469, %v1470
    %v1472 = vsel %vm1219, %v1044, -inf
    %v1473 = vrot.slane %v1472, 4
    %v1474 = vmax.f32 %v1472, %v1473
    %v1475 = vrot.slane %v1474, 2
    %v1476 = vmax.f32 %v1474, %v1475
    %v1477 = vrot.slane %v1476, 1
    %v1478 = vmax.f32 %v1476, %v1477
    %v1479 = vsel %vm1219, %v1045, -inf
    %v1480 = vrot.slane %v1479, 4
    %v1481 = vmax.f32 %v1479, %v1480
    %v1482 = vrot.slane %v1481, 2
    %v1483 = vmax.f32 %v1481, %v1482
    %v1484 = vrot.slane %v1483, 1
    %v1485 = vmax.f32 %v1483, %v1484
    %v1486 = vsel %vm1219, %v1046, -inf
    %v1487 = vrot.slane %v1486, 4
    %v1488 = vmax.f32 %v1486, %v1487
    %v1489 = vrot.slane %v1488, 2
    %v1490 = vmax.f32 %v1488, %v1489
    %v1491 = vrot.slane %v1490, 1
    %v1492 = vmax.f32 %v1490, %v1491
    %v1493 = vsel %vm1219, %v1047, -inf
    %v1494 = vrot.slane %v1493, 4
    %v1495 = vmax.f32 %v1493, %v1494
    %v1496 = vrot.slane %v1495, 2
    %v1497 = vmax.f32 %v1495, %v1496
    %v1498 = vrot.slane %v1497, 1
    %v1499 = vmax.f32 %v1497, %v1498
    %v1500 = vsel %vm342, %v1055, %v1112
    %v1501 = vsel %vm342, %v1062, %v1119
    %v1502 = vsel %vm342, %v1069, %v1126
    %v1503 = vsel %vm342, %v1076, %v1133
    %v1504 = vsel %vm342, %v1083, %v1140
    %v1505 = vsel %vm342, %v1090, %v1147
    %v1506 = vsel %vm342, %v1097, %v1154
    %v1507 = vsel %vm342, %v1104, %v1161
    %v1508 = vsel %vm1048, %v1500, %v1169
    %v1509 = vsel %vm1048, %v1501, %v1176
    %v1510 = vsel %vm1048, %v1502, %v1183
    %v1511 = vsel %vm1048, %v1503, %v1190
    %v1512 = vsel %vm1048, %v1504, %v1197
    %v1513 = vsel %vm1048, %v1505, %v1204
    %v1514 = vsel %vm1048, %v1506, %v1211
    %v1515 = vsel %vm1048, %v1507, %v1218
    %vm1516 = vcmask 1042432
    %v1517 = vsel %vm1516, %v1508, %v1226
    %v1518 = vsel %vm1516, %v1509, %v1233
    %v1519 = vsel %vm1516, %v1510, %v1240
    %v1520 = vsel %vm1516, %v1511, %v1247
    %v1521 = vsel %vm1516, %v1512, %v1254
    %v1522 = vsel %vm1516, %v1513, %v1261
    %v1523 = vsel %vm1516, %v1514, %v1268
    %v1524 = vsel %vm1516, %v1515, %v1275
    %vm1525 = vcmask 1043456
    %v1526 = vsel %vm1525, %v1517, %v1282
    %v1527 = vsel %vm1525, %v1518, %v1289
    %v1528 = vsel %vm1525, %v1519, %v1296
    %v1529 = vsel %vm1525, %v1520, %v1303
    %v1530 = vsel %vm1525, %v1521, %v1310
    %v1531 = vsel %vm1525, %v1522, %v1317
    %v1532 = vsel %vm1525, %v1523, %v1324
    %v1533 = vsel %vm1525, %v1524, %v1331
    %vm1534 = vcmask 1044480
    %v1535 = vsel %vm1534, %v1526, %v1338
    %v1536 = vsel %vm1534, %v1527, %v1345
    %v1537 = vsel %vm1534, %v1528, %v1352
    %v1538 = vsel %vm1534, %v1529, %v1359
    %v1539 = vsel %vm1534, %v1530, %v1366
    %v1540 = vsel %vm1534, %v1531, %v1373
    %v1541 = vsel %vm1534, %v1532, %v1380
    %v1542 = vsel %vm1534, %v1533, %v1387
    %v1543 = vsel %vm745, %v1535, %v1394
    %v1544 = vsel %vm745, %v1536, %v1401
    %v1545 = vsel %vm745, %v1537, %v1408
    %v1546 = vsel %vm745, %v1538, %v1415
    %v1547 = vsel %vm745, %v1539, %v1422
    %v1548 = vsel %vm745, %v1540, %v1429
    %v1549 = vsel %vm745, %v1541, %v1436
    %v1550 = vsel %vm745, %v1542, %v1443
    %v1551 = vsel %vm361, %v1543, %v1450
    %v1552 = vsel %vm361, %v1544, %v1457
    %v1553 = vsel %vm361, %v1545, %v1464
    %v1554 = vsel %vm361, %v1546, %v1471
    %v1555 = vsel %vm361, %v1547, %v1478
    %v1556 = vsel %vm361, %v1548, %v1485
    %v1557 = vsel %vm361, %v1549, %v1492
    %v1558 = vsel %vm361, %v1550, %v1499
    %v1559 = vld [vmem:[#allocation10] sm:$0xff]
    %v1560 = vld [vmem:[#allocation10 + $0x8] sm:$0xff]
    %v1561 = vld [vmem:[#allocation10 + $0x10] sm:$0xff]
    %v1562 = vld [vmem:[#allocation10 + $0x18] sm:$0xff]
    %v1563 = vld [vmem:[#allocation10 + $0x20] sm:$0xff]
    %v1564 = vld [vmem:[#allocation10 + $0x28] sm:$0xff]
    %v1565 = vld [vmem:[#allocation10 + $0x30] sm:$0xff]
    %v1566 = vld [vmem:[#allocation10 + $0x38] sm:$0xff]
    %v1567 = vld [vmem:[#allocation10 + $0x40] sm:$0xff]
    %v1568 = vld [vmem:[#allocation10 + $0x48] sm:$0xff]
    %v1569 = vld [vmem:[#allocation10 + $0x50] sm:$0xff]
    %v1570 = vld [vmem:[#allocation10 + $0x58] sm:$0xff]
    %v1571 = vld [vmem:[#allocation10 + $0x60] sm:$0xff]
    %v1572 = vld [vmem:[#allocation10 + $0x68] sm:$0xff]
    %v1573 = vld [vmem:[#allocation10 + $0x70] sm:$0xff]
    %v1574 = vld [vmem:[#allocation10 + $0x78] sm:$0xff]
    %v1575 = vld [vmem:[#allocation10 + $0x80] sm:$0xff]
    %v1576 = vld [vmem:[#allocation10 + $0x88] sm:$0xff]
    %v1577 = vld [vmem:[#allocation10 + $0x90] sm:$0xff]
    %v1578 = vld [vmem:[#allocation10 + $0x98] sm:$0xff]
    %v1579 = vld [vmem:[#allocation10 + $0xa0] sm:$0xff]
    %v1580 = vld [vmem:[#allocation10 + $0xa8] sm:$0xff]
    %v1581 = vld [vmem:[#allocation10 + $0xb0] sm:$0xff]
    %v1582 = vld [vmem:[#allocation10 + $0xb8] sm:$0xff]
    %v1583 = vld [vmem:[#allocation10 + $0xc0] sm:$0xff]
    %v1584 = vld [vmem:[#allocation10 + $0xc8] sm:$0xff]
    %v1585 = vld [vmem:[#allocation10 + $0xd0] sm:$0xff]
    %v1586 = vld [vmem:[#allocation10 + $0xd8] sm:$0xff]
    %v1587 = vld [vmem:[#allocation10 + $0xe0] sm:$0xff]
    %v1588 = vld [vmem:[#allocation10 + $0xe8] sm:$0xff]
    %v1589 = vld [vmem:[#allocation10 + $0xf0] sm:$0xff]
    %v1590 = vld [vmem:[#allocation10 + $0xf8] sm:$0xff]
    %v1591 = vld [vmem:[#allocation10 + $0x100] sm:$0xff]
    %v1592 = vld [vmem:[#allocation10 + $0x108] sm:$0xff]
    %v1593 = vld [vmem:[#allocation10 + $0x110] sm:$0xff]
    %v1594 = vld [vmem:[#allocation10 + $0x118] sm:$0xff]
    %v1595 = vld [vmem:[#allocation10 + $0x120] sm:$0xff]
    %v1596 = vld [vmem:[#allocation10 + $0x128] sm:$0xff]
    %v1597 = vld [vmem:[#allocation10 + $0x130] sm:$0xff]
    %v1598 = vld [vmem:[#allocation10 + $0x138] sm:$0xff]
    %v1599 = vld [vmem:[#allocation10 + $0x140] sm:$0xff]
    %v1600 = vld [vmem:[#allocation10 + $0x148] sm:$0xff]
    %v1601 = vld [vmem:[#allocation10 + $0x150] sm:$0xff]
    %v1602 = vld [vmem:[#allocation10 + $0x158] sm:$0xff]
    %v1603 = vld [vmem:[#allocation10 + $0x160] sm:$0xff]
    %v1604 = vld [vmem:[#allocation10 + $0x168] sm:$0xff]
    %v1605 = vld [vmem:[#allocation10 + $0x170] sm:$0xff]
    %v1606 = vld [vmem:[#allocation10 + $0x178] sm:$0xff]
    %v1607 = vld [vmem:[#allocation10 + $0x180] sm:$0xff]
    %v1608 = vld [vmem:[#allocation10 + $0x188] sm:$0xff]
    %v1609 = vld [vmem:[#allocation10 + $0x190] sm:$0xff]
    %v1610 = vld [vmem:[#allocation10 + $0x198] sm:$0xff]
    %v1611 = vld [vmem:[#allocation10 + $0x1a0] sm:$0xff]
    %v1612 = vld [vmem:[#allocation10 + $0x1a8] sm:$0xff]
    %v1613 = vld [vmem:[#allocation10 + $0x1b0] sm:$0xff]
    %v1614 = vld [vmem:[#allocation10 + $0x1b8] sm:$0xff]
    %v1615 = vld [vmem:[#allocation10 + $0x1c0] sm:$0xff]
    %v1616 = vld [vmem:[#allocation10 + $0x1c8] sm:$0xff]
    %v1617 = vld [vmem:[#allocation10 + $0x1d0] sm:$0xff]
    %v1618 = vld [vmem:[#allocation10 + $0x1d8] sm:$0xff]
    %v1619 = vld [vmem:[#allocation10 + $0x1e0] sm:$0xff]
    %v1620 = vld [vmem:[#allocation10 + $0x1e8] sm:$0xff]
    %v1621 = vld [vmem:[#allocation10 + $0x1f0] sm:$0xff]
    %v1622 = vld [vmem:[#allocation10 + $0x1f8] sm:$0xff]
    %v1623 = vld [vmem:[#allocation10 + $0x200] sm:$0xff]
    %v1624 = vld [vmem:[#allocation10 + $0x208] sm:$0xff]
    %v1625 = vld [vmem:[#allocation10 + $0x210] sm:$0xff]
    %v1626 = vld [vmem:[#allocation10 + $0x218] sm:$0xff]
    %v1627 = vld [vmem:[#allocation10 + $0x220] sm:$0xff]
    %v1628 = vld [vmem:[#allocation10 + $0x228] sm:$0xff]
    %v1629 = vld [vmem:[#allocation10 + $0x230] sm:$0xff]
    %v1630 = vld [vmem:[#allocation10 + $0x238] sm:$0xff]
    %v1631 = vld [vmem:[#allocation10 + $0x240] sm:$0xff]
    %v1632 = vld [vmem:[#allocation10 + $0x248] sm:$0xff]
    %v1633 = vld [vmem:[#allocation10 + $0x250] sm:$0xff]
    %v1634 = vld [vmem:[#allocation10 + $0x258] sm:$0xff]
    %v1635 = vld [vmem:[#allocation10 + $0x260] sm:$0xff]
    %v1636 = vld [vmem:[#allocation10 + $0x268] sm:$0xff]
    %v1637 = vld [vmem:[#allocation10 + $0x270] sm:$0xff]
    %v1638 = vld [vmem:[#allocation10 + $0x278] sm:$0xff]
    %v1639 = vld [vmem:[#allocation10 + $0x280] sm:$0xff]
    %v1640 = vld [vmem:[#allocation10 + $0x288] sm:$0xff]
    %v1641 = vld [vmem:[#allocation10 + $0x290] sm:$0xff]
    %v1642 = vld [vmem:[#allocation10 + $0x298] sm:$0xff]
    %v1643 = vld [vmem:[#allocation10 + $0x2a0] sm:$0xff]
    %v1644 = vld [vmem:[#allocation10 + $0x2a8] sm:$0xff]
    %v1645 = vld [vmem:[#allocation10 + $0x2b0] sm:$0xff]
    %v1646 = vld [vmem:[#allocation10 + $0x2b8] sm:$0xff]
    %v1647 = vld [vmem:[#allocation10 + $0x2c0] sm:$0xff]
    %v1648 = vld [vmem:[#allocation10 + $0x2c8] sm:$0xff]
    %v1649 = vld [vmem:[#allocation10 + $0x2d0] sm:$0xff]
    %v1650 = vld [vmem:[#allocation10 + $0x2d8] sm:$0xff]
    %v1651 = vld [vmem:[#allocation10 + $0x2e0] sm:$0xff]
    %v1652 = vld [vmem:[#allocation10 + $0x2e8] sm:$0xff]
    %v1653 = vld [vmem:[#allocation10 + $0x2f0] sm:$0xff]
    %v1654 = vld [vmem:[#allocation10 + $0x2f8] sm:$0xff]
    %v1655 = vld [vmem:[#allocation10 + $0x300] sm:$0xff]
    %v1656 = vld [vmem:[#allocation10 + $0x308] sm:$0xff]
    %v1657 = vld [vmem:[#allocation10 + $0x310] sm:$0xff]
    %v1658 = vld [vmem:[#allocation10 + $0x318] sm:$0xff]
    %v1659 = vld [vmem:[#allocation10 + $0x320] sm:$0xff]
    %v1660 = vld [vmem:[#allocation10 + $0x328] sm:$0xff]
    %v1661 = vld [vmem:[#allocation10 + $0x330] sm:$0xff]
    %v1662 = vld [vmem:[#allocation10 + $0x338] sm:$0xff]
    %v1663 = vld [vmem:[#allocation10 + $0x340] sm:$0xff]
    %v1664 = vld [vmem:[#allocation10 + $0x348] sm:$0xff]
    %v1665 = vld [vmem:[#allocation10 + $0x350] sm:$0xff]
    %v1666 = vld [vmem:[#allocation10 + $0x358] sm:$0xff]
    %v1667 = vld [vmem:[#allocation10 + $0x360] sm:$0xff]
    %v1668 = vld [vmem:[#allocation10 + $0x368] sm:$0xff]
    %v1669 = vld [vmem:[#allocation10 + $0x370] sm:$0xff]
    %v1670 = vld [vmem:[#allocation10 + $0x378] sm:$0xff]
    %v1671 = vld [vmem:[#allocation10 + $0x380] sm:$0xff]
    %v1672 = vld [vmem:[#allocation10 + $0x388] sm:$0xff]
    %v1673 = vld [vmem:[#allocation10 + $0x390] sm:$0xff]
    %v1674 = vld [vmem:[#allocation10 + $0x398] sm:$0xff]
    %v1675 = vld [vmem:[#allocation10 + $0x3a0] sm:$0xff]
    %v1676 = vld [vmem:[#allocation10 + $0x3a8] sm:$0xff]
    %v1677 = vld [vmem:[#allocation10 + $0x3b0] sm:$0xff]
    %v1678 = vld [vmem:[#allocation10 + $0x3b8] sm:$0xff]
    %v1679 = vld [vmem:[#allocation10 + $0x3c0] sm:$0xff]
    %v1680 = vld [vmem:[#allocation10 + $0x3c8] sm:$0xff]
    %v1681 = vld [vmem:[#allocation10 + $0x3d0] sm:$0xff]
    %v1682 = vld [vmem:[#allocation10 + $0x3d8] sm:$0xff]
    %v1683 = vld [vmem:[#allocation10 + $0x3e0] sm:$0xff]
    %v1684 = vld [vmem:[#allocation10 + $0x3e8] sm:$0xff]
    %v1685 = vld [vmem:[#allocation10 + $0x3f0] sm:$0xff]
    %v1686 = vld [vmem:[#allocation10 + $0x3f8] sm:$0xff]
    %v1687 = vld [vmem:[#allocation10 + $0x400] sm:$0xff]
    %v1688 = vld [vmem:[#allocation10 + $0x408] sm:$0xff]
    %v1689 = vld [vmem:[#allocation10 + $0x410] sm:$0xff]
    %v1690 = vld [vmem:[#allocation10 + $0x418] sm:$0xff]
    %v1691 = vld [vmem:[#allocation10 + $0x420] sm:$0xff]
    %v1692 = vld [vmem:[#allocation10 + $0x428] sm:$0xff]
    %v1693 = vld [vmem:[#allocation10 + $0x430] sm:$0xff]
    %v1694 = vld [vmem:[#allocation10 + $0x438] sm:$0xff]
    %v1695 = vld [vmem:[#allocation10 + $0x440] sm:$0xff]
    %v1696 = vld [vmem:[#allocation10 + $0x448] sm:$0xff]
    %v1697 = vld [vmem:[#allocation10 + $0x450] sm:$0xff]
    %v1698 = vld [vmem:[#allocation10 + $0x458] sm:$0xff]
    %v1699 = vld [vmem:[#allocation10 + $0x460] sm:$0xff]
    %v1700 = vld [vmem:[#allocation10 + $0x468] sm:$0xff]
    %v1701 = vld [vmem:[#allocation10 + $0x470] sm:$0xff]
    %v1702 = vld [vmem:[#allocation10 + $0x478] sm:$0xff]
    %v1703 = vld [vmem:[#allocation10 + $0x480] sm:$0xff]
    %v1704 = vld [vmem:[#allocation10 + $0x488] sm:$0xff]
    %v1705 = vld [vmem:[#allocation10 + $0x490] sm:$0xff]
    %v1706 = vld [vmem:[#allocation10 + $0x498] sm:$0xff]
    %v1707 = vld [vmem:[#allocation10 + $0x4a0] sm:$0xff]
    %v1708 = vld [vmem:[#allocation10 + $0x4a8] sm:$0xff]
    %v1709 = vld [vmem:[#allocation10 + $0x4b0] sm:$0xff]
    %v1710 = vld [vmem:[#allocation10 + $0x4b8] sm:$0xff]
    %v1711 = vld [vmem:[#allocation10 + $0x4c0] sm:$0xff]
    %v1712 = vld [vmem:[#allocation10 + $0x4c8] sm:$0xff]
    %v1713 = vld [vmem:[#allocation10 + $0x4d0] sm:$0xff]
    %v1714 = vld [vmem:[#allocation10 + $0x4d8] sm:$0xff]
    %v1715 = vld [vmem:[#allocation10 + $0x4e0] sm:$0xff]
    %v1716 = vld [vmem:[#allocation10 + $0x4e8] sm:$0xff]
    %v1717 = vld [vmem:[#allocation10 + $0x4f0] sm:$0xff]
    %v1718 = vld [vmem:[#allocation10 + $0x4f8] sm:$0xff]
    %v1719 = vld [vmem:[#allocation10 + $0x500] sm:$0xff]
    %v1720 = vld [vmem:[#allocation10 + $0x508] sm:$0xff]
    %v1721 = vld [vmem:[#allocation10 + $0x510] sm:$0xff]
    %v1722 = vld [vmem:[#allocation10 + $0x518] sm:$0xff]
    %v1723 = vld [vmem:[#allocation10 + $0x520] sm:$0xff]
    %v1724 = vld [vmem:[#allocation10 + $0x528] sm:$0xff]
    %v1725 = vld [vmem:[#allocation10 + $0x530] sm:$0xff]
    %v1726 = vld [vmem:[#allocation10 + $0x538] sm:$0xff]
    %v1727 = vld [vmem:[#allocation10 + $0x540] sm:$0xff]
    %v1728 = vld [vmem:[#allocation10 + $0x548] sm:$0xff]
    %v1729 = vld [vmem:[#allocation10 + $0x550] sm:$0xff]
    %v1730 = vld [vmem:[#allocation10 + $0x558] sm:$0xff]
    %v1731 = vld [vmem:[#allocation10 + $0x560] sm:$0xff]
    %v1732 = vld [vmem:[#allocation10 + $0x568] sm:$0xff]
    %v1733 = vld [vmem:[#allocation10 + $0x570] sm:$0xff]
    %v1734 = vld [vmem:[#allocation10 + $0x578] sm:$0xff]
    %v1735 = vld [vmem:[#allocation10 + $0x580] sm:$0xff]
    %v1736 = vld [vmem:[#allocation10 + $0x588] sm:$0xff]
    %v1737 = vld [vmem:[#allocation10 + $0x590] sm:$0xff]
    %v1738 = vld [vmem:[#allocation10 + $0x598] sm:$0xff]
    %v1739 = vld [vmem:[#allocation10 + $0x5a0] sm:$0xff]
    %v1740 = vld [vmem:[#allocation10 + $0x5a8] sm:$0xff]
    %v1741 = vld [vmem:[#allocation10 + $0x5b0] sm:$0xff]
    %v1742 = vld [vmem:[#allocation10 + $0x5b8] sm:$0xff]
    %v1743 = vld [vmem:[#allocation10 + $0x5c0] sm:$0xff]
    %v1744 = vld [vmem:[#allocation10 + $0x5c8] sm:$0xff]
    %v1745 = vld [vmem:[#allocation10 + $0x5d0] sm:$0xff]
    %v1746 = vld [vmem:[#allocation10 + $0x5d8] sm:$0xff]
    %v1747 = vld [vmem:[#allocation10 + $0x5e0] sm:$0xff]
    %v1748 = vld [vmem:[#allocation10 + $0x5e8] sm:$0xff]
    %v1749 = vld [vmem:[#allocation10 + $0x5f0] sm:$0xff]
    %v1750 = vld [vmem:[#allocation10 + $0x5f8] sm:$0xff]
    %v1751 = vld [vmem:[#allocation10 + $0x600] sm:$0xff]
    %v1752 = vld [vmem:[#allocation10 + $0x608] sm:$0xff]
    %v1753 = vld [vmem:[#allocation10 + $0x610] sm:$0xff]
    %v1754 = vld [vmem:[#allocation10 + $0x618] sm:$0xff]
    %v1755 = vld [vmem:[#allocation10 + $0x620] sm:$0xff]
    %v1756 = vld [vmem:[#allocation10 + $0x628] sm:$0xff]
    %v1757 = vld [vmem:[#allocation10 + $0x630] sm:$0xff]
    %v1758 = vld [vmem:[#allocation10 + $0x638] sm:$0xff]
    %v1759 = vld [vmem:[#allocation10 + $0x640] sm:$0xff]
    %v1760 = vld [vmem:[#allocation10 + $0x648] sm:$0xff]
    %v1761 = vld [vmem:[#allocation10 + $0x650] sm:$0xff]
    %v1762 = vld [vmem:[#allocation10 + $0x658] sm:$0xff]
    %v1763 = vld [vmem:[#allocation10 + $0x660] sm:$0xff]
    %v1764 = vld [vmem:[#allocation10 + $0x668] sm:$0xff]
    %v1765 = vld [vmem:[#allocation10 + $0x670] sm:$0xff]
    %v1766 = vld [vmem:[#allocation10 + $0x678] sm:$0xff]
    %v1767 = vld [vmem:[#allocation10 + $0x680] sm:$0xff]
    %v1768 = vld [vmem:[#allocation10 + $0x688] sm:$0xff]
    %v1769 = vld [vmem:[#allocation10 + $0x690] sm:$0xff]
    %v1770 = vld [vmem:[#allocation10 + $0x698] sm:$0xff]
    %v1771 = vld [vmem:[#allocation10 + $0x6a0] sm:$0xff]
    %v1772 = vld [vmem:[#allocation10 + $0x6a8] sm:$0xff]
    %v1773 = vld [vmem:[#allocation10 + $0x6b0] sm:$0xff]
    %v1774 = vld [vmem:[#allocation10 + $0x6b8] sm:$0xff]
    %v1775 = vld [vmem:[#allocation10 + $0x6c0] sm:$0xff]
    %v1776 = vld [vmem:[#allocation10 + $0x6c8] sm:$0xff]
    %v1777 = vld [vmem:[#allocation10 + $0x6d0] sm:$0xff]
    %v1778 = vld [vmem:[#allocation10 + $0x6d8] sm:$0xff]
    %v1779 = vld [vmem:[#allocation10 + $0x6e0] sm:$0xff]
    %v1780 = vld [vmem:[#allocation10 + $0x6e8] sm:$0xff]
    %v1781 = vld [vmem:[#allocation10 + $0x6f0] sm:$0xff]
    %v1782 = vld [vmem:[#allocation10 + $0x6f8] sm:$0xff]
    %v1783 = vld [vmem:[#allocation10 + $0x700] sm:$0xff]
    %v1784 = vld [vmem:[#allocation10 + $0x708] sm:$0xff]
    %v1785 = vld [vmem:[#allocation10 + $0x710] sm:$0xff]
    %v1786 = vld [vmem:[#allocation10 + $0x718] sm:$0xff]
    %v1787 = vld [vmem:[#allocation10 + $0x720] sm:$0xff]
    %v1788 = vld [vmem:[#allocation10 + $0x728] sm:$0xff]
    %v1789 = vld [vmem:[#allocation10 + $0x730] sm:$0xff]
    %v1790 = vld [vmem:[#allocation10 + $0x738] sm:$0xff]
    %v1791 = vld [vmem:[#allocation10 + $0x740] sm:$0xff]
    %v1792 = vld [vmem:[#allocation10 + $0x748] sm:$0xff]
    %v1793 = vld [vmem:[#allocation10 + $0x750] sm:$0xff]
    %v1794 = vld [vmem:[#allocation10 + $0x758] sm:$0xff]
    %v1795 = vld [vmem:[#allocation10 + $0x760] sm:$0xff]
    %v1796 = vld [vmem:[#allocation10 + $0x768] sm:$0xff]
    %v1797 = vld [vmem:[#allocation10 + $0x770] sm:$0xff]
    %v1798 = vld [vmem:[#allocation10 + $0x778] sm:$0xff]
    %v1799 = vld [vmem:[#allocation10 + $0x780] sm:$0xff]
    %v1800 = vld [vmem:[#allocation10 + $0x788] sm:$0xff]
    %v1801 = vld [vmem:[#allocation10 + $0x790] sm:$0xff]
    %v1802 = vld [vmem:[#allocation10 + $0x798] sm:$0xff]
    %v1803 = vld [vmem:[#allocation10 + $0x7a0] sm:$0xff]
    %v1804 = vld [vmem:[#allocation10 + $0x7a8] sm:$0xff]
    %v1805 = vld [vmem:[#allocation10 + $0x7b0] sm:$0xff]
    %v1806 = vld [vmem:[#allocation10 + $0x7b8] sm:$0xff]
    %v1807 = vld [vmem:[#allocation10 + $0x7c0] sm:$0xff]
    %v1808 = vld [vmem:[#allocation10 + $0x7c8] sm:$0xff]
    %v1809 = vld [vmem:[#allocation10 + $0x7d0] sm:$0xff]
    %v1810 = vld [vmem:[#allocation10 + $0x7d8] sm:$0xff]
    %v1811 = vld [vmem:[#allocation10 + $0x7e0] sm:$0xff]
    %v1812 = vld [vmem:[#allocation10 + $0x7e8] sm:$0xff]
    %v1813 = vld [vmem:[#allocation10 + $0x7f0] sm:$0xff]
    %v1814 = vld [vmem:[#allocation10 + $0x7f8] sm:$0xff]
    %v1815 = vld [vmem:[#allocation10 + $0x800] sm:$0xff]
    %v1816 = vld [vmem:[#allocation10 + $0x808] sm:$0xff]
    %v1817 = vld [vmem:[#allocation10 + $0x810] sm:$0xff]
    %v1818 = vld [vmem:[#allocation10 + $0x818] sm:$0xff]
    %v1819 = vld [vmem:[#allocation10 + $0x820] sm:$0xff]
    %v1820 = vld [vmem:[#allocation10 + $0x828] sm:$0xff]
    %v1821 = vld [vmem:[#allocation10 + $0x830] sm:$0xff]
    %v1822 = vld [vmem:[#allocation10 + $0x838] sm:$0xff]
    %v1823 = vld [vmem:[#allocation10 + $0x840] sm:$0xff]
    %v1824 = vld [vmem:[#allocation10 + $0x848] sm:$0xff]
    %v1825 = vld [vmem:[#allocation10 + $0x850] sm:$0xff]
    %v1826 = vld [vmem:[#allocation10 + $0x858] sm:$0xff]
    %v1827 = vld [vmem:[#allocation10 + $0x860] sm:$0xff]
    %v1828 = vld [vmem:[#allocation10 + $0x868] sm:$0xff]
    %v1829 = vld [vmem:[#allocation10 + $0x870] sm:$0xff]
    %v1830 = vld [vmem:[#allocation10 + $0x878] sm:$0xff]
    %v1831 = vld [vmem:[#allocation10 + $0x880] sm:$0xff]
    %v1832 = vld [vmem:[#allocation10 + $0x888] sm:$0xff]
    %v1833 = vld [vmem:[#allocation10 + $0x890] sm:$0xff]
    %v1834 = vld [vmem:[#allocation10 + $0x898] sm:$0xff]
    %v1835 = vld [vmem:[#allocation10 + $0x8a0] sm:$0xff]
    %v1836 = vld [vmem:[#allocation10 + $0x8a8] sm:$0xff]
    %v1837 = vld [vmem:[#allocation10 + $0x8b0] sm:$0xff]
    %v1838 = vld [vmem:[#allocation10 + $0x8b8] sm:$0xff]
    %v1839 = vld [vmem:[#allocation10 + $0x8c0] sm:$0xff]
    %v1840 = vld [vmem:[#allocation10 + $0x8c8] sm:$0xff]
    %v1841 = vld [vmem:[#allocation10 + $0x8d0] sm:$0xff]
    %v1842 = vld [vmem:[#allocation10 + $0x8d8] sm:$0xff]
    %v1843 = vld [vmem:[#allocation10 + $0x8e0] sm:$0xff]
    %v1844 = vld [vmem:[#allocation10 + $0x8e8] sm:$0xff]
    %v1845 = vld [vmem:[#allocation10 + $0x8f0] sm:$0xff]
    %v1846 = vld [vmem:[#allocation10 + $0x8f8] sm:$0xff]
    %v1847 = vld [vmem:[#allocation10 + $0x900] sm:$0xff]
    %v1848 = vld [vmem:[#allocation10 + $0x908] sm:$0xff]
    %v1849 = vld [vmem:[#allocation10 + $0x910] sm:$0xff]
    %v1850 = vld [vmem:[#allocation10 + $0x918] sm:$0xff]
    %v1851 = vld [vmem:[#allocation10 + $0x920] sm:$0xff]
    %v1852 = vld [vmem:[#allocation10 + $0x928] sm:$0xff]
    %v1853 = vld [vmem:[#allocation10 + $0x930] sm:$0xff]
    %v1854 = vld [vmem:[#allocation10 + $0x938] sm:$0xff]
    %v1855 = vld [vmem:[#allocation10 + $0x940] sm:$0xff]
    %v1856 = vld [vmem:[#allocation10 + $0x948] sm:$0xff]
    %v1857 = vld [vmem:[#allocation10 + $0x950] sm:$0xff]
    %v1858 = vld [vmem:[#allocation10 + $0x958] sm:$0xff]
    %v1859 = vld [vmem:[#allocation10 + $0x960] sm:$0xff]
    %v1860 = vld [vmem:[#allocation10 + $0x968] sm:$0xff]
    %v1861 = vld [vmem:[#allocation10 + $0x970] sm:$0xff]
    %v1862 = vld [vmem:[#allocation10 + $0x978] sm:$0xff]
    %v1863 = vld [vmem:[#allocation10 + $0x980] sm:$0xff]
    %v1864 = vld [vmem:[#allocation10 + $0x988] sm:$0xff]
    %v1865 = vld [vmem:[#allocation10 + $0x990] sm:$0xff]
    %v1866 = vld [vmem:[#allocation10 + $0x998] sm:$0xff]
    %v1867 = vld [vmem:[#allocation10 + $0x9a0] sm:$0xff]
    %v1868 = vld [vmem:[#allocation10 + $0x9a8] sm:$0xff]
    %v1869 = vld [vmem:[#allocation10 + $0x9b0] sm:$0xff]
    %v1870 = vld [vmem:[#allocation10 + $0x9b8] sm:$0xff]
    %v1871 = vld [vmem:[#allocation10 + $0x9c0] sm:$0xff]
    %v1872 = vld [vmem:[#allocation10 + $0x9c8] sm:$0xff]
    %v1873 = vld [vmem:[#allocation10 + $0x9d0] sm:$0xff]
    %v1874 = vld [vmem:[#allocation10 + $0x9d8] sm:$0xff]
    %v1875 = vld [vmem:[#allocation10 + $0x9e0] sm:$0xff]
    %v1876 = vld [vmem:[#allocation10 + $0x9e8] sm:$0xff]
    %v1877 = vld [vmem:[#allocation10 + $0x9f0] sm:$0xff]
    %v1878 = vld [vmem:[#allocation10 + $0x9f8] sm:$0xff]
    %v1879 = vld [vmem:[#allocation10 + $0xa00] sm:$0xff]
    %v1880 = vld [vmem:[#allocation10 + $0xa08] sm:$0xff]
    %v1881 = vld [vmem:[#allocation10 + $0xa10] sm:$0xff]
    %v1882 = vld [vmem:[#allocation10 + $0xa18] sm:$0xff]
    %v1883 = vld [vmem:[#allocation10 + $0xa20] sm:$0xff]
    %v1884 = vld [vmem:[#allocation10 + $0xa28] sm:$0xff]
    %v1885 = vld [vmem:[#allocation10 + $0xa30] sm:$0xff]
    %v1886 = vld [vmem:[#allocation10 + $0xa38] sm:$0xff]
    %v1887 = vld [vmem:[#allocation10 + $0xa40] sm:$0xff]
    %v1888 = vld [vmem:[#allocation10 + $0xa48] sm:$0xff]
    %v1889 = vld [vmem:[#allocation10 + $0xa50] sm:$0xff]
    %v1890 = vld [vmem:[#allocation10 + $0xa58] sm:$0xff]
    %v1891 = vld [vmem:[#allocation10 + $0xa60] sm:$0xff]
    %v1892 = vld [vmem:[#allocation10 + $0xa68] sm:$0xff]
    %v1893 = vld [vmem:[#allocation10 + $0xa70] sm:$0xff]
    %v1894 = vld [vmem:[#allocation10 + $0xa78] sm:$0xff]
    %v1895 = vld [vmem:[#allocation10 + $0xa80] sm:$0xff]
    %v1896 = vld [vmem:[#allocation10 + $0xa88] sm:$0xff]
    %v1897 = vld [vmem:[#allocation10 + $0xa90] sm:$0xff]
    %v1898 = vld [vmem:[#allocation10 + $0xa98] sm:$0xff]
    %v1899 = vld [vmem:[#allocation10 + $0xaa0] sm:$0xff]
    %v1900 = vld [vmem:[#allocation10 + $0xaa8] sm:$0xff]
    %v1901 = vld [vmem:[#allocation10 + $0xab0] sm:$0xff]
    %v1902 = vld [vmem:[#allocation10 + $0xab8] sm:$0xff]
    %v1903 = vld [vmem:[#allocation10 + $0xac0] sm:$0xff]
    %v1904 = vld [vmem:[#allocation10 + $0xac8] sm:$0xff]
    %v1905 = vld [vmem:[#allocation10 + $0xad0] sm:$0xff]
    %v1906 = vld [vmem:[#allocation10 + $0xad8] sm:$0xff]
    %v1907 = vld [vmem:[#allocation10 + $0xae0] sm:$0xff]
    %v1908 = vld [vmem:[#allocation10 + $0xae8] sm:$0xff]
    %v1909 = vld [vmem:[#allocation10 + $0xaf0] sm:$0xff]
    %v1910 = vld [vmem:[#allocation10 + $0xaf8] sm:$0xff]
    %v1911 = vld [vmem:[#allocation10 + $0xb00] sm:$0xff]
    %v1912 = vld [vmem:[#allocation10 + $0xb08] sm:$0xff]
    %v1913 = vld [vmem:[#allocation10 + $0xb10] sm:$0xff]
    %v1914 = vld [vmem:[#allocation10 + $0xb18] sm:$0xff]
    %v1915 = vld [vmem:[#allocation10 + $0xb20] sm:$0xff]
    %v1916 = vld [vmem:[#allocation10 + $0xb28] sm:$0xff]
    %v1917 = vld [vmem:[#allocation10 + $0xb30] sm:$0xff]
    %v1918 = vld [vmem:[#allocation10 + $0xb38] sm:$0xff]
    %v1919 = vld [vmem:[#allocation10 + $0xb40] sm:$0xff]
    %v1920 = vld [vmem:[#allocation10 + $0xb48] sm:$0xff]
    %v1921 = vld [vmem:[#allocation10 + $0xb50] sm:$0xff]
    %v1922 = vld [vmem:[#allocation10 + $0xb58] sm:$0xff]
    %v1923 = vld [vmem:[#allocation10 + $0xb60] sm:$0xff]
    %v1924 = vld [vmem:[#allocation10 + $0xb68] sm:$0xff]
    %v1925 = vld [vmem:[#allocation10 + $0xb70] sm:$0xff]
    %v1926 = vld [vmem:[#allocation10 + $0xb78] sm:$0xff]
    %v1927 = vld [vmem:[#allocation10 + $0xb80] sm:$0xff]
    %v1928 = vld [vmem:[#allocation10 + $0xb88] sm:$0xff]
    %v1929 = vld [vmem:[#allocation10 + $0xb90] sm:$0xff]
    %v1930 = vld [vmem:[#allocation10 + $0xb98] sm:$0xff]
    %v1931 = vld [vmem:[#allocation10 + $0xba0] sm:$0xff]
    %v1932 = vld [vmem:[#allocation10 + $0xba8] sm:$0xff]
    %v1933 = vld [vmem:[#allocation10 + $0xbb0] sm:$0xff]
    %v1934 = vld [vmem:[#allocation10 + $0xbb8] sm:$0xff]
    %v1935 = vld [vmem:[#allocation10 + $0xbc0] sm:$0xff]
    %v1936 = vld [vmem:[#allocation10 + $0xbc8] sm:$0xff]
    %v1937 = vld [vmem:[#allocation10 + $0xbd0] sm:$0xff]
    %v1938 = vld [vmem:[#allocation10 + $0xbd8] sm:$0xff]
    %v1939 = vld [vmem:[#allocation10 + $0xbe0] sm:$0xff]
    %v1940 = vld [vmem:[#allocation10 + $0xbe8] sm:$0xff]
    %v1941 = vld [vmem:[#allocation10 + $0xbf0] sm:$0xff]
    %v1942 = vld [vmem:[#allocation10 + $0xbf8] sm:$0xff]
    %v1943 = vld [vmem:[#allocation11] sm:$0x3]
    %v1944 = vld [vmem:[#allocation13] sm:$0x3]
    %v1953 = vrot.slane %v1551, 7
    %v1954 = vrot.slane %v1552, 7
    %v1955 = vrot.slane %v1553, 7
    %v1956 = vrot.slane %v1554, 7
    %v1957 = vrot.slane %v1555, 7
    %v1958 = vrot.slane %v1556, 7
    %v1959 = vrot.slane %v1557, 7
    %v1960 = vrot.slane %v1558, 7
    %v1969 = vsel %vm342, 0.0, %v1953
    %v1970 = vsel %vm342, 0.0, %v1954
    %v1971 = vsel %vm342, 0.0, %v1955
    %v1972 = vsel %vm342, 0.0, %v1956
    %v1973 = vsel %vm342, 0.0, %v1957
    %v1974 = vsel %vm342, 0.0, %v1958
    %v1975 = vsel %vm342, 0.0, %v1959
    %v1976 = vsel %vm342, 0.0, %v1960
    %v1977 = vsel %vm342, %v1953, 0.0
    %v1978 = vsel %vm342, %v1954, 0.0
    %v1979 = vsel %vm342, %v1955, 0.0
    %v1980 = vsel %vm342, %v1956, 0.0
    %v1981 = vsel %vm342, %v1957, 0.0
    %v1982 = vsel %vm342, %v1958, 0.0
    %v1983 = vsel %vm342, %v1959, 0.0
    %v1984 = vsel %vm342, %v1960, 0.0
    %v2001 = vrot.slane %v1969, 1
    %v2002 = vrot.slane %v1977, 1
    %v2003 = vsel %vm361, %v2001, %v2002
    %v2004 = vrot.slane %v1970, 1
    %v2005 = vrot.slane %v1978, 1
    %v2006 = vsel %vm361, %v2004, %v2005
    %v2007 = vrot.slane %v1971, 1
    %v2008 = vrot.slane %v1979, 1
    %v2009 = vsel %vm361, %v2007, %v2008
    %v2010 = vrot.slane %v1972, 1
    %v2011 = vrot.slane %v1980, 1
    %v2012 = vsel %vm361, %v2010, %v2011
    %v2013 = vrot.slane %v1973, 1
    %v2014 = vrot.slane %v1981, 1
    %v2015 = vsel %vm361, %v2013, %v2014
    %v2016 = vrot.slane %v1974, 1
    %v2017 = vrot.slane %v1982, 1
    %v2018 = vsel %vm361, %v2016, %v2017
    %v2019 = vrot.slane %v1975, 1
    %v2020 = vrot.slane %v1983, 1
    %v2021 = vsel %vm361, %v2019, %v2020
    %v2022 = vrot.slane %v1976, 1
    %v2023 = vrot.slane %v1984, 1
    %v2024 = vsel %vm361, %v2022, %v2023
    %v2033 = vrot.slane %v1969, 2
    %v2034 = vrot.slane %v1977, 2
    %v2035 = vsel %vm745, %v2033, %v2034
    %v2036 = vrot.slane %v1970, 2
    %v2037 = vrot.slane %v1978, 2
    %v2038 = vsel %vm745, %v2036, %v2037
    %v2039 = vrot.slane %v1971, 2
    %v2040 = vrot.slane %v1979, 2
    %v2041 = vsel %vm745, %v2039, %v2040
    %v2042 = vrot.slane %v1972, 2
    %v2043 = vrot.slane %v1980, 2
    %v2044 = vsel %vm745, %v2042, %v2043
    %v2045 = vrot.slane %v1973, 2
    %v2046 = vrot.slane %v1981, 2
    %v2047 = vsel %vm745, %v2045, %v2046
    %v2048 = vrot.slane %v1974, 2
    %v2049 = vrot.slane %v1982, 2
    %v2050 = vsel %vm745, %v2048, %v2049
    %v2051 = vrot.slane %v1975, 2
    %v2052 = vrot.slane %v1983, 2
    %v2053 = vsel %vm745, %v2051, %v2052
    %v2054 = vrot.slane %v1976, 2
    %v2055 = vrot.slane %v1984, 2
    %v2056 = vsel %vm745, %v2054, %v2055
    %2065 = vmatprep.subr.mxu0 %v1590
    %2066 = vmatpush1.msra.mxu0 %v1589
    %2067 = vmatprep.subr.mxu0 %v1588
    %2068 = vmatpush1.msra.mxu0 %v1587
    %2069 = vmatprep.subr.mxu0 %v1586
    %2070 = vmatpush1.msra.mxu0 %v1585
    %2071 = vmatprep.subr.mxu0 %v1584
    %2072 = vmatpush1.msra.mxu0 %v1583
    %2073 = vmatprep.subr.mxu0 %v1582
    %2074 = vmatpush1.msra.mxu0 %v1581
    %2075 = vmatprep.subr.mxu0 %v1580
    %2076 = vmatpush1.msra.mxu0 %v1579
    %2077 = vmatprep.subr.mxu0 %v1578
    %2078 = vmatpush1.msra.mxu0 %v1577
    %2079 = vmatprep.subr.mxu0 %v1576
    %2080 = vmatpush1.msra.mxu0 %v1575
    %2081 = vmatprep.subr.mxu0 %v1574
    %2082 = vmatpush1.msra.mxu0 %v1573
    %2083 = vmatprep.subr.mxu0 %v1572
    %2084 = vmatpush1.msra.mxu0 %v1571
    %2085 = vmatprep.subr.mxu0 %v1570
    %2086 = vmatpush1.msra.mxu0 %v1569
    %2087 = vmatprep.subr.mxu0 %v1568
    %2088 = vmatpush1.msra.mxu0 %v1567
    %2089 = vmatprep.subr.mxu0 %v1566
    %2090 = vmatpush1.msra.mxu0 %v1565
    %2091 = vmatprep.subr.mxu0 %v1564
    %2092 = vmatpush1.msra.mxu0 %v1563
    %2093 = vmatprep.subr.mxu0 %v1562
    %2094 = vmatpush1.msra.mxu0 %v1561
    %2095 = vmatprep.subr.mxu0 %v1560
    %2096 = vmatpush1.msra.mxu0 %v1559
    %2097 = vmatprep.subr.mxu0 %v1622
    %2098 = vmatpush2.msra.mxu0 %v1621
    %2099 = vmatprep.subr.mxu0 %v1620
    %2100 = vmatpush2.msra.mxu0 %v1619
    %2101 = vmatprep.subr.mxu0 %v1618
    %2102 = vmatpush2.msra.mxu0 %v1617
    %2103 = vmatprep.subr.mxu0 %v1616
    %2104 = vmatpush2.msra.mxu0 %v1615
    %2105 = vmatprep.subr.mxu0 %v1614
    %2106 = vmatpush2.msra.mxu0 %v1613
    %2107 = vmatprep.subr.mxu0 %v1612
    %2108 = vmatpush2.msra.mxu0 %v1611
    %2109 = vmatprep.subr.mxu0 %v1610
    %2110 = vmatpush2.msra.mxu0 %v1609
    %2111 = vmatprep.subr.mxu0 %v1608
    %2112 = vmatpush2.msra.mxu0 %v1607
    %2113 = vmatprep.subr.mxu0 %v1606
    %2114 = vmatpush2.msra.mxu0 %v1605
    %2115 = vmatprep.subr.mxu0 %v1604
    %2116 = vmatpush2.msra.mxu0 %v1603
    %2117 = vmatprep.subr.mxu0 %v1602
    %2118 = vmatpush2.msra.mxu0 %v1601
    %2119 = vmatprep.subr.mxu0 %v1600
    %2120 = vmatpush2.msra.mxu0 %v1599
    %2121 = vmatprep.subr.mxu0 %v1598
    %2122 = vmatpush2.msra.mxu0 %v1597
    %2123 = vmatprep.subr.mxu0 %v1596
    %2124 = vmatpush2.msra.mxu0 %v1595
    %2125 = vmatprep.subr.mxu0 %v1594
    %2126 = vmatpush2.msra.mxu0 %v1593
    %2127 = vmatprep.subr.mxu0 %v1592
    %2128 = vmatpush2.msra.mxu0 %v1591
    %2129 = vmatprep.mubr.f32.mxu0 %v1970
    %2130 = vmatmul.mubr.f32.gmra.mxu0 %v1969
    %v2131 = vpop.f32.mrf.mxu0
    %v2132 = vadd.f32 0.0, %v2131
    %v2133 = vpop.f32.mrf.mxu0
    %v2134 = vadd.f32 0.0, %v2133
    %2135 = vmatprep.mubr.f32.mxu0 %v1974
    %2136 = vmatmul.mubr.f32.gmra.mxu0 %v1973
    %v2137 = vpop.f32.mrf.mxu0
    %v2138 = vadd.f32 0.0, %v2137
    %v2139 = vpop.f32.mrf.mxu0
    %v2140 = vadd.f32 0.0, %v2139
    %2141 = vdwg.mxu0
    %2142 = vmatprep.subr.mxu0 %v1654
    %2143 = vmatpush1.msra.mxu0 %v1653
    %2144 = vmatprep.subr.mxu0 %v1652
    %2145 = vmatpush1.msra.mxu0 %v1651
    %2146 = vmatprep.subr.mxu0 %v1650
    %2147 = vmatpush1.msra.mxu0 %v1649
    %2148 = vmatprep.subr.mxu0 %v1648
    %2149 = vmatpush1.msra.mxu0 %v1647
    %2150 = vmatprep.subr.mxu0 %v1646
    %2151 = vmatpush1.msra.mxu0 %v1645
    %2152 = vmatprep.subr.mxu0 %v1644
    %2153 = vmatpush1.msra.mxu0 %v1643
    %2154 = vmatprep.subr.mxu0 %v1642
    %2155 = vmatpush1.msra.mxu0 %v1641
    %2156 = vmatprep.subr.mxu0 %v1640
    %2157 = vmatpush1.msra.mxu0 %v1639
    %2158 = vmatprep.subr.mxu0 %v1638
    %2159 = vmatpush1.msra.mxu0 %v1637
    %2160 = vmatprep.subr.mxu0 %v1636
    %2161 = vmatpush1.msra.mxu0 %v1635
    %2162 = vmatprep.subr.mxu0 %v1634
    %2163 = vmatpush1.msra.mxu0 %v1633
    %2164 = vmatprep.subr.mxu0 %v1632
    %2165 = vmatpush1.msra.mxu0 %v1631
    %2166 = vmatprep.subr.mxu0 %v1630
    %2167 = vmatpush1.msra.mxu0 %v1629
    %2168 = vmatprep.subr.mxu0 %v1628
    %2169 = vmatpush1.msra.mxu0 %v1627
    %2170 = vmatprep.subr.mxu0 %v1626
    %2171 = vmatpush1.msra.mxu0 %v1625
    %2172 = vmatprep.subr.mxu0 %v1624
    %2173 = vmatpush1.msra.mxu0 %v1623
    %2174 = vmatprep.subr.mxu0 %v1686
    %2175 = vmatpush2.msra.mxu0 %v1685
    %2176 = vmatprep.subr.mxu0 %v1684
    %2177 = vmatpush2.msra.mxu0 %v1683
    %2178 = vmatprep.subr.mxu0 %v1682
    %2179 = vmatpush2.msra.mxu0 %v1681
    %2180 = vmatprep.subr.mxu0 %v1680
    %2181 = vmatpush2.msra.mxu0 %v1679
    %2182 = vmatprep.subr.mxu0 %v1678
    %2183 = vmatpush2.msra.mxu0 %v1677
    %2184 = vmatprep.subr.mxu0 %v1676
    %2185 = vmatpush2.msra.mxu0 %v1675
    %2186 = vmatprep.subr.mxu0 %v1674
    %2187 = vmatpush2.msra.mxu0 %v1673
    %2188 = vmatprep.subr.mxu0 %v1672
    %2189 = vmatpush2.msra.mxu0 %v1671
    %2190 = vmatprep.subr.mxu0 %v1670
    %2191 = vmatpush2.msra.mxu0 %v1669
    %2192 = vmatprep.subr.mxu0 %v1668
    %2193 = vmatpush2.msra.mxu0 %v1667
    %2194 = vmatprep.subr.mxu0 %v1666
    %2195 = vmatpush2.msra.mxu0 %v1665
    %2196 = vmatprep.subr.mxu0 %v1664
    %2197 = vmatpush2.msra.mxu0 %v1663
    %2198 = vmatprep.subr.mxu0 %v1662
    %2199 = vmatpush2.msra.mxu0 %v1661
    %2200 = vmatprep.subr.mxu0 %v1660
    %2201 = vmatpush2.msra.mxu0 %v1659
    %2202 = vmatprep.subr.mxu0 %v1658
    %2203 = vmatpush2.msra.mxu0 %v1657
    %2204 = vmatprep.subr.mxu0 %v1656
    %2205 = vmatpush2.msra.mxu0 %v1655
    %2206 = vmatprep.mubr.f32.mxu0 %v1972
    %2207 = vmatmul.mubr.f32.gmra.mxu0 %v1971
    %v2208 = vpop.f32.mrf.mxu0
    %v2209 = vadd.f32 %v2132, %v2208
    %v2210 = vpop.f32.mrf.mxu0
    %v2211 = vadd.f32 %v2134, %v2210
    %2212 = vmatprep.mubr.f32.mxu0 %v1976
    %2213 = vmatmul.mubr.f32.gmra.mxu0 %v1975
    %v2214 = vpop.f32.mrf.mxu0
    %v2215 = vadd.f32 %v2138, %v2214
    %v2216 = vpop.f32.mrf.mxu0
    %v2217 = vadd.f32 %v2140, %v2216
    %2218 = vdwg.mxu0
    %2219 = vmatprep.subr.mxu0 %v1718
    %2220 = vmatpush1.msra.mxu0 %v1717
    %2221 = vmatprep.subr.mxu0 %v1716
    %2222 = vmatpush1.msra.mxu0 %v1715
    %2223 = vmatprep.subr.mxu0 %v1714
    %2224 = vmatpush1.msra.mxu0 %v1713
    %2225 = vmatprep.subr.mxu0 %v1712
    %2226 = vmatpush1.msra.mxu0 %v1711
    %2227 = vmatprep.subr.mxu0 %v1710
    %2228 = vmatpush1.msra.mxu0 %v1709
    %2229 = vmatprep.subr.mxu0 %v1708
    %2230 = vmatpush1.msra.mxu0 %v1707
    %2231 = vmatprep.subr.mxu0 %v1706
    %2232 = vmatpush1.msra.mxu0 %v1705
    %2233 = vmatprep.subr.mxu0 %v1704
    %2234 = vmatpush1.msra.mxu0 %v1703
    %2235 = vmatprep.subr.mxu0 %v1702
    %2236 = vmatpush1.msra.mxu0 %v1701
    %2237 = vmatprep.subr.mxu0 %v1700
    %2238 = vmatpush1.msra.mxu0 %v1699
    %2239 = vmatprep.subr.mxu0 %v1698
    %2240 = vmatpush1.msra.mxu0 %v1697
    %2241 = vmatprep.subr.mxu0 %v1696
    %2242 = vmatpush1.msra.mxu0 %v1695
    %2243 = vmatprep.subr.mxu0 %v1694
    %2244 = vmatpush1.msra.mxu0 %v1693
    %2245 = vmatprep.subr.mxu0 %v1692
    %2246 = vmatpush1.msra.mxu0 %v1691
    %2247 = vmatprep.subr.mxu0 %v1690
    %2248 = vmatpush1.msra.mxu0 %v1689
    %2249 = vmatprep.subr.mxu0 %v1688
    %2250 = vmatpush1.msra.mxu0 %v1687
    %2251 = vmatprep.subr.mxu0 %v1750
    %2252 = vmatpush2.msra.mxu0 %v1749
    %2253 = vmatprep.subr.mxu0 %v1748
    %2254 = vmatpush2.msra.mxu0 %v1747
    %2255 = vmatprep.subr.mxu0 %v1746
    %2256 = vmatpush2.msra.mxu0 %v1745
    %2257 = vmatprep.subr.mxu0 %v1744
    %2258 = vmatpush2.msra.mxu0 %v1743
    %2259 = vmatprep.subr.mxu0 %v1742
    %2260 = vmatpush2.msra.mxu0 %v1741
    %2261 = vmatprep.subr.mxu0 %v1740
    %2262 = vmatpush2.msra.mxu0 %v1739
    %2263 = vmatprep.subr.mxu0 %v1738
    %2264 = vmatpush2.msra.mxu0 %v1737
    %2265 = vmatprep.subr.mxu0 %v1736
    %2266 = vmatpush2.msra.mxu0 %v1735
    %2267 = vmatprep.subr.mxu0 %v1734
    %2268 = vmatpush2.msra.mxu0 %v1733
    %2269 = vmatprep.subr.mxu0 %v1732
    %2270 = vmatpush2.msra.mxu0 %v1731
    %2271 = vmatprep.subr.mxu0 %v1730
    %2272 = vmatpush2.msra.mxu0 %v1729
    %2273 = vmatprep.subr.mxu0 %v1728
    %2274 = vmatpush2.msra.mxu0 %v1727
    %2275 = vmatprep.subr.mxu0 %v1726
    %2276 = vmatpush2.msra.mxu0 %v1725
    %2277 = vmatprep.subr.mxu0 %v1724
    %2278 = vmatpush2.msra.mxu0 %v1723
    %2279 = vmatprep.subr.mxu0 %v1722
    %2280 = vmatpush2.msra.mxu0 %v1721
    %2281 = vmatprep.subr.mxu0 %v1720
    %2282 = vmatpush2.msra.mxu0 %v1719
    %2283 = vmatprep.mubr.f32.mxu0 %v2006
    %2284 = vmatmul.mubr.f32.gmra.mxu0 %v2003
    %v2285 = vpop.f32.mrf.mxu0
    %v2286 = vadd.f32 %v2209, %v2285
    %v2287 = vpop.f32.mrf.mxu0
    %v2288 = vadd.f32 %v2211, %v2287
    %2289 = vmatprep.mubr.f32.mxu0 %v2018
    %2290 = vmatmul.mubr.f32.gmra.mxu0 %v2015
    %v2291 = vpop.f32.mrf.mxu0
    %v2292 = vadd.f32 %v2215, %v2291
    %v2293 = vpop.f32.mrf.mxu0
    %v2294 = vadd.f32 %v2217, %v2293
    %2295 = vdwg.mxu0
    %2296 = vmatprep.subr.mxu0 %v1782
    %2297 = vmatpush1.msra.mxu0 %v1781
    %2298 = vmatprep.subr.mxu0 %v1780
    %2299 = vmatpush1.msra.mxu0 %v1779
    %2300 = vmatprep.subr.mxu0 %v1778
    %2301 = vmatpush1.msra.mxu0 %v1777
    %2302 = vmatprep.subr.mxu0 %v1776
    %2303 = vmatpush1.msra.mxu0 %v1775
    %2304 = vmatprep.subr.mxu0 %v1774
    %2305 = vmatpush1.msra.mxu0 %v1773
    %2306 = vmatprep.subr.mxu0 %v1772
    %2307 = vmatpush1.msra.mxu0 %v1771
    %2308 = vmatprep.subr.mxu0 %v1770
    %2309 = vmatpush1.msra.mxu0 %v1769
    %2310 = vmatprep.subr.mxu0 %v1768
    %2311 = vmatpush1.msra.mxu0 %v1767
    %2312 = vmatprep.subr.mxu0 %v1766
    %2313 = vmatpush1.msra.mxu0 %v1765
    %2314 = vmatprep.subr.mxu0 %v1764
    %2315 = vmatpush1.msra.mxu0 %v1763
    %2316 = vmatprep.subr.mxu0 %v1762
    %2317 = vmatpush1.msra.mxu0 %v1761
    %2318 = vmatprep.subr.mxu0 %v1760
    %2319 = vmatpush1.msra.mxu0 %v1759
    %2320 = vmatprep.subr.mxu0 %v1758
    %2321 = vmatpush1.msra.mxu0 %v1757
    %2322 = vmatprep.subr.mxu0 %v1756
    %2323 = vmatpush1.msra.mxu0 %v1755
    %2324 = vmatprep.subr.mxu0 %v1754
    %2325 = vmatpush1.msra.mxu0 %v1753
    %2326 = vmatprep.subr.mxu0 %v1752
    %2327 = vmatpush1.msra.mxu0 %v1751
    %2328 = vmatprep.subr.mxu0 %v1814
    %2329 = vmatpush2.msra.mxu0 %v1813
    %2330 = vmatprep.subr.mxu0 %v1812
    %2331 = vmatpush2.msra.mxu0 %v1811
    %2332 = vmatprep.subr.mxu0 %v1810
    %2333 = vmatpush2.msra.mxu0 %v1809
    %2334 = vmatprep.subr.mxu0 %v1808
    %2335 = vmatpush2.msra.mxu0 %v1807
    %2336 = vmatprep.subr.mxu0 %v1806
    %2337 = vmatpush2.msra.mxu0 %v1805
    %2338 = vmatprep.subr.mxu0 %v1804
    %2339 = vmatpush2.msra.mxu0 %v1803
    %2340 = vmatprep.subr.mxu0 %v1802
    %2341 = vmatpush2.msra.mxu0 %v1801
    %2342 = vmatprep.subr.mxu0 %v1800
    %2343 = vmatpush2.msra.mxu0 %v1799
    %2344 = vmatprep.subr.mxu0 %v1798
    %2345 = vmatpush2.msra.mxu0 %v1797
    %2346 = vmatprep.subr.mxu0 %v1796
    %2347 = vmatpush2.msra.mxu0 %v1795
    %2348 = vmatprep.subr.mxu0 %v1794
    %2349 = vmatpush2.msra.mxu0 %v1793
    %2350 = vmatprep.subr.mxu0 %v1792
    %2351 = vmatpush2.msra.mxu0 %v1791
    %2352 = vmatprep.subr.mxu0 %v1790
    %2353 = vmatpush2.msra.mxu0 %v1789
    %2354 = vmatprep.subr.mxu0 %v1788
    %2355 = vmatpush2.msra.mxu0 %v1787
    %2356 = vmatprep.subr.mxu0 %v1786
    %2357 = vmatpush2.msra.mxu0 %v1785
    %2358 = vmatprep.subr.mxu0 %v1784
    %2359 = vmatpush2.msra.mxu0 %v1783
    %2360 = vmatprep.mubr.f32.mxu0 %v2012
    %2361 = vmatmul.mubr.f32.gmra.mxu0 %v2009
    %v2362 = vpop.f32.mrf.mxu0
    %v2363 = vadd.f32 %v2286, %v2362
    %v2364 = vpop.f32.mrf.mxu0
    %v2365 = vadd.f32 %v2288, %v2364
    %2366 = vmatprep.mubr.f32.mxu0 %v2024
    %2367 = vmatmul.mubr.f32.gmra.mxu0 %v2021
    %v2368 = vpop.f32.mrf.mxu0
    %v2369 = vadd.f32 %v2292, %v2368
    %v2370 = vpop.f32.mrf.mxu0
    %v2371 = vadd.f32 %v2294, %v2370
    %2372 = vdwg.mxu0
    %2373 = vmatprep.subr.mxu0 %v1846
    %2374 = vmatpush1.msra.mxu0 %v1845
    %2375 = vmatprep.subr.mxu0 %v1844
    %2376 = vmatpush1.msra.mxu0 %v1843
    %2377 = vmatprep.subr.mxu0 %v1842
    %2378 = vmatpush1.msra.mxu0 %v1841
    %2379 = vmatprep.subr.mxu0 %v1840
    %2380 = vmatpush1.msra.mxu0 %v1839
    %2381 = vmatprep.subr.mxu0 %v1838
    %2382 = vmatpush1.msra.mxu0 %v1837
    %2383 = vmatprep.subr.mxu0 %v1836
    %2384 = vmatpush1.msra.mxu0 %v1835
    %2385 = vmatprep.subr.mxu0 %v1834
    %2386 = vmatpush1.msra.mxu0 %v1833
    %2387 = vmatprep.subr.mxu0 %v1832
    %2388 = vmatpush1.msra.mxu0 %v1831
    %2389 = vmatprep.subr.mxu0 %v1830
    %2390 = vmatpush1.msra.mxu0 %v1829
    %2391 = vmatprep.subr.mxu0 %v1828
    %2392 = vmatpush1.msra.mxu0 %v1827
    %2393 = vmatprep.subr.mxu0 %v1826
    %2394 = vmatpush1.msra.mxu0 %v1825
    %2395 = vmatprep.subr.mxu0 %v1824
    %2396 = vmatpush1.msra.mxu0 %v1823
    %2397 = vmatprep.subr.mxu0 %v1822
    %2398 = vmatpush1.msra.mxu0 %v1821
    %2399 = vmatprep.subr.mxu0 %v1820
    %2400 = vmatpush1.msra.mxu0 %v1819
    %2401 = vmatprep.subr.mxu0 %v1818
    %2402 = vmatpush1.msra.mxu0 %v1817
    %2403 = vmatprep.subr.mxu0 %v1816
    %2404 = vmatpush1.msra.mxu0 %v1815
    %2405 = vmatprep.subr.mxu0 %v1878
    %2406 = vmatpush2.msra.mxu0 %v1877
    %2407 = vmatprep.subr.mxu0 %v1876
    %2408 = vmatpush2.msra.mxu0 %v1875
    %2409 = vmatprep.subr.mxu0 %v1874
    %2410 = vmatpush2.msra.mxu0 %v1873
    %2411 = vmatprep.subr.mxu0 %v1872
    %2412 = vmatpush2.msra.mxu0 %v1871
    %2413 = vmatprep.subr.mxu0 %v1870
    %2414 = vmatpush2.msra.mxu0 %v1869
    %2415 = vmatprep.subr.mxu0 %v1868
    %2416 = vmatpush2.msra.mxu0 %v1867
    %2417 = vmatprep.subr.mxu0 %v1866
    %2418 = vmatpush2.msra.mxu0 %v1865
    %2419 = vmatprep.subr.mxu0 %v1864
    %2420 = vmatpush2.msra.mxu0 %v1863
    %2421 = vmatprep.subr.mxu0 %v1862
    %2422 = vmatpush2.msra.mxu0 %v1861
    %2423 = vmatprep.subr.mxu0 %v1860
    %2424 = vmatpush2.msra.mxu0 %v1859
    %2425 = vmatprep.subr.mxu0 %v1858
    %2426 = vmatpush2.msra.mxu0 %v1857
    %2427 = vmatprep.subr.mxu0 %v1856
    %2428 = vmatpush2.msra.mxu0 %v1855
    %2429 = vmatprep.subr.mxu0 %v1854
    %2430 = vmatpush2.msra.mxu0 %v1853
    %2431 = vmatprep.subr.mxu0 %v1852
    %2432 = vmatpush2.msra.mxu0 %v1851
    %2433 = vmatprep.subr.mxu0 %v1850
    %2434 = vmatpush2.msra.mxu0 %v1849
    %2435 = vmatprep.subr.mxu0 %v1848
    %2436 = vmatpush2.msra.mxu0 %v1847
    %2437 = vmatprep.mubr.f32.mxu0 %v2038
    %2438 = vmatmul.mubr.f32.gmra.mxu0 %v2035
    %v2439 = vpop.f32.mrf.mxu0
    %v2440 = vadd.f32 %v2363, %v2439
    %v2441 = vpop.f32.mrf.mxu0
    %v2442 = vadd.f32 %v2365, %v2441
    %2443 = vmatprep.mubr.f32.mxu0 %v2050
    %2444 = vmatmul.mubr.f32.gmra.mxu0 %v2047
    %v2445 = vpop.f32.mrf.mxu0
    %v2446 = vadd.f32 %v2369, %v2445
    %v2447 = vpop.f32.mrf.mxu0
    %v2448 = vadd.f32 %v2371, %v2447
    %2449 = vdwg.mxu0
    %2450 = vmatprep.subr.mxu0 %v1910
    %2451 = vmatpush1.msra.mxu0 %v1909
    %2452 = vmatprep.subr.mxu0 %v1908
    %2453 = vmatpush1.msra.mxu0 %v1907
    %2454 = vmatprep.subr.mxu0 %v1906
    %2455 = vmatpush1.msra.mxu0 %v1905
    %2456 = vmatprep.subr.mxu0 %v1904
    %2457 = vmatpush1.msra.mxu0 %v1903
    %2458 = vmatprep.subr.mxu0 %v1902
    %2459 = vmatpush1.msra.mxu0 %v1901
    %2460 = vmatprep.subr.mxu0 %v1900
    %2461 = vmatpush1.msra.mxu0 %v1899
    %2462 = vmatprep.subr.mxu0 %v1898
    %2463 = vmatpush1.msra.mxu0 %v1897
    %2464 = vmatprep.subr.mxu0 %v1896
    %2465 = vmatpush1.msra.mxu0 %v1895
    %2466 = vmatprep.subr.mxu0 %v1894
    %2467 = vmatpush1.msra.mxu0 %v1893
    %2468 = vmatprep.subr.mxu0 %v1892
    %2469 = vmatpush1.msra.mxu0 %v1891
    %2470 = vmatprep.subr.mxu0 %v1890
    %2471 = vmatpush1.msra.mxu0 %v1889
    %2472 = vmatprep.subr.mxu0 %v1888
    %2473 = vmatpush1.msra.mxu0 %v1887
    %2474 = vmatprep.subr.mxu0 %v1886
    %2475 = vmatpush1.msra.mxu0 %v1885
    %2476 = vmatprep.subr.mxu0 %v1884
    %2477 = vmatpush1.msra.mxu0 %v1883
    %2478 = vmatprep.subr.mxu0 %v1882
    %2479 = vmatpush1.msra.mxu0 %v1881
    %2480 = vmatprep.subr.mxu0 %v1880
    %2481 = vmatpush1.msra.mxu0 %v1879
    %2482 = vmatprep.subr.mxu0 %v1942
    %2483 = vmatpush2.msra.mxu0 %v1941
    %2484 = vmatprep.subr.mxu0 %v1940
    %2485 = vmatpush2.msra.mxu0 %v1939
    %2486 = vmatprep.subr.mxu0 %v1938
    %2487 = vmatpush2.msra.mxu0 %v1937
    %2488 = vmatprep.subr.mxu0 %v1936
    %2489 = vmatpush2.msra.mxu0 %v1935
    %2490 = vmatprep.subr.mxu0 %v1934
    %2491 = vmatpush2.msra.mxu0 %v1933
    %2492 = vmatprep.subr.mxu0 %v1932
    %2493 = vmatpush2.msra.mxu0 %v1931
    %2494 = vmatprep.subr.mxu0 %v1930
    %2495 = vmatpush2.msra.mxu0 %v1929
    %2496 = vmatprep.subr.mxu0 %v1928
    %2497 = vmatpush2.msra.mxu0 %v1927
    %2498 = vmatprep.subr.mxu0 %v1926
    %2499 = vmatpush2.msra.mxu0 %v1925
    %2500 = vmatprep.subr.mxu0 %v1924
    %2501 = vmatpush2.msra.mxu0 %v1923
    %2502 = vmatprep.subr.mxu0 %v1922
    %2503 = vmatpush2.msra.mxu0 %v1921
    %2504 = vmatprep.subr.mxu0 %v1920
    %2505 = vmatpush2.msra.mxu0 %v1919
    %2506 = vmatprep.subr.mxu0 %v1918
    %2507 = vmatpush2.msra.mxu0 %v1917
    %2508 = vmatprep.subr.mxu0 %v1916
    %2509 = vmatpush2.msra.mxu0 %v1915
    %2510 = vmatprep.subr.mxu0 %v1914
    %2511 = vmatpush2.msra.mxu0 %v1913
    %2512 = vmatprep.subr.mxu0 %v1912
    %2513 = vmatpush2.msra.mxu0 %v1911
    %2514 = vmatprep.mubr.f32.mxu0 %v2044
    %2515 = vmatmul.mubr.f32.gmra.mxu0 %v2041
    %v2516 = vpop.f32.mrf.mxu0
    %v2517 = vadd.f32 %v2440, %v2516
    %v2518 = vpop.f32.mrf.mxu0
    %v2519 = vadd.f32 %v2442, %v2518
    %2520 = vmatprep.mubr.f32.mxu0 %v2056
    %2521 = vmatmul.mubr.f32.gmra.mxu0 %v2053
    %v2522 = vpop.f32.mrf.mxu0
    %v2523 = vadd.f32 %v2446, %v2522
    %v2524 = vpop.f32.mrf.mxu0
    %v2525 = vadd.f32 %v2448, %v2524
    %2526 = vdwg.mxu0
    %v2528 = vlaneseq
    %v2529 = vshrl.u32 %v2528, 7
    %v2530 = vsub.s32 0, %v2529
    %v2531 = vrot.slane %v1943, %v2530
    %v2532 = vlaneseq
    %v2533 = vshrl.u32 %v2532, 7
    %v2534 = vsub.s32 1, %v2533
    %v2535 = vrot.slane %v1943, %v2534
    %v2538 = vmul.f32 %v2517, %v2531
    %v2539 = vmul.f32 %v2519, %v2535
    %v2540 = vmul.f32 %v2523, %v2531
    %v2541 = vmul.f32 %v2525, %v2535
    %v2543 = vlaneseq
    %v2544 = vshrl.u32 %v2543, 7
    %v2545 = vsub.s32 0, %v2544
    %v2546 = vrot.slane %v1944, %v2545
    %v2547 = vlaneseq
    %v2548 = vshrl.u32 %v2547, 7
    %v2549 = vsub.s32 1, %v2548
    %v2550 = vrot.slane %v1944, %v2549
    %v2553 = vadd.f32 %v2538, %v2546
    %v2554 = vadd.f32 %v2539, %v2550
    %v2555 = vadd.f32 %v2540, %v2546
    %v2556 = vadd.f32 %v2541, %v2550
    %v2557 = vmax.f32 %v2553, 0.0
    %v2558 = vmax.f32 %v2554, 0.0
    %v2559 = vmax.f32 %v2555, 0.0
    %v2560 = vmax.f32 %v2556, 0.0
    %v2561 = vsel %vm1048, %v2557, -inf
    %v2562 = vrot.slane %v2561, 4
    %v2563 = vmax.f32 %v2561, %v2562
    %v2564 = vrot.slane %v2563, 2
    %v2565 = vmax.f32 %v2563, %v2564
    %v2566 = vrot.slane %v2565, 1
    %v2567 = vmax.f32 %v2565, %v2566
    %v2568 = vsel %vm1048, %v2558, -inf
    %v2569 = vrot.slane %v2568, 4
    %v2570 = vmax.f32 %v2568, %v2569
    %v2571 = vrot.slane %v2570, 2
    %v2572 = vmax.f32 %v2570, %v2571
    %v2573 = vrot.slane %v2572, 1
    %v2574 = vmax.f32 %v2572, %v2573
    %v2575 = vsel %vm1048, %v2559, -inf
    %v2576 = vrot.slane %v2575, 4
    %v2577 = vmax.f32 %v2575, %v2576
    %v2578 = vrot.slane %v2577, 2
    %v2579 = vmax.f32 %v2577, %v2578
    %v2580 = vrot.slane %v2579, 1
    %v2581 = vmax.f32 %v2579, %v2580
    %v2582 = vsel %vm1048, %v2560, -inf
    %v2583 = vrot.slane %v2582, 4
    %v2584 = vmax.f32 %v2582, %v2583
    %v2585 = vrot.slane %v2584, 2
    %v2586 = vmax.f32 %v2584, %v2585
    %v2587 = vrot.slane %v2586, 1
    %v2588 = vmax.f32 %v2586, %v2587
    %v2589 = vsel %vm1105, %v2557, -inf
    %v2590 = vrot.slane %v2589, 4
    %v2591 = vmax.f32 %v2589, %v2590
    %v2592 = vrot.slane %v2591, 2
    %v2593 = vmax.f32 %v2591, %v2592
    %v2594 = vrot.slane %v2593, 1
    %v2595 = vmax.f32 %v2593, %v2594
    %v2596 = vsel %vm1105, %v2558, -inf
    %v2597 = vrot.slane %v2596, 4
    %v2598 = vmax.f32 %v2596, %v2597
    %v2599 = vrot.slane %v2598, 2
    %v2600 = vmax.f32 %v2598, %v2599
    %v2601 = vrot.slane %v2600, 1
    %v2602 = vmax.f32 %v2600, %v2601
    %v2603 = vsel %vm1105, %v2559, -inf
    %v2604 = vrot.slane %v2603, 4
    %v2605 = vmax.f32 %v2603, %v2604
    %v2606 = vrot.slane %v2605, 2
    %v2607 = vmax.f32 %v2605, %v2606
    %v2608 = vrot.slane %v2607, 1
    %v2609 = vmax.f32 %v2607, %v2608
    %v2610 = vsel %vm1105, %v2560, -inf
    %v2611 = vrot.slane %v2610, 4
    %v2612 = vmax.f32 %v2610, %v2611
    %v2613 = vrot.slane %v2612, 2
    %v2614 = vmax.f32 %v2612, %v2613
    %v2615 = vrot.slane %v2614, 1
    %v2616 = vmax.f32 %v2614, %v2615
    %v2617 = vsel %vm1162, %v2557, -inf
    %v2618 = vrot.slane %v2617, 4
    %v2619 = vmax.f32 %v2617, %v2618
    %v2620 = vrot.slane %v2619, 2
    %v2621 = vmax.f32 %v2619, %v2620
    %v2622 = vrot.slane %v2621, 1
    %v2623 = vmax.f32 %v2621, %v2622
    %v2624 = vsel %vm1162, %v2558, -inf
    %v2625 = vrot.slane %v2624, 4
    %v2626 = vmax.f32 %v2624, %v2625
    %v2627 = vrot.slane %v2626, 2
    %v2628 = vmax.f32 %v2626, %v2627
    %v2629 = vrot.slane %v2628, 1
    %v2630 = vmax.f32 %v2628, %v2629
    %v2631 = vsel %vm1162, %v2559, -inf
    %v2632 = vrot.slane %v2631, 4
    %v2633 = vmax.f32 %v2631, %v2632
    %v2634 = vrot.slane %v2633, 2
    %v2635 = vmax.f32 %v2633, %v2634
    %v2636 = vrot.slane %v2635, 1
    %v2637 = vmax.f32 %v2635, %v2636
    %v2638 = vsel %vm1162, %v2560, -inf
    %v2639 = vrot.slane %v2638, 4
    %v2640 = vmax.f32 %v2638, %v2639
    %v2641 = vrot.slane %v2640, 2
    %v2642 = vmax.f32 %v2640, %v2641
    %v2643 = vrot.slane %v2642, 1
    %v2644 = vmax.f32 %v2642, %v2643
    %v2645 = vsel %vm1219, %v2557, -inf
    %v2646 = vrot.slane %v2645, 4
    %v2647 = vmax.f32 %v2645, %v2646
    %v2648 = vrot.slane %v2647, 2
    %v2649 = vmax.f32 %v2647, %v2648
    %v2650 = vrot.slane %v2649, 1
    %v2651 = vmax.f32 %v2649, %v2650
    %v2652 = vsel %vm1219, %v2558, -inf
    %v2653 = vrot.slane %v2652, 4
    %v2654 = vmax.f32 %v2652, %v2653
    %v2655 = vrot.slane %v2654, 2
    %v2656 = vmax.f32 %v2654, %v2655
    %v2657 = vrot.slane %v2656, 1
    %v2658 = vmax.f32 %v2656, %v2657
    %v2659 = vsel %vm1219, %v2559, -inf
    %v2660 = vrot.slane %v2659, 4
    %v2661 = vmax.f32 %v2659, %v2660
    %v2662 = vrot.slane %v2661, 2
    %v2663 = vmax.f32 %v2661, %v2662
    %v2664 = vrot.slane %v2663, 1
    %v2665 = vmax.f32 %v2663, %v2664
    %v2666 = vsel %vm1219, %v2560, -inf
    %v2667 = vrot.slane %v2666, 4
    %v2668 = vmax.f32 %v2666, %v2667
    %v2669 = vrot.slane %v2668, 2
    %v2670 = vmax.f32 %v2668, %v2669
    %v2671 = vrot.slane %v2670, 1
    %v2672 = vmax.f32 %v2670, %v2671
    %v2673 = vsel %vm342, %v2567, %v2595
    %v2674 = vsel %vm342, %v2574, %v2602
    %v2675 = vsel %vm342, %v2581, %v2609
    %v2676 = vsel %vm342, %v2588, %v2616
    %v2677 = vsel %vm1048, %v2673, %v2623
    %v2678 = vsel %vm1048, %v2674, %v2630
    %v2679 = vsel %vm1048, %v2675, %v2637
    %v2680 = vsel %vm1048, %v2676, %v2644
    %v2681 = vsel %vm1516, %v2677, %v2651
    %v2682 = vsel %vm1516, %v2678, %v2658
    %v2683 = vsel %vm1516, %v2679, %v2665
    %v2684 = vsel %vm1516, %v2680, %v2672
    %v2685 = vld [vmem:[#allocation14] sm:$0xff]
    %v2686 = vld [vmem:[#allocation14 + $0x8] sm:$0xff]
    %v2687 = vld [vmem:[#allocation14 + $0x10] sm:$0xff]
    %v2688 = vld [vmem:[#allocation14 + $0x18] sm:$0xff]
    %v2689 = vld [vmem:[#allocation14 + $0x20] sm:$0xff]
    %v2690 = vld [vmem:[#allocation14 + $0x28] sm:$0xff]
    %v2691 = vld [vmem:[#allocation14 + $0x30] sm:$0xff]
    %v2692 = vld [vmem:[#allocation14 + $0x38] sm:$0xff]
    %v2693 = vld [vmem:[#allocation14 + $0x40] sm:$0xff]
    %v2694 = vld [vmem:[#allocation14 + $0x48] sm:$0xff]
    %v2695 = vld [vmem:[#allocation14 + $0x50] sm:$0xff]
    %v2696 = vld [vmem:[#allocation14 + $0x58] sm:$0xff]
    %v2697 = vld [vmem:[#allocation14 + $0x60] sm:$0xff]
    %v2698 = vld [vmem:[#allocation14 + $0x68] sm:$0xff]
    %v2699 = vld [vmem:[#allocation14 + $0x70] sm:$0xff]
    %v2700 = vld [vmem:[#allocation14 + $0x78] sm:$0xff]
    %v2701 = vld [vmem:[#allocation14 + $0x80] sm:$0xff]
    %v2702 = vld [vmem:[#allocation14 + $0x88] sm:$0xff]
    %v2703 = vld [vmem:[#allocation14 + $0x90] sm:$0xff]
    %v2704 = vld [vmem:[#allocation14 + $0x98] sm:$0xff]
    %v2705 = vld [vmem:[#allocation14 + $0xa0] sm:$0xff]
    %v2706 = vld [vmem:[#allocation14 + $0xa8] sm:$0xff]
    %v2707 = vld [vmem:[#allocation14 + $0xb0] sm:$0xff]
    %v2708 = vld [vmem:[#allocation14 + $0xb8] sm:$0xff]
    %v2709 = vld [vmem:[#allocation14 + $0xc0] sm:$0xff]
    %v2710 = vld [vmem:[#allocation14 + $0xc8] sm:$0xff]
    %v2711 = vld [vmem:[#allocation14 + $0xd0] sm:$0xff]
    %v2712 = vld [vmem:[#allocation14 + $0xd8] sm:$0xff]
    %v2713 = vld [vmem:[#allocation14 + $0xe0] sm:$0xff]
    %v2714 = vld [vmem:[#allocation14 + $0xe8] sm:$0xff]
    %v2715 = vld [vmem:[#allocation14 + $0xf0] sm:$0xff]
    %v2716 = vld [vmem:[#allocation14 + $0xf8] sm:$0xff]
    %v2717 = vld [vmem:[#allocation14 + $0x100] sm:$0xff]
    %v2718 = vld [vmem:[#allocation14 + $0x108] sm:$0xff]
    %v2719 = vld [vmem:[#allocation14 + $0x110] sm:$0xff]
    %v2720 = vld [vmem:[#allocation14 + $0x118] sm:$0xff]
    %v2721 = vld [vmem:[#allocation14 + $0x120] sm:$0xff]
    %v2722 = vld [vmem:[#allocation14 + $0x128] sm:$0xff]
    %v2723 = vld [vmem:[#allocation14 + $0x130] sm:$0xff]
    %v2724 = vld [vmem:[#allocation14 + $0x138] sm:$0xff]
    %v2725 = vld [vmem:[#allocation14 + $0x140] sm:$0xff]
    %v2726 = vld [vmem:[#allocation14 + $0x148] sm:$0xff]
    %v2727 = vld [vmem:[#allocation14 + $0x150] sm:$0xff]
    %v2728 = vld [vmem:[#allocation14 + $0x158] sm:$0xff]
    %v2729 = vld [vmem:[#allocation14 + $0x160] sm:$0xff]
    %v2730 = vld [vmem:[#allocation14 + $0x168] sm:$0xff]
    %v2731 = vld [vmem:[#allocation14 + $0x170] sm:$0xff]
    %v2732 = vld [vmem:[#allocation14 + $0x178] sm:$0xff]
    %v2733 = vld [vmem:[#allocation14 + $0x180] sm:$0xff]
    %v2734 = vld [vmem:[#allocation14 + $0x188] sm:$0xff]
    %v2735 = vld [vmem:[#allocation14 + $0x190] sm:$0xff]
    %v2736 = vld [vmem:[#allocation14 + $0x198] sm:$0xff]
    %v2737 = vld [vmem:[#allocation14 + $0x1a0] sm:$0xff]
    %v2738 = vld [vmem:[#allocation14 + $0x1a8] sm:$0xff]
    %v2739 = vld [vmem:[#allocation14 + $0x1b0] sm:$0xff]
    %v2740 = vld [vmem:[#allocation14 + $0x1b8] sm:$0xff]
    %v2741 = vld [vmem:[#allocation14 + $0x1c0] sm:$0xff]
    %v2742 = vld [vmem:[#allocation14 + $0x1c8] sm:$0xff]
    %v2743 = vld [vmem:[#allocation14 + $0x1d0] sm:$0xff]
    %v2744 = vld [vmem:[#allocation14 + $0x1d8] sm:$0xff]
    %v2745 = vld [vmem:[#allocation14 + $0x1e0] sm:$0xff]
    %v2746 = vld [vmem:[#allocation14 + $0x1e8] sm:$0xff]
    %v2747 = vld [vmem:[#allocation14 + $0x1f0] sm:$0xff]
    %v2748 = vld [vmem:[#allocation14 + $0x1f8] sm:$0xff]
    %v2749 = vld [vmem:[#allocation14 + $0x200] sm:$0xff]
    %v2750 = vld [vmem:[#allocation14 + $0x208] sm:$0xff]
    %v2751 = vld [vmem:[#allocation14 + $0x210] sm:$0xff]
    %v2752 = vld [vmem:[#allocation14 + $0x218] sm:$0xff]
    %v2753 = vld [vmem:[#allocation14 + $0x220] sm:$0xff]
    %v2754 = vld [vmem:[#allocation14 + $0x228] sm:$0xff]
    %v2755 = vld [vmem:[#allocation14 + $0x230] sm:$0xff]
    %v2756 = vld [vmem:[#allocation14 + $0x238] sm:$0xff]
    %v2757 = vld [vmem:[#allocation14 + $0x240] sm:$0xff]
    %v2758 = vld [vmem:[#allocation14 + $0x248] sm:$0xff]
    %v2759 = vld [vmem:[#allocation14 + $0x250] sm:$0xff]
    %v2760 = vld [vmem:[#allocation14 + $0x258] sm:$0xff]
    %v2761 = vld [vmem:[#allocation14 + $0x260] sm:$0xff]
    %v2762 = vld [vmem:[#allocation14 + $0x268] sm:$0xff]
    %v2763 = vld [vmem:[#allocation14 + $0x270] sm:$0xff]
    %v2764 = vld [vmem:[#allocation14 + $0x278] sm:$0xff]
    %v2765 = vld [vmem:[#allocation14 + $0x280] sm:$0xff]
    %v2766 = vld [vmem:[#allocation14 + $0x288] sm:$0xff]
    %v2767 = vld [vmem:[#allocation14 + $0x290] sm:$0xff]
    %v2768 = vld [vmem:[#allocation14 + $0x298] sm:$0xff]
    %v2769 = vld [vmem:[#allocation14 + $0x2a0] sm:$0xff]
    %v2770 = vld [vmem:[#allocation14 + $0x2a8] sm:$0xff]
    %v2771 = vld [vmem:[#allocation14 + $0x2b0] sm:$0xff]
    %v2772 = vld [vmem:[#allocation14 + $0x2b8] sm:$0xff]
    %v2773 = vld [vmem:[#allocation14 + $0x2c0] sm:$0xff]
    %v2774 = vld [vmem:[#allocation14 + $0x2c8] sm:$0xff]
    %v2775 = vld [vmem:[#allocation14 + $0x2d0] sm:$0xff]
    %v2776 = vld [vmem:[#allocation14 + $0x2d8] sm:$0xff]
    %v2777 = vld [vmem:[#allocation14 + $0x2e0] sm:$0xff]
    %v2778 = vld [vmem:[#allocation14 + $0x2e8] sm:$0xff]
    %v2779 = vld [vmem:[#allocation14 + $0x2f0] sm:$0xff]
    %v2780 = vld [vmem:[#allocation14 + $0x2f8] sm:$0xff]
    %v2781 = vld [vmem:[#allocation14 + $0x300] sm:$0xff]
    %v2782 = vld [vmem:[#allocation14 + $0x308] sm:$0xff]
    %v2783 = vld [vmem:[#allocation14 + $0x310] sm:$0xff]
    %v2784 = vld [vmem:[#allocation14 + $0x318] sm:$0xff]
    %v2785 = vld [vmem:[#allocation14 + $0x320] sm:$0xff]
    %v2786 = vld [vmem:[#allocation14 + $0x328] sm:$0xff]
    %v2787 = vld [vmem:[#allocation14 + $0x330] sm:$0xff]
    %v2788 = vld [vmem:[#allocation14 + $0x338] sm:$0xff]
    %v2789 = vld [vmem:[#allocation14 + $0x340] sm:$0xff]
    %v2790 = vld [vmem:[#allocation14 + $0x348] sm:$0xff]
    %v2791 = vld [vmem:[#allocation14 + $0x350] sm:$0xff]
    %v2792 = vld [vmem:[#allocation14 + $0x358] sm:$0xff]
    %v2793 = vld [vmem:[#allocation14 + $0x360] sm:$0xff]
    %v2794 = vld [vmem:[#allocation14 + $0x368] sm:$0xff]
    %v2795 = vld [vmem:[#allocation14 + $0x370] sm:$0xff]
    %v2796 = vld [vmem:[#allocation14 + $0x378] sm:$0xff]
    %v2797 = vld [vmem:[#allocation14 + $0x380] sm:$0xff]
    %v2798 = vld [vmem:[#allocation14 + $0x388] sm:$0xff]
    %v2799 = vld [vmem:[#allocation14 + $0x390] sm:$0xff]
    %v2800 = vld [vmem:[#allocation14 + $0x398] sm:$0xff]
    %v2801 = vld [vmem:[#allocation14 + $0x3a0] sm:$0xff]
    %v2802 = vld [vmem:[#allocation14 + $0x3a8] sm:$0xff]
    %v2803 = vld [vmem:[#allocation14 + $0x3b0] sm:$0xff]
    %v2804 = vld [vmem:[#allocation14 + $0x3b8] sm:$0xff]
    %v2805 = vld [vmem:[#allocation14 + $0x3c0] sm:$0xff]
    %v2806 = vld [vmem:[#allocation14 + $0x3c8] sm:$0xff]
    %v2807 = vld [vmem:[#allocation14 + $0x3d0] sm:$0xff]
    %v2808 = vld [vmem:[#allocation14 + $0x3d8] sm:$0xff]
    %v2809 = vld [vmem:[#allocation14 + $0x3e0] sm:$0xff]
    %v2810 = vld [vmem:[#allocation14 + $0x3e8] sm:$0xff]
    %v2811 = vld [vmem:[#allocation14 + $0x3f0] sm:$0xff]
    %v2812 = vld [vmem:[#allocation14 + $0x3f8] sm:$0xff]
    %v2813 = vld [vmem:[#allocation14 + $0x400] sm:$0xff]
    %v2814 = vld [vmem:[#allocation14 + $0x408] sm:$0xff]
    %v2815 = vld [vmem:[#allocation14 + $0x410] sm:$0xff]
    %v2816 = vld [vmem:[#allocation14 + $0x418] sm:$0xff]
    %v2817 = vld [vmem:[#allocation14 + $0x420] sm:$0xff]
    %v2818 = vld [vmem:[#allocation14 + $0x428] sm:$0xff]
    %v2819 = vld [vmem:[#allocation14 + $0x430] sm:$0xff]
    %v2820 = vld [vmem:[#allocation14 + $0x438] sm:$0xff]
    %v2821 = vld [vmem:[#allocation14 + $0x440] sm:$0xff]
    %v2822 = vld [vmem:[#allocation14 + $0x448] sm:$0xff]
    %v2823 = vld [vmem:[#allocation14 + $0x450] sm:$0xff]
    %v2824 = vld [vmem:[#allocation14 + $0x458] sm:$0xff]
    %v2825 = vld [vmem:[#allocation14 + $0x460] sm:$0xff]
    %v2826 = vld [vmem:[#allocation14 + $0x468] sm:$0xff]
    %v2827 = vld [vmem:[#allocation14 + $0x470] sm:$0xff]
    %v2828 = vld [vmem:[#allocation14 + $0x478] sm:$0xff]
    %v2829 = vld [vmem:[#allocation14 + $0x480] sm:$0xff]
    %v2830 = vld [vmem:[#allocation14 + $0x488] sm:$0xff]
    %v2831 = vld [vmem:[#allocation14 + $0x490] sm:$0xff]
    %v2832 = vld [vmem:[#allocation14 + $0x498] sm:$0xff]
    %v2833 = vld [vmem:[#allocation14 + $0x4a0] sm:$0xff]
    %v2834 = vld [vmem:[#allocation14 + $0x4a8] sm:$0xff]
    %v2835 = vld [vmem:[#allocation14 + $0x4b0] sm:$0xff]
    %v2836 = vld [vmem:[#allocation14 + $0x4b8] sm:$0xff]
    %v2837 = vld [vmem:[#allocation14 + $0x4c0] sm:$0xff]
    %v2838 = vld [vmem:[#allocation14 + $0x4c8] sm:$0xff]
    %v2839 = vld [vmem:[#allocation14 + $0x4d0] sm:$0xff]
    %v2840 = vld [vmem:[#allocation14 + $0x4d8] sm:$0xff]
    %v2841 = vld [vmem:[#allocation14 + $0x4e0] sm:$0xff]
    %v2842 = vld [vmem:[#allocation14 + $0x4e8] sm:$0xff]
    %v2843 = vld [vmem:[#allocation14 + $0x4f0] sm:$0xff]
    %v2844 = vld [vmem:[#allocation14 + $0x4f8] sm:$0xff]
    %v2845 = vld [vmem:[#allocation14 + $0x500] sm:$0xff]
    %v2846 = vld [vmem:[#allocation14 + $0x508] sm:$0xff]
    %v2847 = vld [vmem:[#allocation14 + $0x510] sm:$0xff]
    %v2848 = vld [vmem:[#allocation14 + $0x518] sm:$0xff]
    %v2849 = vld [vmem:[#allocation14 + $0x520] sm:$0xff]
    %v2850 = vld [vmem:[#allocation14 + $0x528] sm:$0xff]
    %v2851 = vld [vmem:[#allocation14 + $0x530] sm:$0xff]
    %v2852 = vld [vmem:[#allocation14 + $0x538] sm:$0xff]
    %v2853 = vld [vmem:[#allocation14 + $0x540] sm:$0xff]
    %v2854 = vld [vmem:[#allocation14 + $0x548] sm:$0xff]
    %v2855 = vld [vmem:[#allocation14 + $0x550] sm:$0xff]
    %v2856 = vld [vmem:[#allocation14 + $0x558] sm:$0xff]
    %v2857 = vld [vmem:[#allocation14 + $0x560] sm:$0xff]
    %v2858 = vld [vmem:[#allocation14 + $0x568] sm:$0xff]
    %v2859 = vld [vmem:[#allocation14 + $0x570] sm:$0xff]
    %v2860 = vld [vmem:[#allocation14 + $0x578] sm:$0xff]
    %v2861 = vld [vmem:[#allocation14 + $0x580] sm:$0xff]
    %v2862 = vld [vmem:[#allocation14 + $0x588] sm:$0xff]
    %v2863 = vld [vmem:[#allocation14 + $0x590] sm:$0xff]
    %v2864 = vld [vmem:[#allocation14 + $0x598] sm:$0xff]
    %v2865 = vld [vmem:[#allocation14 + $0x5a0] sm:$0xff]
    %v2866 = vld [vmem:[#allocation14 + $0x5a8] sm:$0xff]
    %v2867 = vld [vmem:[#allocation14 + $0x5b0] sm:$0xff]
    %v2868 = vld [vmem:[#allocation14 + $0x5b8] sm:$0xff]
    %v2869 = vld [vmem:[#allocation14 + $0x5c0] sm:$0xff]
    %v2870 = vld [vmem:[#allocation14 + $0x5c8] sm:$0xff]
    %v2871 = vld [vmem:[#allocation14 + $0x5d0] sm:$0xff]
    %v2872 = vld [vmem:[#allocation14 + $0x5d8] sm:$0xff]
    %v2873 = vld [vmem:[#allocation14 + $0x5e0] sm:$0xff]
    %v2874 = vld [vmem:[#allocation14 + $0x5e8] sm:$0xff]
    %v2875 = vld [vmem:[#allocation14 + $0x5f0] sm:$0xff]
    %v2876 = vld [vmem:[#allocation14 + $0x5f8] sm:$0xff]
    %v2877 = vld [vmem:[#allocation16] sm:$0x3]
    %v2878 = vld [vmem:[#allocation17] sm:$0x3]
    %v2883 = vrot.slane %v2681, 7
    %v2884 = vrot.slane %v2682, 7
    %v2885 = vrot.slane %v2683, 7
    %v2886 = vrot.slane %v2684, 7
    %v2891 = vsel %vm342, 0.0, %v2883
    %v2892 = vsel %vm342, 0.0, %v2884
    %v2893 = vsel %vm342, 0.0, %v2885
    %v2894 = vsel %vm342, 0.0, %v2886
    %v2895 = vsel %vm1534, %v2891, 0.0
    %v2896 = vsel %vm1534, %v2892, 0.0
    %v2897 = vsel %vm1534, %v2893, 0.0
    %v2898 = vsel %vm1534, %v2894, 0.0
    %v2903 = vrot.slane %v2895, 1
    %v2904 = vrot.slane %v2896, 1
    %v2905 = vrot.slane %v2897, 1
    %v2906 = vrot.slane %v2898, 1
    %v2907 = vrot.slane %v2895, 2
    %v2908 = vrot.slane %v2896, 2
    %v2909 = vrot.slane %v2897, 2
    %v2910 = vrot.slane %v2898, 2
    %v2911 = vcombine.low %v2895, %v2896
    %v2912 = vcombine.low %v2903, %v2904
    %v2913 = vcombine.low %v2907, %v2908
    %v2914 = vcombine.low %v2897, %v2898
    %v2915 = vcombine.low %v2905, %v2906
    %v2916 = vcombine.low %v2909, %v2910
    %v2917 = vcombine.low %v2911, %v2914
    %v2918 = vcombine.high %v2911, %v2914
    %v2919 = vcombine.low %v2912, %v2915
    %v2920 = vcombine.high %v2912, %v2915
    %v2921 = vcombine.low %v2913, %v2916
    %v2922 = vcombine.high %v2913, %v2916
    %2929 = vmatprep.subr.mxu0 %v2716
    %2930 = vmatpush1.msra.mxu0 %v2715
    %2931 = vmatprep.subr.mxu0 %v2714
    %2932 = vmatpush1.msra.mxu0 %v2713
    %2933 = vmatprep.subr.mxu0 %v2712
    %2934 = vmatpush1.msra.mxu0 %v2711
    %2935 = vmatprep.subr.mxu0 %v2710
    %2936 = vmatpush1.msra.mxu0 %v2709
    %2937 = vmatprep.subr.mxu0 %v2708
    %2938 = vmatpush1.msra.mxu0 %v2707
    %2939 = vmatprep.subr.mxu0 %v2706
    %2940 = vmatpush1.msra.mxu0 %v2705
    %2941 = vmatprep.subr.mxu0 %v2704
    %2942 = vmatpush1.msra.mxu0 %v2703
    %2943 = vmatprep.subr.mxu0 %v2702
    %2944 = vmatpush1.msra.mxu0 %v2701
    %2945 = vmatprep.subr.mxu0 %v2700
    %2946 = vmatpush1.msra.mxu0 %v2699
    %2947 = vmatprep.subr.mxu0 %v2698
    %2948 = vmatpush1.msra.mxu0 %v2697
    %2949 = vmatprep.subr.mxu0 %v2696
    %2950 = vmatpush1.msra.mxu0 %v2695
    %2951 = vmatprep.subr.mxu0 %v2694
    %2952 = vmatpush1.msra.mxu0 %v2693
    %2953 = vmatprep.subr.mxu0 %v2692
    %2954 = vmatpush1.msra.mxu0 %v2691
    %2955 = vmatprep.subr.mxu0 %v2690
    %2956 = vmatpush1.msra.mxu0 %v2689
    %2957 = vmatprep.subr.mxu0 %v2688
    %2958 = vmatpush1.msra.mxu0 %v2687
    %2959 = vmatprep.subr.mxu0 %v2686
    %2960 = vmatpush1.msra.mxu0 %v2685
    %2961 = vmatprep.subr.mxu0 %v2748
    %2962 = vmatpush2.msra.mxu0 %v2747
    %2963 = vmatprep.subr.mxu0 %v2746
    %2964 = vmatpush2.msra.mxu0 %v2745
    %2965 = vmatprep.subr.mxu0 %v2744
    %2966 = vmatpush2.msra.mxu0 %v2743
    %2967 = vmatprep.subr.mxu0 %v2742
    %2968 = vmatpush2.msra.mxu0 %v2741
    %2969 = vmatprep.subr.mxu0 %v2740
    %2970 = vmatpush2.msra.mxu0 %v2739
    %2971 = vmatprep.subr.mxu0 %v2738
    %2972 = vmatpush2.msra.mxu0 %v2737
    %2973 = vmatprep.subr.mxu0 %v2736
    %2974 = vmatpush2.msra.mxu0 %v2735
    %2975 = vmatprep.subr.mxu0 %v2734
    %2976 = vmatpush2.msra.mxu0 %v2733
    %2977 = vmatprep.subr.mxu0 %v2732
    %2978 = vmatpush2.msra.mxu0 %v2731
    %2979 = vmatprep.subr.mxu0 %v2730
    %2980 = vmatpush2.msra.mxu0 %v2729
    %2981 = vmatprep.subr.mxu0 %v2728
    %2982 = vmatpush2.msra.mxu0 %v2727
    %2983 = vmatprep.subr.mxu0 %v2726
    %2984 = vmatpush2.msra.mxu0 %v2725
    %2985 = vmatprep.subr.mxu0 %v2724
    %2986 = vmatpush2.msra.mxu0 %v2723
    %2987 = vmatprep.subr.mxu0 %v2722
    %2988 = vmatpush2.msra.mxu0 %v2721
    %2989 = vmatprep.subr.mxu0 %v2720
    %2990 = vmatpush2.msra.mxu0 %v2719
    %2991 = vmatprep.subr.mxu0 %v2718
    %2992 = vmatpush2.msra.mxu0 %v2717
    %2993 = vmatprep.mubr.f32.mxu0 %v2918
    %2994 = vmatmul.mubr.f32.gmra.mxu0 %v2917
    %v2995 = vpop.f32.mrf.mxu0
    %v2996 = vadd.f32 0.0, %v2995
    %v2997 = vpop.f32.mrf.mxu0
    %v2998 = vadd.f32 0.0, %v2997
    %2999 = vdwg.mxu0
    %3000 = vmatprep.subr.mxu0 %v2780
    %3001 = vmatpush1.msra.mxu0 %v2779
    %3002 = vmatprep.subr.mxu0 %v2778
    %3003 = vmatpush1.msra.mxu0 %v2777
    %3004 = vmatprep.subr.mxu0 %v2776
    %3005 = vmatpush1.msra.mxu0 %v2775
    %3006 = vmatprep.subr.mxu0 %v2774
    %3007 = vmatpush1.msra.mxu0 %v2773
    %3008 = vmatprep.subr.mxu0 %v2772
    %3009 = vmatpush1.msra.mxu0 %v2771
    %3010 = vmatprep.subr.mxu0 %v2770
    %3011 = vmatpush1.msra.mxu0 %v2769
    %3012 = vmatprep.subr.mxu0 %v2768
    %3013 = vmatpush1.msra.mxu0 %v2767
    %3014 = vmatprep.subr.mxu0 %v2766
    %3015 = vmatpush1.msra.mxu0 %v2765
    %3016 = vmatprep.subr.mxu0 %v2764
    %3017 = vmatpush1.msra.mxu0 %v2763
    %3018 = vmatprep.subr.mxu0 %v2762
    %3019 = vmatpush1.msra.mxu0 %v2761
    %3020 = vmatprep.subr.mxu0 %v2760
    %3021 = vmatpush1.msra.mxu0 %v2759
    %3022 = vmatprep.subr.mxu0 %v2758
    %3023 = vmatpush1.msra.mxu0 %v2757
    %3024 = vmatprep.subr.mxu0 %v2756
    %3025 = vmatpush1.msra.mxu0 %v2755
    %3026 = vmatprep.subr.mxu0 %v2754
    %3027 = vmatpush1.msra.mxu0 %v2753
    %3028 = vmatprep.subr.mxu0 %v2752
    %3029 = vmatpush1.msra.mxu0 %v2751
    %3030 = vmatprep.subr.mxu0 %v2750
    %3031 = vmatpush1.msra.mxu0 %v2749
    %3032 = vmatprep.subr.mxu0 %v2812
    %3033 = vmatpush2.msra.mxu0 %v2811
    %3034 = vmatprep.subr.mxu0 %v2810
    %3035 = vmatpush2.msra.mxu0 %v2809
    %3036 = vmatprep.subr.mxu0 %v2808
    %3037 = vmatpush2.msra.mxu0 %v2807
    %3038 = vmatprep.subr.mxu0 %v2806
    %3039 = vmatpush2.msra.mxu0 %v2805
    %3040 = vmatprep.subr.mxu0 %v2804
    %3041 = vmatpush2.msra.mxu0 %v2803
    %3042 = vmatprep.subr.mxu0 %v2802
    %3043 = vmatpush2.msra.mxu0 %v2801
    %3044 = vmatprep.subr.mxu0 %v2800
    %3045 = vmatpush2.msra.mxu0 %v2799
    %3046 = vmatprep.subr.mxu0 %v2798
    %3047 = vmatpush2.msra.mxu0 %v2797
    %3048 = vmatprep.subr.mxu0 %v2796
    %3049 = vmatpush2.msra.mxu0 %v2795
    %3050 = vmatprep.subr.mxu0 %v2794
    %3051 = vmatpush2.msra.mxu0 %v2793
    %3052 = vmatprep.subr.mxu0 %v2792
    %3053 = vmatpush2.msra.mxu0 %v2791
    %3054 = vmatprep.subr.mxu0 %v2790
    %3055 = vmatpush2.msra.mxu0 %v2789
    %3056 = vmatprep.subr.mxu0 %v2788
    %3057 = vmatpush2.msra.mxu0 %v2787
    %3058 = vmatprep.subr.mxu0 %v2786
    %3059 = vmatpush2.msra.mxu0 %v2785
    %3060 = vmatprep.subr.mxu0 %v2784
    %3061 = vmatpush2.msra.mxu0 %v2783
    %3062 = vmatprep.subr.mxu0 %v2782
    %3063 = vmatpush2.msra.mxu0 %v2781
    %3064 = vmatprep.mubr.f32.mxu0 %v2920
    %3065 = vmatmul.mubr.f32.gmra.mxu0 %v2919
    %v3066 = vpop.f32.mrf.mxu0
    %v3067 = vadd.f32 %v2996, %v3066
    %v3068 = vpop.f32.mrf.mxu0
    %v3069 = vadd.f32 %v2998, %v3068
    %3070 = vdwg.mxu0
    %3071 = vmatprep.subr.mxu0 %v2844
    %3072 = vmatpush1.msra.mxu0 %v2843
    %3073 = vmatprep.subr.mxu0 %v2842
    %3074 = vmatpush1.msra.mxu0 %v2841
    %3075 = vmatprep.subr.mxu0 %v2840
    %3076 = vmatpush1.msra.mxu0 %v2839
    %3077 = vmatprep.subr.mxu0 %v2838
    %3078 = vmatpush1.msra.mxu0 %v2837
    %3079 = vmatprep.subr.mxu0 %v2836
    %3080 = vmatpush1.msra.mxu0 %v2835
    %3081 = vmatprep.subr.mxu0 %v2834
    %3082 = vmatpush1.msra.mxu0 %v2833
    %3083 = vmatprep.subr.mxu0 %v2832
    %3084 = vmatpush1.msra.mxu0 %v2831
    %3085 = vmatprep.subr.mxu0 %v2830
    %3086 = vmatpush1.msra.mxu0 %v2829
    %3087 = vmatprep.subr.mxu0 %v2828
    %3088 = vmatpush1.msra.mxu0 %v2827
    %3089 = vmatprep.subr.mxu0 %v2826
    %3090 = vmatpush1.msra.mxu0 %v2825
    %3091 = vmatprep.subr.mxu0 %v2824
    %3092 = vmatpush1.msra.mxu0 %v2823
    %3093 = vmatprep.subr.mxu0 %v2822
    %3094 = vmatpush1.msra.mxu0 %v2821
    %3095 = vmatprep.subr.mxu0 %v2820
    %3096 = vmatpush1.msra.mxu0 %v2819
    %3097 = vmatprep.subr.mxu0 %v2818
    %3098 = vmatpush1.msra.mxu0 %v2817
    %3099 = vmatprep.subr.mxu0 %v2816
    %3100 = vmatpush1.msra.mxu0 %v2815
    %3101 = vmatprep.subr.mxu0 %v2814
    %3102 = vmatpush1.msra.mxu0 %v2813
    %3103 = vmatprep.subr.mxu0 %v2876
    %3104 = vmatpush2.msra.mxu0 %v2875
    %3105 = vmatprep.subr.mxu0 %v2874
    %3106 = vmatpush2.msra.mxu0 %v2873
    %3107 = vmatprep.subr.mxu0 %v2872
    %3108 = vmatpush2.msra.mxu0 %v2871
    %3109 = vmatprep.subr.mxu0 %v2870
    %3110 = vmatpush2.msra.mxu0 %v2869
    %3111 = vmatprep.subr.mxu0 %v2868
    %3112 = vmatpush2.msra.mxu0 %v2867
    %3113 = vmatprep.subr.mxu0 %v2866
    %3114 = vmatpush2.msra.mxu0 %v2865
    %3115 = vmatprep.subr.mxu0 %v2864
    %3116 = vmatpush2.msra.mxu0 %v2863
    %3117 = vmatprep.subr.mxu0 %v2862
    %3118 = vmatpush2.msra.mxu0 %v2861
    %3119 = vmatprep.subr.mxu0 %v2860
    %3120 = vmatpush2.msra.mxu0 %v2859
    %3121 = vmatprep.subr.mxu0 %v2858
    %3122 = vmatpush2.msra.mxu0 %v2857
    %3123 = vmatprep.subr.mxu0 %v2856
    %3124 = vmatpush2.msra.mxu0 %v2855
    %3125 = vmatprep.subr.mxu0 %v2854
    %3126 = vmatpush2.msra.mxu0 %v2853
    %3127 = vmatprep.subr.mxu0 %v2852
    %3128 = vmatpush2.msra.mxu0 %v2851
    %3129 = vmatprep.subr.mxu0 %v2850
    %3130 = vmatpush2.msra.mxu0 %v2849
    %3131 = vmatprep.subr.mxu0 %v2848
    %3132 = vmatpush2.msra.mxu0 %v2847
    %3133 = vmatprep.subr.mxu0 %v2846
    %3134 = vmatpush2.msra.mxu0 %v2845
    %3135 = vmatprep.mubr.f32.mxu0 %v2922
    %3136 = vmatmul.mubr.f32.gmra.mxu0 %v2921
    %v3137 = vpop.f32.mrf.mxu0
    %v3138 = vadd.f32 %v3067, %v3137
    %v3139 = vpop.f32.mrf.mxu0
    %v3140 = vadd.f32 %v3069, %v3139
    %3141 = vdwg.mxu0
    %v3144 = vcombine.low %v3138, %v3140
    %v3145 = vcombine.high %v3138, %v3140
    %v3149 = vlaneseq
    %v3150 = vshrl.u32 %v3149, 7
    %v3151 = vsub.s32 0, %v3150
    %v3152 = vrot.slane %v2877, %v3151
    %v3153 = vlaneseq
    %v3154 = vshrl.u32 %v3153, 7
    %v3155 = vsub.s32 1, %v3154
    %v3156 = vrot.slane %v2877, %v3155
    %v3157 = vcombine.low %v3152, %v3156
    %v3159 = vmul.f32 %v3144, %v3157
    %v3160 = vmul.f32 %v3145, %v3157
    %v3162 = vlaneseq
    %v3163 = vshrl.u32 %v3162, 7
    %v3164 = vsub.s32 0, %v3163
    %v3165 = vrot.slane %v2878, %v3164
    %v3166 = vlaneseq
    %v3167 = vshrl.u32 %v3166, 7
    %v3168 = vsub.s32 1, %v3167
    %v3169 = vrot.slane %v2878, %v3168
    %v3170 = vcombine.low %v3165, %v3169
    %v3172 = vadd.f32 %v3159, %v3170
    %v3173 = vadd.f32 %v3160, %v3170
    %v3174 = vmax.f32 %v3172, 0.0
    %v3175 = vmax.f32 %v3173, 0.0
    %v3178 = vcombine.high %v3174, %v3174
    %v3179 = vcombine.high %v3175, %v3175
    %v3182 = vsel %vm1525, %v3174, -inf
    %v3183 = vrot.slane %v3182, 4
    %v3184 = vmax.f32 %v3182, %v3183
    %v3185 = vrot.slane %v3184, 2
    %v3186 = vmax.f32 %v3184, %v3185
    %v3187 = vrot.slane %v3186, 1
    %v3188 = vmax.f32 %v3186, %v3187
    %v3189 = vsel %vm1525, %v3178, -inf
    %v3190 = vrot.slane %v3189, 4
    %v3191 = vmax.f32 %v3189, %v3190
    %v3192 = vrot.slane %v3191, 2
    %v3193 = vmax.f32 %v3191, %v3192
    %v3194 = vrot.slane %v3193, 1
    %v3195 = vmax.f32 %v3193, %v3194
    %v3196 = vsel %vm1525, %v3175, -inf
    %v3197 = vrot.slane %v3196, 4
    %v3198 = vmax.f32 %v3196, %v3197
    %v3199 = vrot.slane %v3198, 2
    %v3200 = vmax.f32 %v3198, %v3199
    %v3201 = vrot.slane %v3200, 1
    %v3202 = vmax.f32 %v3200, %v3201
    %v3203 = vsel %vm1525, %v3179, -inf
    %v3204 = vrot.slane %v3203, 4
    %v3205 = vmax.f32 %v3203, %v3204
    %v3206 = vrot.slane %v3205, 2
    %v3207 = vmax.f32 %v3205, %v3206
    %v3208 = vrot.slane %v3207, 1
    %v3209 = vmax.f32 %v3207, %v3208
    %v3210 = vld [vmem:[#allocation19] sm:$0xff]
    %v3211 = vld [vmem:[#allocation19 + $0x8] sm:$0xff]
    %v3212 = vld [vmem:[#allocation19 + $0x10] sm:$0xff]
    %v3213 = vld [vmem:[#allocation19 + $0x18] sm:$0xff]
    %v3214 = vld [vmem:[#allocation19 + $0x20] sm:$0xff]
    %v3215 = vld [vmem:[#allocation19 + $0x28] sm:$0xff]
    %v3216 = vld [vmem:[#allocation19 + $0x30] sm:$0xff]
    %v3217 = vld [vmem:[#allocation19 + $0x38] sm:$0xff]
    %v3218 = vld [vmem:[#allocation19 + $0x40] sm:$0xff]
    %v3219 = vld [vmem:[#allocation19 + $0x48] sm:$0xff]
    %v3220 = vld [vmem:[#allocation19 + $0x50] sm:$0xff]
    %v3221 = vld [vmem:[#allocation19 + $0x58] sm:$0xff]
    %v3222 = vld [vmem:[#allocation19 + $0x60] sm:$0xff]
    %v3223 = vld [vmem:[#allocation19 + $0x68] sm:$0xff]
    %v3224 = vld [vmem:[#allocation19 + $0x70] sm:$0xff]
    %v3225 = vld [vmem:[#allocation19 + $0x78] sm:$0xff]
    %v3226 = vld [vmem:[#allocation19 + $0x80] sm:$0xff]
    %v3227 = vld [vmem:[#allocation19 + $0x88] sm:$0xff]
    %v3228 = vld [vmem:[#allocation19 + $0x90] sm:$0xff]
    %v3229 = vld [vmem:[#allocation19 + $0x98] sm:$0xff]
    %v3230 = vld [vmem:[#allocation19 + $0xa0] sm:$0xff]
    %v3231 = vld [vmem:[#allocation19 + $0xa8] sm:$0xff]
    %v3232 = vld [vmem:[#allocation19 + $0xb0] sm:$0xff]
    %v3233 = vld [vmem:[#allocation19 + $0xb8] sm:$0xff]
    %v3234 = vld [vmem:[#allocation19 + $0xc0] sm:$0xff]
    %v3235 = vld [vmem:[#allocation19 + $0xc8] sm:$0xff]
    %v3236 = vld [vmem:[#allocation19 + $0xd0] sm:$0xff]
    %v3237 = vld [vmem:[#allocation19 + $0xd8] sm:$0xff]
    %v3238 = vld [vmem:[#allocation19 + $0xe0] sm:$0xff]
    %v3239 = vld [vmem:[#allocation19 + $0xe8] sm:$0xff]
    %v3240 = vld [vmem:[#allocation19 + $0xf0] sm:$0xff]
    %v3241 = vld [vmem:[#allocation19 + $0xf8] sm:$0xff]
    %v3242 = vld [vmem:[#allocation19 + $0x100] sm:$0xff]
    %v3243 = vld [vmem:[#allocation19 + $0x108] sm:$0xff]
    %v3244 = vld [vmem:[#allocation19 + $0x110] sm:$0xff]
    %v3245 = vld [vmem:[#allocation19 + $0x118] sm:$0xff]
    %v3246 = vld [vmem:[#allocation19 + $0x120] sm:$0xff]
    %v3247 = vld [vmem:[#allocation19 + $0x128] sm:$0xff]
    %v3248 = vld [vmem:[#allocation19 + $0x130] sm:$0xff]
    %v3249 = vld [vmem:[#allocation19 + $0x138] sm:$0xff]
    %v3250 = vld [vmem:[#allocation19 + $0x140] sm:$0xff]
    %v3251 = vld [vmem:[#allocation19 + $0x148] sm:$0xff]
    %v3252 = vld [vmem:[#allocation19 + $0x150] sm:$0xff]
    %v3253 = vld [vmem:[#allocation19 + $0x158] sm:$0xff]
    %v3254 = vld [vmem:[#allocation19 + $0x160] sm:$0xff]
    %v3255 = vld [vmem:[#allocation19 + $0x168] sm:$0xff]
    %v3256 = vld [vmem:[#allocation19 + $0x170] sm:$0xff]
    %v3257 = vld [vmem:[#allocation19 + $0x178] sm:$0xff]
    %v3258 = vld [vmem:[#allocation19 + $0x180] sm:$0xff]
    %v3259 = vld [vmem:[#allocation19 + $0x188] sm:$0xff]
    %v3260 = vld [vmem:[#allocation19 + $0x190] sm:$0xff]
    %v3261 = vld [vmem:[#allocation19 + $0x198] sm:$0xff]
    %v3262 = vld [vmem:[#allocation19 + $0x1a0] sm:$0xff]
    %v3263 = vld [vmem:[#allocation19 + $0x1a8] sm:$0xff]
    %v3264 = vld [vmem:[#allocation19 + $0x1b0] sm:$0xff]
    %v3265 = vld [vmem:[#allocation19 + $0x1b8] sm:$0xff]
    %v3266 = vld [vmem:[#allocation19 + $0x1c0] sm:$0xff]
    %v3267 = vld [vmem:[#allocation19 + $0x1c8] sm:$0xff]
    %v3268 = vld [vmem:[#allocation19 + $0x1d0] sm:$0xff]
    %v3269 = vld [vmem:[#allocation19 + $0x1d8] sm:$0xff]
    %v3270 = vld [vmem:[#allocation19 + $0x1e0] sm:$0xff]
    %v3271 = vld [vmem:[#allocation19 + $0x1e8] sm:$0xff]
    %v3272 = vld [vmem:[#allocation19 + $0x1f0] sm:$0xff]
    %v3273 = vld [vmem:[#allocation19 + $0x1f8] sm:$0xff]
    %v3274 = vld [vmem:[#allocation19 + $0x200] sm:$0xff]
    %v3275 = vld [vmem:[#allocation19 + $0x208] sm:$0xff]
    %v3276 = vld [vmem:[#allocation19 + $0x210] sm:$0xff]
    %v3277 = vld [vmem:[#allocation19 + $0x218] sm:$0xff]
    %v3278 = vld [vmem:[#allocation19 + $0x220] sm:$0xff]
    %v3279 = vld [vmem:[#allocation19 + $0x228] sm:$0xff]
    %v3280 = vld [vmem:[#allocation19 + $0x230] sm:$0xff]
    %v3281 = vld [vmem:[#allocation19 + $0x238] sm:$0xff]
    %v3282 = vld [vmem:[#allocation19 + $0x240] sm:$0xff]
    %v3283 = vld [vmem:[#allocation19 + $0x248] sm:$0xff]
    %v3284 = vld [vmem:[#allocation19 + $0x250] sm:$0xff]
    %v3285 = vld [vmem:[#allocation19 + $0x258] sm:$0xff]
    %v3286 = vld [vmem:[#allocation19 + $0x260] sm:$0xff]
    %v3287 = vld [vmem:[#allocation19 + $0x268] sm:$0xff]
    %v3288 = vld [vmem:[#allocation19 + $0x270] sm:$0xff]
    %v3289 = vld [vmem:[#allocation19 + $0x278] sm:$0xff]
    %v3290 = vld [vmem:[#allocation19 + $0x280] sm:$0xff]
    %v3291 = vld [vmem:[#allocation19 + $0x288] sm:$0xff]
    %v3292 = vld [vmem:[#allocation19 + $0x290] sm:$0xff]
    %v3293 = vld [vmem:[#allocation19 + $0x298] sm:$0xff]
    %v3294 = vld [vmem:[#allocation19 + $0x2a0] sm:$0xff]
    %v3295 = vld [vmem:[#allocation19 + $0x2a8] sm:$0xff]
    %v3296 = vld [vmem:[#allocation19 + $0x2b0] sm:$0xff]
    %v3297 = vld [vmem:[#allocation19 + $0x2b8] sm:$0xff]
    %v3298 = vld [vmem:[#allocation19 + $0x2c0] sm:$0xff]
    %v3299 = vld [vmem:[#allocation19 + $0x2c8] sm:$0xff]
    %v3300 = vld [vmem:[#allocation19 + $0x2d0] sm:$0xff]
    %v3301 = vld [vmem:[#allocation19 + $0x2d8] sm:$0xff]
    %v3302 = vld [vmem:[#allocation19 + $0x2e0] sm:$0xff]
    %v3303 = vld [vmem:[#allocation19 + $0x2e8] sm:$0xff]
    %v3304 = vld [vmem:[#allocation19 + $0x2f0] sm:$0xff]
    %v3305 = vld [vmem:[#allocation19 + $0x2f8] sm:$0xff]
    %v3306 = vld [vmem:[#allocation19 + $0x300] sm:$0xff]
    %v3307 = vld [vmem:[#allocation19 + $0x308] sm:$0xff]
    %v3308 = vld [vmem:[#allocation19 + $0x310] sm:$0xff]
    %v3309 = vld [vmem:[#allocation19 + $0x318] sm:$0xff]
    %v3310 = vld [vmem:[#allocation19 + $0x320] sm:$0xff]
    %v3311 = vld [vmem:[#allocation19 + $0x328] sm:$0xff]
    %v3312 = vld [vmem:[#allocation19 + $0x330] sm:$0xff]
    %v3313 = vld [vmem:[#allocation19 + $0x338] sm:$0xff]
    %v3314 = vld [vmem:[#allocation19 + $0x340] sm:$0xff]
    %v3315 = vld [vmem:[#allocation19 + $0x348] sm:$0xff]
    %v3316 = vld [vmem:[#allocation19 + $0x350] sm:$0xff]
    %v3317 = vld [vmem:[#allocation19 + $0x358] sm:$0xff]
    %v3318 = vld [vmem:[#allocation19 + $0x360] sm:$0xff]
    %v3319 = vld [vmem:[#allocation19 + $0x368] sm:$0xff]
    %v3320 = vld [vmem:[#allocation19 + $0x370] sm:$0xff]
    %v3321 = vld [vmem:[#allocation19 + $0x378] sm:$0xff]
    %v3322 = vld [vmem:[#allocation19 + $0x380] sm:$0xff]
    %v3323 = vld [vmem:[#allocation19 + $0x388] sm:$0xff]
    %v3324 = vld [vmem:[#allocation19 + $0x390] sm:$0xff]
    %v3325 = vld [vmem:[#allocation19 + $0x398] sm:$0xff]
    %v3326 = vld [vmem:[#allocation19 + $0x3a0] sm:$0xff]
    %v3327 = vld [vmem:[#allocation19 + $0x3a8] sm:$0xff]
    %v3328 = vld [vmem:[#allocation19 + $0x3b0] sm:$0xff]
    %v3329 = vld [vmem:[#allocation19 + $0x3b8] sm:$0xff]
    %v3330 = vld [vmem:[#allocation19 + $0x3c0] sm:$0xff]
    %v3331 = vld [vmem:[#allocation19 + $0x3c8] sm:$0xff]
    %v3332 = vld [vmem:[#allocation19 + $0x3d0] sm:$0xff]
    %v3333 = vld [vmem:[#allocation19 + $0x3d8] sm:$0xff]
    %v3334 = vld [vmem:[#allocation19 + $0x3e0] sm:$0xff]
    %v3335 = vld [vmem:[#allocation19 + $0x3e8] sm:$0xff]
    %v3336 = vld [vmem:[#allocation19 + $0x3f0] sm:$0xff]
    %v3337 = vld [vmem:[#allocation19 + $0x3f8] sm:$0xff]
    %v3338 = vld [vmem:[#allocation20] sm:$0xf]
    %v3340 = vlaneseq
    %v3341 = vshrl.u32 %v3340, 7
    %v3342 = vsub.s32 0, %v3341
    %v3343 = vrot.slane %v3338, %v3342
    %v3344 = vlaneseq
    %v3345 = vshrl.u32 %v3344, 7
    %v3346 = vsub.s32 1, %v3345
    %v3347 = vrot.slane %v3338, %v3346
    %v3348 = vlaneseq
    %v3349 = vshrl.u32 %v3348, 7
    %v3350 = vsub.s32 2, %v3349
    %v3351 = vrot.slane %v3338, %v3350
    %v3352 = vlaneseq
    %v3353 = vshrl.u32 %v3352, 7
    %v3354 = vsub.s32 3, %v3353
    %v3355 = vrot.slane %v3338, %v3354
    %vm3364 = vcmask 1041409
    %v3365 = vsel %vm3364, %v3202, %v3188
    %v3366 = vsel %vm3364, %v3209, %v3195
    %3369 = vmatprep.subr.mxu0 %v3271
    %3370 = vmatpush1.msra.mxu0 %v3270
    %3371 = vmatprep.subr.mxu0 %v3267
    %3372 = vmatpush1.msra.mxu0 %v3266
    %3373 = vmatprep.subr.mxu0 %v3263
    %3374 = vmatpush1.msra.mxu0 %v3262
    %3375 = vmatprep.subr.mxu0 %v3259
    %3376 = vmatpush1.msra.mxu0 %v3258
    %3377 = vmatprep.subr.mxu0 %v3255
    %3378 = vmatpush1.msra.mxu0 %v3254
    %3379 = vmatprep.subr.mxu0 %v3251
    %3380 = vmatpush1.msra.mxu0 %v3250
    %3381 = vmatprep.subr.mxu0 %v3247
    %3382 = vmatpush1.msra.mxu0 %v3246
    %3383 = vmatprep.subr.mxu0 %v3243
    %3384 = vmatpush1.msra.mxu0 %v3242
    %3385 = vmatprep.subr.mxu0 %v3239
    %3386 = vmatpush1.msra.mxu0 %v3238
    %3387 = vmatprep.subr.mxu0 %v3235
    %3388 = vmatpush1.msra.mxu0 %v3234
    %3389 = vmatprep.subr.mxu0 %v3231
    %3390 = vmatpush1.msra.mxu0 %v3230
    %3391 = vmatprep.subr.mxu0 %v3227
    %3392 = vmatpush1.msra.mxu0 %v3226
    %3393 = vmatprep.subr.mxu0 %v3223
    %3394 = vmatpush1.msra.mxu0 %v3222
    %3395 = vmatprep.subr.mxu0 %v3219
    %3396 = vmatpush1.msra.mxu0 %v3218
    %3397 = vmatprep.subr.mxu0 %v3215
    %3398 = vmatpush1.msra.mxu0 %v3214
    %3399 = vmatprep.subr.mxu0 %v3211
    %3400 = vmatpush1.msra.mxu0 %v3210
    %3401 = vmatprep.subr.mxu0 %v3335
    %3402 = vmatpush2.msra.mxu0 %v3334
    %3403 = vmatprep.subr.mxu0 %v3331
    %3404 = vmatpush2.msra.mxu0 %v3330
    %3405 = vmatprep.subr.mxu0 %v3327
    %3406 = vmatpush2.msra.mxu0 %v3326
    %3407 = vmatprep.subr.mxu0 %v3323
    %3408 = vmatpush2.msra.mxu0 %v3322
    %3409 = vmatprep.subr.mxu0 %v3319
    %3410 = vmatpush2.msra.mxu0 %v3318
    %3411 = vmatprep.subr.mxu0 %v3315
    %3412 = vmatpush2.msra.mxu0 %v3314
    %3413 = vmatprep.subr.mxu0 %v3311
    %3414 = vmatpush2.msra.mxu0 %v3310
    %3415 = vmatprep.subr.mxu0 %v3307
    %3416 = vmatpush2.msra.mxu0 %v3306
    %3417 = vmatprep.subr.mxu0 %v3303
    %3418 = vmatpush2.msra.mxu0 %v3302
    %3419 = vmatprep.subr.mxu0 %v3299
    %3420 = vmatpush2.msra.mxu0 %v3298
    %3421 = vmatprep.subr.mxu0 %v3295
    %3422 = vmatpush2.msra.mxu0 %v3294
    %3423 = vmatprep.subr.mxu0 %v3291
    %3424 = vmatpush2.msra.mxu0 %v3290
    %3425 = vmatprep.subr.mxu0 %v3287
    %3426 = vmatpush2.msra.mxu0 %v3286
    %3427 = vmatprep.subr.mxu0 %v3283
    %3428 = vmatpush2.msra.mxu0 %v3282
    %3429 = vmatprep.subr.mxu0 %v3279
    %3430 = vmatpush2.msra.mxu0 %v3278
    %3431 = vmatprep.subr.mxu0 %v3275
    %3432 = vmatpush2.msra.mxu0 %v3274
    %3433 = vmatprep.mubr.f32.mxu0 %v3366
    %3434 = vmatmul.mubr.f32.gmra.mxu0 %v3365
    %v3435 = vpop.f32.mrf.mxu0
    %v3436 = vadd.f32 %v3343, %v3435
    %v3437 = vpop.f32.mrf.mxu0
    %v3438 = vadd.f32 %v3347, %v3437
    %3439 = vdwg.mxu0
    %3440 = vmatprep.subr.mxu0 %v3273
    %3441 = vmatpush1.msra.mxu0 %v3272
    %3442 = vmatprep.subr.mxu0 %v3269
    %3443 = vmatpush1.msra.mxu0 %v3268
    %3444 = vmatprep.subr.mxu0 %v3265
    %3445 = vmatpush1.msra.mxu0 %v3264
    %3446 = vmatprep.subr.mxu0 %v3261
    %3447 = vmatpush1.msra.mxu0 %v3260
    %3448 = vmatprep.subr.mxu0 %v3257
    %3449 = vmatpush1.msra.mxu0 %v3256
    %3450 = vmatprep.subr.mxu0 %v3253
    %3451 = vmatpush1.msra.mxu0 %v3252
    %3452 = vmatprep.subr.mxu0 %v3249
    %3453 = vmatpush1.msra.mxu0 %v3248
    %3454 = vmatprep.subr.mxu0 %v3245
    %3455 = vmatpush1.msra.mxu0 %v3244
    %3456 = vmatprep.subr.mxu0 %v3241
    %3457 = vmatpush1.msra.mxu0 %v3240
    %3458 = vmatprep.subr.mxu0 %v3237
    %3459 = vmatpush1.msra.mxu0 %v3236
    %3460 = vmatprep.subr.mxu0 %v3233
    %3461 = vmatpush1.msra.mxu0 %v3232
    %3462 = vmatprep.subr.mxu0 %v3229
    %3463 = vmatpush1.msra.mxu0 %v3228
    %3464 = vmatprep.subr.mxu0 %v3225
    %3465 = vmatpush1.msra.mxu0 %v3224
    %3466 = vmatprep.subr.mxu0 %v3221
    %3467 = vmatpush1.msra.mxu0 %v3220
    %3468 = vmatprep.subr.mxu0 %v3217
    %3469 = vmatpush1.msra.mxu0 %v3216
    %3470 = vmatprep.subr.mxu0 %v3213
    %3471 = vmatpush1.msra.mxu0 %v3212
    %3472 = vmatprep.subr.mxu0 %v3337
    %3473 = vmatpush2.msra.mxu0 %v3336
    %3474 = vmatprep.subr.mxu0 %v3333
    %3475 = vmatpush2.msra.mxu0 %v3332
    %3476 = vmatprep.subr.mxu0 %v3329
    %3477 = vmatpush2.msra.mxu0 %v3328
    %3478 = vmatprep.subr.mxu0 %v3325
    %3479 = vmatpush2.msra.mxu0 %v3324
    %3480 = vmatprep.subr.mxu0 %v3321
    %3481 = vmatpush2.msra.mxu0 %v3320
    %3482 = vmatprep.subr.mxu0 %v3317
    %3483 = vmatpush2.msra.mxu0 %v3316
    %3484 = vmatprep.subr.mxu0 %v3313
    %3485 = vmatpush2.msra.mxu0 %v3312
    %3486 = vmatprep.subr.mxu0 %v3309
    %3487 = vmatpush2.msra.mxu0 %v3308
    %3488 = vmatprep.subr.mxu0 %v3305
    %3489 = vmatpush2.msra.mxu0 %v3304
    %3490 = vmatprep.subr.mxu0 %v3301
    %3491 = vmatpush2.msra.mxu0 %v3300
    %3492 = vmatprep.subr.mxu0 %v3297
    %3493 = vmatpush2.msra.mxu0 %v3296
    %3494 = vmatprep.subr.mxu0 %v3293
    %3495 = vmatpush2.msra.mxu0 %v3292
    %3496 = vmatprep.subr.mxu0 %v3289
    %3497 = vmatpush2.msra.mxu0 %v3288
    %3498 = vmatprep.subr.mxu0 %v3285
    %3499 = vmatpush2.msra.mxu0 %v3284
    %3500 = vmatprep.subr.mxu0 %v3281
    %3501 = vmatpush2.msra.mxu0 %v3280
    %3502 = vmatprep.subr.mxu0 %v3277
    %3503 = vmatpush2.msra.mxu0 %v3276
    %3504 = vmatprep.mubr.f32.mxu0 %v3366
    %3505 = vmatmul.mubr.f32.gmra.mxu0 %v3365
    %v3506 = vpop.f32.mrf.mxu0
    %v3507 = vadd.f32 %v3351, %v3506
    %v3508 = vpop.f32.mrf.mxu0
    %v3509 = vadd.f32 %v3355, %v3508
    %3510 = vdwg.mxu0
    %v3511 = vmax.f32 %v3436, 0.0
    %v3512 = vmax.f32 %v3438, 0.0
    %v3513 = vmax.f32 %v3507, 0.0
    %v3514 = vmax.f32 %v3509, 0.0
    %v3515 = vld [vmem:[#allocation22] sm:$0xff]
    %v3516 = vld [vmem:[#allocation22 + $0x8] sm:$0xff]
    %v3517 = vld [vmem:[#allocation22 + $0x10] sm:$0xff]
    %v3518 = vld [vmem:[#allocation22 + $0x18] sm:$0xff]
    %v3519 = vld [vmem:[#allocation22 + $0x20] sm:$0xff]
    %v3520 = vld [vmem:[#allocation22 + $0x28] sm:$0xff]
    %v3521 = vld [vmem:[#allocation22 + $0x30] sm:$0xff]
    %v3522 = vld [vmem:[#allocation22 + $0x38] sm:$0xff]
    %v3523 = vld [vmem:[#allocation22 + $0x40] sm:$0xff]
    %v3524 = vld [vmem:[#allocation22 + $0x48] sm:$0xff]
    %v3525 = vld [vmem:[#allocation22 + $0x50] sm:$0xff]
    %v3526 = vld [vmem:[#allocation22 + $0x58] sm:$0xff]
    %v3527 = vld [vmem:[#allocation22 + $0x60] sm:$0xff]
    %v3528 = vld [vmem:[#allocation22 + $0x68] sm:$0xff]
    %v3529 = vld [vmem:[#allocation22 + $0x70] sm:$0xff]
    %v3530 = vld [vmem:[#allocation22 + $0x78] sm:$0xff]
    %v3531 = vld [vmem:[#allocation22 + $0x80] sm:$0xff]
    %v3532 = vld [vmem:[#allocation22 + $0x88] sm:$0xff]
    %v3533 = vld [vmem:[#allocation22 + $0x90] sm:$0xff]
    %v3534 = vld [vmem:[#allocation22 + $0x98] sm:$0xff]
    %v3535 = vld [vmem:[#allocation22 + $0xa0] sm:$0xff]
    %v3536 = vld [vmem:[#allocation22 + $0xa8] sm:$0xff]
    %v3537 = vld [vmem:[#allocation22 + $0xb0] sm:$0xff]
    %v3538 = vld [vmem:[#allocation22 + $0xb8] sm:$0xff]
    %v3539 = vld [vmem:[#allocation22 + $0xc0] sm:$0xff]
    %v3540 = vld [vmem:[#allocation22 + $0xc8] sm:$0xff]
    %v3541 = vld [vmem:[#allocation22 + $0xd0] sm:$0xff]
    %v3542 = vld [vmem:[#allocation22 + $0xd8] sm:$0xff]
    %v3543 = vld [vmem:[#allocation22 + $0xe0] sm:$0xff]
    %v3544 = vld [vmem:[#allocation22 + $0xe8] sm:$0xff]
    %v3545 = vld [vmem:[#allocation22 + $0xf0] sm:$0xff]
    %v3546 = vld [vmem:[#allocation22 + $0xf8] sm:$0xff]
    %v3547 = vld [vmem:[#allocation22 + $0x100] sm:$0xff]
    %v3548 = vld [vmem:[#allocation22 + $0x108] sm:$0xff]
    %v3549 = vld [vmem:[#allocation22 + $0x110] sm:$0xff]
    %v3550 = vld [vmem:[#allocation22 + $0x118] sm:$0xff]
    %v3551 = vld [vmem:[#allocation22 + $0x120] sm:$0xff]
    %v3552 = vld [vmem:[#allocation22 + $0x128] sm:$0xff]
    %v3553 = vld [vmem:[#allocation22 + $0x130] sm:$0xff]
    %v3554 = vld [vmem:[#allocation22 + $0x138] sm:$0xff]
    %v3555 = vld [vmem:[#allocation22 + $0x140] sm:$0xff]
    %v3556 = vld [vmem:[#allocation22 + $0x148] sm:$0xff]
    %v3557 = vld [vmem:[#allocation22 + $0x150] sm:$0xff]
    %v3558 = vld [vmem:[#allocation22 + $0x158] sm:$0xff]
    %v3559 = vld [vmem:[#allocation22 + $0x160] sm:$0xff]
    %v3560 = vld [vmem:[#allocation22 + $0x168] sm:$0xff]
    %v3561 = vld [vmem:[#allocation22 + $0x170] sm:$0xff]
    %v3562 = vld [vmem:[#allocation22 + $0x178] sm:$0xff]
    %v3563 = vld [vmem:[#allocation22 + $0x180] sm:$0xff]
    %v3564 = vld [vmem:[#allocation22 + $0x188] sm:$0xff]
    %v3565 = vld [vmem:[#allocation22 + $0x190] sm:$0xff]
    %v3566 = vld [vmem:[#allocation22 + $0x198] sm:$0xff]
    %v3567 = vld [vmem:[#allocation22 + $0x1a0] sm:$0xff]
    %v3568 = vld [vmem:[#allocation22 + $0x1a8] sm:$0xff]
    %v3569 = vld [vmem:[#allocation22 + $0x1b0] sm:$0xff]
    %v3570 = vld [vmem:[#allocation22 + $0x1b8] sm:$0xff]
    %v3571 = vld [vmem:[#allocation22 + $0x1c0] sm:$0xff]
    %v3572 = vld [vmem:[#allocation22 + $0x1c8] sm:$0xff]
    %v3573 = vld [vmem:[#allocation22 + $0x1d0] sm:$0xff]
    %v3574 = vld [vmem:[#allocation22 + $0x1d8] sm:$0xff]
    %v3575 = vld [vmem:[#allocation22 + $0x1e0] sm:$0xff]
    %v3576 = vld [vmem:[#allocation22 + $0x1e8] sm:$0xff]
    %v3577 = vld [vmem:[#allocation22 + $0x1f0] sm:$0xff]
    %v3578 = vld [vmem:[#allocation22 + $0x1f8] sm:$0xff]
    %v3579 = vld [vmem:[#allocation22 + $0x200] sm:$0xff]
    %v3580 = vld [vmem:[#allocation22 + $0x208] sm:$0xff]
    %v3581 = vld [vmem:[#allocation22 + $0x210] sm:$0xff]
    %v3582 = vld [vmem:[#allocation22 + $0x218] sm:$0xff]
    %v3583 = vld [vmem:[#allocation22 + $0x220] sm:$0xff]
    %v3584 = vld [vmem:[#allocation22 + $0x228] sm:$0xff]
    %v3585 = vld [vmem:[#allocation22 + $0x230] sm:$0xff]
    %v3586 = vld [vmem:[#allocation22 + $0x238] sm:$0xff]
    %v3587 = vld [vmem:[#allocation22 + $0x240] sm:$0xff]
    %v3588 = vld [vmem:[#allocation22 + $0x248] sm:$0xff]
    %v3589 = vld [vmem:[#allocation22 + $0x250] sm:$0xff]
    %v3590 = vld [vmem:[#allocation22 + $0x258] sm:$0xff]
    %v3591 = vld [vmem:[#allocation22 + $0x260] sm:$0xff]
    %v3592 = vld [vmem:[#allocation22 + $0x268] sm:$0xff]
    %v3593 = vld [vmem:[#allocation22 + $0x270] sm:$0xff]
    %v3594 = vld [vmem:[#allocation22 + $0x278] sm:$0xff]
    %v3595 = vld [vmem:[#allocation22 + $0x280] sm:$0xff]
    %v3596 = vld [vmem:[#allocation22 + $0x288] sm:$0xff]
    %v3597 = vld [vmem:[#allocation22 + $0x290] sm:$0xff]
    %v3598 = vld [vmem:[#allocation22 + $0x298] sm:$0xff]
    %v3599 = vld [vmem:[#allocation22 + $0x2a0] sm:$0xff]
    %v3600 = vld [vmem:[#allocation22 + $0x2a8] sm:$0xff]
    %v3601 = vld [vmem:[#allocation22 + $0x2b0] sm:$0xff]
    %v3602 = vld [vmem:[#allocation22 + $0x2b8] sm:$0xff]
    %v3603 = vld [vmem:[#allocation22 + $0x2c0] sm:$0xff]
    %v3604 = vld [vmem:[#allocation22 + $0x2c8] sm:$0xff]
    %v3605 = vld [vmem:[#allocation22 + $0x2d0] sm:$0xff]
    %v3606 = vld [vmem:[#allocation22 + $0x2d8] sm:$0xff]
    %v3607 = vld [vmem:[#allocation22 + $0x2e0] sm:$0xff]
    %v3608 = vld [vmem:[#allocation22 + $0x2e8] sm:$0xff]
    %v3609 = vld [vmem:[#allocation22 + $0x2f0] sm:$0xff]
    %v3610 = vld [vmem:[#allocation22 + $0x2f8] sm:$0xff]
    %v3611 = vld [vmem:[#allocation22 + $0x300] sm:$0xff]
    %v3612 = vld [vmem:[#allocation22 + $0x308] sm:$0xff]
    %v3613 = vld [vmem:[#allocation22 + $0x310] sm:$0xff]
    %v3614 = vld [vmem:[#allocation22 + $0x318] sm:$0xff]
    %v3615 = vld [vmem:[#allocation22 + $0x320] sm:$0xff]
    %v3616 = vld [vmem:[#allocation22 + $0x328] sm:$0xff]
    %v3617 = vld [vmem:[#allocation22 + $0x330] sm:$0xff]
    %v3618 = vld [vmem:[#allocation22 + $0x338] sm:$0xff]
    %v3619 = vld [vmem:[#allocation22 + $0x340] sm:$0xff]
    %v3620 = vld [vmem:[#allocation22 + $0x348] sm:$0xff]
    %v3621 = vld [vmem:[#allocation22 + $0x350] sm:$0xff]
    %v3622 = vld [vmem:[#allocation22 + $0x358] sm:$0xff]
    %v3623 = vld [vmem:[#allocation22 + $0x360] sm:$0xff]
    %v3624 = vld [vmem:[#allocation22 + $0x368] sm:$0xff]
    %v3625 = vld [vmem:[#allocation22 + $0x370] sm:$0xff]
    %v3626 = vld [vmem:[#allocation22 + $0x378] sm:$0xff]
    %v3627 = vld [vmem:[#allocation22 + $0x380] sm:$0xff]
    %v3628 = vld [vmem:[#allocation22 + $0x388] sm:$0xff]
    %v3629 = vld [vmem:[#allocation22 + $0x390] sm:$0xff]
    %v3630 = vld [vmem:[#allocation22 + $0x398] sm:$0xff]
    %v3631 = vld [vmem:[#allocation22 + $0x3a0] sm:$0xff]
    %v3632 = vld [vmem:[#allocation22 + $0x3a8] sm:$0xff]
    %v3633 = vld [vmem:[#allocation22 + $0x3b0] sm:$0xff]
    %v3634 = vld [vmem:[#allocation22 + $0x3b8] sm:$0xff]
    %v3635 = vld [vmem:[#allocation22 + $0x3c0] sm:$0xff]
    %v3636 = vld [vmem:[#allocation22 + $0x3c8] sm:$0xff]
    %v3637 = vld [vmem:[#allocation22 + $0x3d0] sm:$0xff]
    %v3638 = vld [vmem:[#allocation22 + $0x3d8] sm:$0xff]
    %v3639 = vld [vmem:[#allocation22 + $0x3e0] sm:$0xff]
    %v3640 = vld [vmem:[#allocation22 + $0x3e8] sm:$0xff]
    %v3641 = vld [vmem:[#allocation22 + $0x3f0] sm:$0xff]
    %v3642 = vld [vmem:[#allocation22 + $0x3f8] sm:$0xff]
    %v3643 = vld [vmem:[#allocation23] sm:$0x3]
    %v3645 = vlaneseq
    %v3646 = vshrl.u32 %v3645, 7
    %v3647 = vsub.s32 0, %v3646
    %v3648 = vrot.slane %v3643, %v3647
    %v3649 = vlaneseq
    %v3650 = vshrl.u32 %v3649, 7
    %v3651 = vsub.s32 1, %v3650
    %v3652 = vrot.slane %v3643, %v3651
    %3655 = vmatprep.subr.mxu0 %v3546
    %3656 = vmatpush1.msra.mxu0 %v3545
    %3657 = vmatprep.subr.mxu0 %v3544
    %3658 = vmatpush1.msra.mxu0 %v3543
    %3659 = vmatprep.subr.mxu0 %v3542
    %3660 = vmatpush1.msra.mxu0 %v3541
    %3661 = vmatprep.subr.mxu0 %v3540
    %3662 = vmatpush1.msra.mxu0 %v3539
    %3663 = vmatprep.subr.mxu0 %v3538
    %3664 = vmatpush1.msra.mxu0 %v3537
    %3665 = vmatprep.subr.mxu0 %v3536
    %3666 = vmatpush1.msra.mxu0 %v3535
    %3667 = vmatprep.subr.mxu0 %v3534
    %3668 = vmatpush1.msra.mxu0 %v3533
    %3669 = vmatprep.subr.mxu0 %v3532
    %3670 = vmatpush1.msra.mxu0 %v3531
    %3671 = vmatprep.subr.mxu0 %v3530
    %3672 = vmatpush1.msra.mxu0 %v3529
    %3673 = vmatprep.subr.mxu0 %v3528
    %3674 = vmatpush1.msra.mxu0 %v3527
    %3675 = vmatprep.subr.mxu0 %v3526
    %3676 = vmatpush1.msra.mxu0 %v3525
    %3677 = vmatprep.subr.mxu0 %v3524
    %3678 = vmatpush1.msra.mxu0 %v3523
    %3679 = vmatprep.subr.mxu0 %v3522
    %3680 = vmatpush1.msra.mxu0 %v3521
    %3681 = vmatprep.subr.mxu0 %v3520
    %3682 = vmatpush1.msra.mxu0 %v3519
    %3683 = vmatprep.subr.mxu0 %v3518
    %3684 = vmatpush1.msra.mxu0 %v3517
    %3685 = vmatprep.subr.mxu0 %v3516
    %3686 = vmatpush1.msra.mxu0 %v3515
    %3687 = vmatprep.subr.mxu0 %v3578
    %3688 = vmatpush2.msra.mxu0 %v3577
    %3689 = vmatprep.subr.mxu0 %v3576
    %3690 = vmatpush2.msra.mxu0 %v3575
    %3691 = vmatprep.subr.mxu0 %v3574
    %3692 = vmatpush2.msra.mxu0 %v3573
    %3693 = vmatprep.subr.mxu0 %v3572
    %3694 = vmatpush2.msra.mxu0 %v3571
    %3695 = vmatprep.subr.mxu0 %v3570
    %3696 = vmatpush2.msra.mxu0 %v3569
    %3697 = vmatprep.subr.mxu0 %v3568
    %3698 = vmatpush2.msra.mxu0 %v3567
    %3699 = vmatprep.subr.mxu0 %v3566
    %3700 = vmatpush2.msra.mxu0 %v3565
    %3701 = vmatprep.subr.mxu0 %v3564
    %3702 = vmatpush2.msra.mxu0 %v3563
    %3703 = vmatprep.subr.mxu0 %v3562
    %3704 = vmatpush2.msra.mxu0 %v3561
    %3705 = vmatprep.subr.mxu0 %v3560
    %3706 = vmatpush2.msra.mxu0 %v3559
    %3707 = vmatprep.subr.mxu0 %v3558
    %3708 = vmatpush2.msra.mxu0 %v3557
    %3709 = vmatprep.subr.mxu0 %v3556
    %3710 = vmatpush2.msra.mxu0 %v3555
    %3711 = vmatprep.subr.mxu0 %v3554
    %3712 = vmatpush2.msra.mxu0 %v3553
    %3713 = vmatprep.subr.mxu0 %v3552
    %3714 = vmatpush2.msra.mxu0 %v3551
    %3715 = vmatprep.subr.mxu0 %v3550
    %3716 = vmatpush2.msra.mxu0 %v3549
    %3717 = vmatprep.subr.mxu0 %v3548
    %3718 = vmatpush2.msra.mxu0 %v3547
    %3719 = vmatprep.mubr.f32.mxu0 %v3512
    %3720 = vmatmul.mubr.f32.gmra.mxu0 %v3511
    %v3721 = vpop.f32.mrf.mxu0
    %v3722 = vadd.f32 %v3648, %v3721
    %v3723 = vpop.f32.mrf.mxu0
    %v3724 = vadd.f32 %v3652, %v3723
    %3725 = vdwg.mxu0
    %3726 = vmatprep.subr.mxu0 %v3610
    %3727 = vmatpush1.msra.mxu0 %v3609
    %3728 = vmatprep.subr.mxu0 %v3608
    %3729 = vmatpush1.msra.mxu0 %v3607
    %3730 = vmatprep.subr.mxu0 %v3606
    %3731 = vmatpush1.msra.mxu0 %v3605
    %3732 = vmatprep.subr.mxu0 %v3604
    %3733 = vmatpush1.msra.mxu0 %v3603
    %3734 = vmatprep.subr.mxu0 %v3602
    %3735 = vmatpush1.msra.mxu0 %v3601
    %3736 = vmatprep.subr.mxu0 %v3600
    %3737 = vmatpush1.msra.mxu0 %v3599
    %3738 = vmatprep.subr.mxu0 %v3598
    %3739 = vmatpush1.msra.mxu0 %v3597
    %3740 = vmatprep.subr.mxu0 %v3596
    %3741 = vmatpush1.msra.mxu0 %v3595
    %3742 = vmatprep.subr.mxu0 %v3594
    %3743 = vmatpush1.msra.mxu0 %v3593
    %3744 = vmatprep.subr.mxu0 %v3592
    %3745 = vmatpush1.msra.mxu0 %v3591
    %3746 = vmatprep.subr.mxu0 %v3590
    %3747 = vmatpush1.msra.mxu0 %v3589
    %3748 = vmatprep.subr.mxu0 %v3588
    %3749 = vmatpush1.msra.mxu0 %v3587
    %3750 = vmatprep.subr.mxu0 %v3586
    %3751 = vmatpush1.msra.mxu0 %v3585
    %3752 = vmatprep.subr.mxu0 %v3584
    %3753 = vmatpush1.msra.mxu0 %v3583
    %3754 = vmatprep.subr.mxu0 %v3582
    %3755 = vmatpush1.msra.mxu0 %v3581
    %3756 = vmatprep.subr.mxu0 %v3580
    %3757 = vmatpush1.msra.mxu0 %v3579
    %3758 = vmatprep.subr.mxu0 %v3642
    %3759 = vmatpush2.msra.mxu0 %v3641
    %3760 = vmatprep.subr.mxu0 %v3640
    %3761 = vmatpush2.msra.mxu0 %v3639
    %3762 = vmatprep.subr.mxu0 %v3638
    %3763 = vmatpush2.msra.mxu0 %v3637
    %3764 = vmatprep.subr.mxu0 %v3636
    %3765 = vmatpush2.msra.mxu0 %v3635
    %3766 = vmatprep.subr.mxu0 %v3634
    %3767 = vmatpush2.msra.mxu0 %v3633
    %3768 = vmatprep.subr.mxu0 %v3632
    %3769 = vmatpush2.msra.mxu0 %v3631
    %3770 = vmatprep.subr.mxu0 %v3630
    %3771 = vmatpush2.msra.mxu0 %v3629
    %3772 = vmatprep.subr.mxu0 %v3628
    %3773 = vmatpush2.msra.mxu0 %v3627
    %3774 = vmatprep.subr.mxu0 %v3626
    %3775 = vmatpush2.msra.mxu0 %v3625
    %3776 = vmatprep.subr.mxu0 %v3624
    %3777 = vmatpush2.msra.mxu0 %v3623
    %3778 = vmatprep.subr.mxu0 %v3622
    %3779 = vmatpush2.msra.mxu0 %v3621
    %3780 = vmatprep.subr.mxu0 %v3620
    %3781 = vmatpush2.msra.mxu0 %v3619
    %3782 = vmatprep.subr.mxu0 %v3618
    %3783 = vmatpush2.msra.mxu0 %v3617
    %3784 = vmatprep.subr.mxu0 %v3616
    %3785 = vmatpush2.msra.mxu0 %v3615
    %3786 = vmatprep.subr.mxu0 %v3614
    %3787 = vmatpush2.msra.mxu0 %v3613
    %3788 = vmatprep.subr.mxu0 %v3612
    %3789 = vmatpush2.msra.mxu0 %v3611
    %3790 = vmatprep.mubr.f32.mxu0 %v3514
    %3791 = vmatmul.mubr.f32.gmra.mxu0 %v3513
    %v3792 = vpop.f32.mrf.mxu0
    %v3793 = vadd.f32 %v3722, %v3792
    %v3794 = vpop.f32.mrf.mxu0
    %v3795 = vadd.f32 %v3724, %v3794
    %3796 = vdwg.mxu0
    %v3797 = vmax.f32 %v3793, 0.0
    %v3798 = vmax.f32 %v3795, 0.0
    %v3799 = vld [vmem:[#allocation25] sm:$0xff]
    %v3800 = vld [vmem:[#allocation25 + $0x8] sm:$0xff]
    %v3801 = vld [vmem:[#allocation25 + $0x10] sm:$0xff]
    %v3802 = vld [vmem:[#allocation25 + $0x18] sm:$0xff]
    %v3803 = vld [vmem:[#allocation25 + $0x20] sm:$0xff]
    %v3804 = vld [vmem:[#allocation25 + $0x28] sm:$0xff]
    %v3805 = vld [vmem:[#allocation25 + $0x30] sm:$0xff]
    %v3806 = vld [vmem:[#allocation25 + $0x38] sm:$0xff]
    %v3807 = vld [vmem:[#allocation25 + $0x40] sm:$0xff]
    %v3808 = vld [vmem:[#allocation25 + $0x48] sm:$0xff]
    %v3809 = vld [vmem:[#allocation25 + $0x50] sm:$0xff]
    %v3810 = vld [vmem:[#allocation25 + $0x58] sm:$0xff]
    %v3811 = vld [vmem:[#allocation25 + $0x60] sm:$0xff]
    %v3812 = vld [vmem:[#allocation25 + $0x68] sm:$0xff]
    %v3813 = vld [vmem:[#allocation25 + $0x70] sm:$0xff]
    %v3814 = vld [vmem:[#allocation25 + $0x78] sm:$0xff]
    %v3815 = vld [vmem:[#allocation25 + $0x80] sm:$0xff]
    %v3816 = vld [vmem:[#allocation25 + $0x88] sm:$0xff]
    %v3817 = vld [vmem:[#allocation25 + $0x90] sm:$0xff]
    %v3818 = vld [vmem:[#allocation25 + $0x98] sm:$0xff]
    %v3819 = vld [vmem:[#allocation25 + $0xa0] sm:$0xff]
    %v3820 = vld [vmem:[#allocation25 + $0xa8] sm:$0xff]
    %v3821 = vld [vmem:[#allocation25 + $0xb0] sm:$0xff]
    %v3822 = vld [vmem:[#allocation25 + $0xb8] sm:$0xff]
    %v3823 = vld [vmem:[#allocation25 + $0xc0] sm:$0xff]
    %v3824 = vld [vmem:[#allocation25 + $0xc8] sm:$0xff]
    %v3825 = vld [vmem:[#allocation25 + $0xd0] sm:$0xff]
    %v3826 = vld [vmem:[#allocation25 + $0xd8] sm:$0xff]
    %v3827 = vld [vmem:[#allocation25 + $0xe0] sm:$0xff]
    %v3828 = vld [vmem:[#allocation25 + $0xe8] sm:$0xff]
    %v3829 = vld [vmem:[#allocation25 + $0xf0] sm:$0xff]
    %v3830 = vld [vmem:[#allocation25 + $0xf8] sm:$0xff]
    %v3831 = vld [vmem:[#allocation26] sm:$0x1]
    %v3833 = vlaneseq
    %v3834 = vshrl.u32 %v3833, 7
    %v3835 = vsub.s32 0, %v3834
    %v3836 = vrot.slane %v3831, %v3835
    %3838 = vmatprep.subr.mxu0 0.0
    %3839 = vmatpush1.msra.mxu0 %v3814
    %3840 = vmatprep.subr.mxu0 0.0
    %3841 = vmatpush1.msra.mxu0 %v3813
    %3842 = vmatprep.subr.mxu0 0.0
    %3843 = vmatpush1.msra.mxu0 %v3812
    %3844 = vmatprep.subr.mxu0 0.0
    %3845 = vmatpush1.msra.mxu0 %v3811
    %3846 = vmatprep.subr.mxu0 0.0
    %3847 = vmatpush1.msra.mxu0 %v3810
    %3848 = vmatprep.subr.mxu0 0.0
    %3849 = vmatpush1.msra.mxu0 %v3809
    %3850 = vmatprep.subr.mxu0 0.0
    %3851 = vmatpush1.msra.mxu0 %v3808
    %3852 = vmatprep.subr.mxu0 0.0
    %3853 = vmatpush1.msra.mxu0 %v3807
    %3854 = vmatprep.subr.mxu0 0.0
    %3855 = vmatpush1.msra.mxu0 %v3806
    %3856 = vmatprep.subr.mxu0 0.0
    %3857 = vmatpush1.msra.mxu0 %v3805
    %3858 = vmatprep.subr.mxu0 0.0
    %3859 = vmatpush1.msra.mxu0 %v3804
    %3860 = vmatprep.subr.mxu0 0.0
    %3861 = vmatpush1.msra.mxu0 %v3803
    %3862 = vmatprep.subr.mxu0 0.0
    %3863 = vmatpush1.msra.mxu0 %v3802
    %3864 = vmatprep.subr.mxu0 0.0
    %3865 = vmatpush1.msra.mxu0 %v3801
    %3866 = vmatprep.subr.mxu0 0.0
    %3867 = vmatpush1.msra.mxu0 %v3800
    %3868 = vmatprep.subr.mxu0 0.0
    %3869 = vmatpush1.msra.mxu0 %v3799
    %3870 = vmatprep.subr.mxu0 0.0
    %3871 = vmatpush2.msra.mxu0 %v3830
    %3872 = vmatprep.subr.mxu0 0.0
    %3873 = vmatpush2.msra.mxu0 %v3829
    %3874 = vmatprep.subr.mxu0 0.0
    %3875 = vmatpush2.msra.mxu0 %v3828
    %3876 = vmatprep.subr.mxu0 0.0
    %3877 = vmatpush2.msra.mxu0 %v3827
    %3878 = vmatprep.subr.mxu0 0.0
    %3879 = vmatpush2.msra.mxu0 %v3826
    %3880 = vmatprep.subr.mxu0 0.0
    %3881 = vmatpush2.msra.mxu0 %v3825
    %3882 = vmatprep.subr.mxu0 0.0
    %3883 = vmatpush2.msra.mxu0 %v3824
    %3884 = vmatprep.subr.mxu0 0.0
    %3885 = vmatpush2.msra.mxu0 %v3823
    %3886 = vmatprep.subr.mxu0 0.0
    %3887 = vmatpush2.msra.mxu0 %v3822
    %3888 = vmatprep.subr.mxu0 0.0
    %3889 = vmatpush2.msra.mxu0 %v3821
    %3890 = vmatprep.subr.mxu0 0.0
    %3891 = vmatpush2.msra.mxu0 %v3820
    %3892 = vmatprep.subr.mxu0 0.0
    %3893 = vmatpush2.msra.mxu0 %v3819
    %3894 = vmatprep.subr.mxu0 0.0
    %3895 = vmatpush2.msra.mxu0 %v3818
    %3896 = vmatprep.subr.mxu0 0.0
    %3897 = vmatpush2.msra.mxu0 %v3817
    %3898 = vmatprep.subr.mxu0 0.0
    %3899 = vmatpush2.msra.mxu0 %v3816
    %3900 = vmatprep.subr.mxu0 0.0
    %3901 = vmatpush2.msra.mxu0 %v3815
    %3902 = vmatprep.mubr.f32.mxu0 %v3798
    %3903 = vmatmul.mubr.f32.gmra.mxu0 %v3797
    %v3904 = vpop.f32.mrf.mxu0
    %v3905 = vadd.f32 %v3836, %v3904
    %v3906 = vpop.f32.mrf.mxu0
    %3907 = vdwg.mxu0
    %3908 = vst [vmem:[#allocation28] sm:$0x3] %v3905
    // Predicated region
    $region134: #{tpu_custom_call.1} parent=1 // pred_check
      _
    $region135: #{tpu_custom_call.1} parent=1 // pred_check_branch
      %3910 = sbr.rel (0) target = $region137
    $region136: #{tpu_custom_call.1} parent=1 // pred_region
      %s3912 = ssub.s32 32, 32
      %3913 = vsyncadd [#allocation4], %s3912
      %s3915 = sshll.u32 [#allocation28], 4
      %s3916 = int_to_ptr.vmem [resolvable:$true] %s3915
      %3918 = dma.vmem_to_hbm [thread:$0]  %s3916, 32, %s17, [#allocation4]
    $region137: #{tpu_custom_call.1} parent=1 // pred_fallthru
      _
    // Predicated region
    $region138: #{tpu_custom_call.1} parent=1 // pred_check
      _
    $region139: #{tpu_custom_call.1} parent=1 // pred_check_branch
      %3920 = sbr.rel (0) target = $region141
    $region140: #{tpu_custom_call.1} parent=1 // pred_region
      %3921 = dma.done [#allocation4], 32
    $region141: #{tpu_custom_call.1} parent=1 // pred_fallthru
      _
    %3922 = vsyncpa [#allocation3], 1
    %3923 = vsyncpa [#allocation6], 1
    %3924 = vsyncpa [#allocation9], 1
    %3925 = vsyncpa [#allocation12], 1
    %3926 = vsyncpa [#allocation15], 1
    %3927 = vsyncpa [#allocation18], 1
    %3928 = vsyncpa [#allocation21], 1
    %3929 = vsyncpa [#allocation24], 1
    %3930 = vsyncpa [#allocation27], 1
    %3931 = vsyncpa [#allocation4], 1

</llo_original>
